<compile_context>
chip_gen: v5e
topology: v5e:2x2
jax: 0.10.0
libtpu: 0.0.40
codegen_flags: <defaults>
</compile_context>

<pallas_src>
import numpy as np
import jax
import jax.numpy as jnp
from jax import lax
from jax.experimental import pallas as pl
from jax.experimental.pallas import tpu as pltpu

OUT_PAD = 128        # fc2 output columns per image, padded for lane-dense stores


# --------------------------- small in-kernel helpers -------------------------

def _vdiv(x, d: int):
    """Element-wise x // d for non-negative int32 x and positive python int d."""
    if d & (d - 1) == 0:
        return jnp.right_shift(x, d.bit_length() - 1)
    return x // d


def _vmod(x, d: int):
    """Element-wise x % d for non-negative int32 x and positive python int d."""
    if d & (d - 1) == 0:
        return jnp.bitwise_and(x, d - 1)
    return x % d


def _shift_cols(x, s: int):
    """y[:, l] = x[:, l + s] if 0 <= l + s < ncols else 0 (static lane shift)."""
    if s == 0:
        return x
    c, n = x.shape
    fill = jnp.zeros((c, abs(s)), x.dtype)
    if s > 0:
        return jnp.concatenate([x[:, s:], fill], axis=1)
    return jnp.concatenate([fill, x[:, : n + s]], axis=1)


def _edge_masks(h: int, w: int, b: int):
    """Per-block boundary masks for the 8 non-center taps on a (C, b*h*w) slab.

    Lane l = img*h*w + r*w + c.  Tap (dh, dw) is valid iff (r+dh, c+dw) stays inside the
    SAME image; this also kills any cross-image contamination from the lane shifts.
    Built once per block (shared by both convs), from a single iota.
    """
    hw = h * w
    lane = lax.broadcasted_iota(jnp.int32, (1, b * hw), 1)
    pix = _vmod(lane, hw)
    r = _vdiv(pix, w)
    c = _vmod(pix, w)
    masks = {}
    for dh in (-1, 0, 1):
        for dw in (-1, 0, 1):
            if dh == 0 and dw == 0:
                masks[(dh, dw)] = None
                continue
            ok = None
            if dh != 0:
                cond = (r + dh >= 0) & (r + dh < h)
                ok = cond
            if dw != 0:
                cond = (c + dw >= 0) & (c + dw < w)
                ok = cond if ok is None else (ok & cond)
            masks[(dh, dw)] = ok
    return masks


def _conv3x3_relu(x, wk, bias, w: int, masks):
    """3x3 'same' conv + ReLU on a (Cin, B*h*w) slab; ONE matmul with K = 9*Cin."""
    taps = []
    for dh in (-1, 0, 1):
        for dw in (-1, 0, 1):
            t = _shift_cols(x, dh * w + dw)
            m = masks[(dh, dw)]
            if m is not None:
                t = jnp.where(m, t, 0.0)
            taps.append(t)
    patches = jnp.concatenate(taps, axis=0)                  # (9*Cin, B*h*w)
    y = jnp.dot(wk, patches, preferred_element_type=jnp.float32) + bias
    return jnp.maximum(y, 0.0)                               # ReLU


# --------------------------- fused forward kernel ----------------------------

def make_fused_kernel(n_blocks: int, h0: int, w0: int, b_tile: int):
    """Whole SimpleCNN forward for one batch tile; refs arrive in the order built below."""

    def kernel(*refs):
        x_ref = refs[0]
        blk_refs = refs[1:1 + 5 * n_blocks]
        fc1_w, fc1_b, fc2_w, fc2_b = refs[1 + 5 * n_blocks:5 + 5 * n_blocks]
        o_ref = refs[-1]

        x = x_ref[0]                                         # (Cin_padded, B*h0*w0)
        h, w = h0, w0
        for i in range(n_blocks):
            wk1, bk1, wk2, bk2, sel = [r[...] for r in blk_refs[5 * i:5 * i + 5]]
            masks = _edge_masks(h, w, b_tile)                # once per block
            x = _conv3x3_relu(x, wk1, bk1, w, masks)
            x = _conv3x3_relu(x, wk2, bk2, w, masks)
            # 2x2/stride-2 max pool: 3 lane-shift maxima + one matmul against the
            # host-precomputed block-diagonal 0/1 selection matrix.
            m = jnp.maximum(jnp.maximum(x, _shift_cols(x, 1)),
                            jnp.maximum(_shift_cols(x, w), _shift_cols(x, w + 1)))
            x = jnp.dot(m, sel, preferred_element_type=jnp.float32)
            h, w = h // 2, w // 2

        # Flatten: one lane-concat of the c_last channel rows -> (1, c_last*B*hw).  The
        # per-image (c, pixel) ordering of torch's flatten is folded into the
        # block-diagonal fc1 weight built in prepare_params, so no per-image reshuffle.
        c_last = x.shape[0]
        flat = jnp.concatenate([x[c:c + 1, :] for c in range(c_last)], axis=1)
        y = jnp.dot(flat, fc1_w[...], preferred_element_type=jnp.float32) + fc1_b[...]
        y = jnp.maximum(y, 0.0)
        y = jnp.dot(y, fc2_w[...], preferred_element_type=jnp.float32) + fc2_b[...]
        o_ref[0] = y.astype(o_ref.dtype)                     # (1, B*OUT_PAD) lane-dense

    return kernel


# --------------------------- host-side constant packing ----------------------

def _pool_selector_np(h: int, w: int, b: int):
    """0/1 matrix (b*h*w, b*(h//2)*(w//2)) picking each pooled pixel's source lane."""
    hw, h2, w2 = h * w, h // 2, w // 2
    hw2 = h2 * w2
    sel = np.zeros((b * hw, b * hw2), np.float32)
    dst = np.arange(b * hw2)
    img = dst // hw2
    q = dst % hw2
    src = img * hw + 2 * (q // w2) * w + 2 * (q % w2)
    sel[src, dst] = 1.0
    return sel


def _fc1_pack_np(w1, b1, c_last: int, hw_last: int, b: int):
    """Block-diagonal fc1 weight mapping the (c, img, pixel) lane-concat layout to
    per-image hidden units; folds torch's NCHW flatten ordering into the weights."""
    hidden = w1.shape[0]
    big = np.zeros((c_last * b * hw_last, b * hidden), np.float32)
    for c in range(c_last):
        blk = np.asarray(w1[:, c * hw_last:(c + 1) * hw_last]).T      # (hw_last, hidden)
        for bb in range(b):
            r0 = c * b * hw_last + bb * hw_last
            big[r0:r0 + hw_last, bb * hidden:(bb + 1) * hidden] = blk
    bias = np.tile(np.asarray(b1, np.float32).reshape(1, hidden), (1, b))
    return big, bias


def _fc2_pack_np(w2, b2, b: int, out_pad: int):
    """Block-diagonal fc2 weight producing a lane-dense (1, b*out_pad) output."""
    o, hidden = w2.shape
    big = np.zeros((b * hidden, b * out_pad), np.float32)
    bias = np.zeros((1, b * out_pad), np.float32)
    for bb in range(b):
        big[bb * hidden:(bb + 1) * hidden, bb * out_pad:bb * out_pad + o] = np.asarray(w2).T
        bias[0, bb * out_pad:bb * out_pad + o] = np.asarray(b2)
    return big, bias


def prepare_params(params, *, spatial, b_tile, out_pad=OUT_PAD):
    """Repack PyTorch-layout params into kernel layouts ONCE (host-side, numpy)."""
    h, w = spatial
    prep = {"blocks": []}
    first_conv = True
    hh, ww = h, w
    for (w1, b1, w2, b2) in params["blocks"]:
        packed = []
        for wc, bc in ((w1, b1), (w2, b2)):
            wc = np.asarray(wc, np.float32)
            bc = np.asarray(bc, np.float32)
            if first_conv:
                cin = wc.shape[1]
                cin_p = -(-cin // 8) * 8           # align first conv's Cin to the f32
                if cin_p != cin:                   # sublane tile so tap concats stay aligned
                    wc = np.pad(wc, ((0, 0), (0, cin_p - cin), (0, 0), (0, 0)))
                first_conv = False
            cout = wc.shape[0]
            wk = np.transpose(wc, (0, 2, 3, 1)).reshape(cout, -1)     # (Cout, 9*Cin)
            packed += [jnp.asarray(wk), jnp.asarray(bc.reshape(cout, 1))]
        packed.append(jnp.asarray(_pool_selector_np(hh, ww, b_tile)))
        prep["blocks"].append(tuple(packed))
        hh, ww = hh // 2, ww // 2

    c_last = int(np.asarray(params["blocks"][-1][2]).shape[0])
    hw_last = hh * ww
    fc1_w, fc1_b = _fc1_pack_np(np.asarray(params["fc1_w"], np.float32),
                                np.asarray(params["fc1_b"], np.float32),
                                c_last, hw_last, b_tile)
    fc2_w, fc2_b = _fc2_pack_np(np.asarray(params["fc2_w"], np.float32),
                                np.asarray(params["fc2_b"], np.float32),
                                b_tile, out_pad)
    prep["fc1_w"] = jnp.asarray(fc1_w)
    prep["fc1_b"] = jnp.asarray(fc1_b)
    prep["fc2_w"] = jnp.asarray(fc2_w)
    prep["fc2_b"] = jnp.asarray(fc2_b)
    return prep


# --------------------------- wrapper ------------------------------------------

@jax.jit
def _forward_padded(x_nchw, prep):
    n, c0, h, w = x_nchw.shape
    hw = h * w
    c0p = prep["blocks"][0][0].shape[1] // 9             # padded Cin of the first conv
    b_tile = prep["blocks"][0][4].shape[0] // hw         # images per grid step
    steps = -(-n // b_tile)
    n_pad = steps * b_tile
    out_total = prep["fc2_w"].shape[1]                   # b_tile * OUT_PAD

    x = x_nchw.reshape(n, c0, hw)                        # pixels on the lane axis
    if c0p != c0:
        x = jnp.pad(x, ((0, 0), (0, c0p - c0), (0, 0)))
    if n_pad != n:
        x = jnp.pad(x, ((0, n_pad - n), (0, 0), (0, 0)))
    # (steps, c0p, b_tile*hw): per grid step, all B_TILE images side by side on lanes.
    x = x.reshape(steps, b_tile, c0p, hw).transpose(0, 2, 1, 3).reshape(
        steps, c0p, b_tile * hw)

    n_blocks = len(prep["blocks"])
    inputs = [x]
    in_specs = [pl.BlockSpec((1, c0p, b_tile * hw), lambda i: (i, 0, 0))]
    for packed in prep["blocks"]:
        for a in packed:
            inputs.append(a)
            in_specs.append(pl.BlockSpec(a.shape, lambda i: (0, 0)))
    for name in ("fc1_w", "fc1_b", "fc2_w", "fc2_b"):
        a = prep[name]
        inputs.append(a)
        in_specs.append(pl.BlockSpec(a.shape, lambda i: (0, 0)))

    out = pl.pallas_call(
        make_fused_kernel(n_blocks, h, w, b_tile),
        out_shape=jax.ShapeDtypeStruct((steps, 1, out_total), jnp.float32),
        grid=(steps,),
        in_specs=in_specs,
        out_specs=pl.BlockSpec((1, 1, out_total), lambda i: (i, 0, 0)),
        compiler_params=pltpu.CompilerParams(
            dimension_semantics=("parallel",)),
    )(*inputs)
    out = out.reshape(steps * b_tile, out_total // b_tile)   # (N_pad, OUT_PAD)
    return out[:n]


def simple_cnn_forward(x_nchw, prep, n_classes):
    return _forward_padded(x_nchw, prep)[:, :n_classes]


# --------------------------- reference (plain JAX) ---------------------------

def ref_forward(x_nchw, params):
    def conv(x, w, b):
        y = lax.conv_general_dilated(
            x, w, window_strides=(1, 1), padding="SAME",
            dimension_numbers=("NCHW", "OIHW", "NCHW"))
        return jax.nn.relu(y + b[None, :, None, None])

    def pool(x):
        return lax.reduce_window(x, -jnp.inf, lax.max,
                                 (1, 1, 2, 2), (1, 1, 2, 2), "VALID")

    x = x_nchw
    for (w1, b1, w2, b2) in params["blocks"]:
        x = pool(conv(conv(x, w1, b1), w2, b2))
    x = x.reshape(x.shape[0], -1)
    x = jax.nn.relu(x @ params["fc1_w"].T + params["fc1_b"])
    return x @ params["fc2_w"].T + params["fc2_b"]


# --------------------------- params & main ------------------------------------

def init_params(key, layers_dim, spatial):
    params = {"blocks": []}
    h = spatial
    for cin, cout in zip(layers_dim[:-3], layers_dim[1:-2]):
        key, k1, k2, k3, k4 = jax.random.split(key, 5)
        w1 = jax.random.normal(k1, (cout, cin, 3, 3), jnp.float32) * (cin * 9) ** -0.5
        b1 = jax.random.normal(k2, (cout,), jnp.float32) * 0.01
        w2 = jax.random.normal(k3, (cout, cout, 3, 3), jnp.float32) * (cout * 9) ** -0.5
        b2 = jax.random.normal(k4, (cout,), jnp.float32) * 0.01
        params["blocks"].append((w1, b1, w2, b2))
        h = h // 2
    flatten_dim = layers_dim[-3] * h * h                  # infer_flatten_dim equivalent
    key, k1, k2, k3, k4 = jax.random.split(key, 5)
    params["fc1_w"] = jax.random.normal(k1, (layers_dim[-2], flatten_dim),
                                        jnp.float32) * flatten_dim ** -0.5
    params["fc1_b"] = jax.random.normal(k2, (layers_dim[-2],), jnp.float32) * 0.01
    params["fc2_w"] = jax.random.normal(k3, (layers_dim[-1], layers_dim[-2]),
                                        jnp.float32) * layers_dim[-2] ** -0.5
    params["fc2_b"] = jax.random.normal(k4, (layers_dim[-1],), jnp.float32) * 0.01
    return params


if __name__ == "__main__":
    # SimpleCNN(layers_dim=[4, 8, 16, 32, 10], activation_name="relu", conv_params=...)
    layers_dim = [4, 8, 16, 32, 10]
    N, H, W = 8, 16, 16
    B_TILE = max(1, -(-N // 2))     # ceil(N/2): 2 grid steps so both v7x TCs get work;
                                    # on v5e/v6e (single TC) B_TILE=N would also be fine.

    key = jax.random.PRNGKey(0)
    key, kx = jax.random.split(key)
    params = init_params(key, layers_dim, H)
    x = jax.random.normal(kx, (N, layers_dim[0], H, W), jnp.float32)

    prep = prepare_params(params, spatial=(H, W), b_tile=B_TILE)   # one-time host repack
    out = jax.block_until_ready(simple_cnn_forward(x, prep, layers_dim[-1]))
    ref = jax.block_until_ready(ref_forward(x, params))

    assert out.shape == (N, layers_dim[-1]), out.shape
    max_err = float(jnp.max(jnp.abs(out - ref)))
    assert max_err < 1e-3, f"mismatch vs plain-JAX reference: {max_err}"
    print("KERNEL_OK")
</pallas_src>

<mosaic_0001>
module attributes {stable_mosaic.version = 11 : i64} {
  func.func @kernel(%arg0: i32, %arg1: memref<1x8x1024xf32, #tpu.memory_space<vmem>>, %arg2: memref<8x72xf32, #tpu.memory_space<vmem>>, %arg3: memref<8x1xf32, #tpu.memory_space<vmem>>, %arg4: memref<8x72xf32, #tpu.memory_space<vmem>>, %arg5: memref<8x1xf32, #tpu.memory_space<vmem>>, %arg6: memref<1024x256xf32, #tpu.memory_space<vmem>>, %arg7: memref<16x72xf32, #tpu.memory_space<vmem>>, %arg8: memref<16x1xf32, #tpu.memory_space<vmem>>, %arg9: memref<16x144xf32, #tpu.memory_space<vmem>>, %arg10: memref<16x1xf32, #tpu.memory_space<vmem>>, %arg11: memref<256x64xf32, #tpu.memory_space<vmem>>, %arg12: memref<1024x128xf32, #tpu.memory_space<vmem>>, %arg13: memref<1x128xf32, #tpu.memory_space<vmem>>, %arg14: memref<128x512xf32, #tpu.memory_space<vmem>>, %arg15: memref<1x512xf32, #tpu.memory_space<vmem>>, %arg16: memref<1x1x512xf32, #tpu.memory_space<vmem>>) attributes {dimension_semantics = [#tpu.dimension_semantics<parallel>], iteration_bounds = array<i64: 2>, scalar_prefetch = 0 : i64, scratch_operands = 0 : i64, tpu.core_type = #tpu.core_type<tc>, window_params = [{transform_indices = @transform_0, window_bounds = array<i64: 1, 8, 1024>}, {pipeline_mode = #tpu.pipeline_mode<synchronous>, transform_indices = @transform_1, window_bounds = array<i64: 8, 72>}, {pipeline_mode = #tpu.pipeline_mode<synchronous>, transform_indices = @transform_2, window_bounds = array<i64: 8, 1>}, {pipeline_mode = #tpu.pipeline_mode<synchronous>, transform_indices = @transform_3, window_bounds = array<i64: 8, 72>}, {pipeline_mode = #tpu.pipeline_mode<synchronous>, transform_indices = @transform_4, window_bounds = array<i64: 8, 1>}, {pipeline_mode = #tpu.pipeline_mode<synchronous>, transform_indices = @transform_5, window_bounds = array<i64: 1024, 256>}, {pipeline_mode = #tpu.pipeline_mode<synchronous>, transform_indices = @transform_6, window_bounds = array<i64: 16, 72>}, {pipeline_mode = #tpu.pipeline_mode<synchronous>, transform_indices = @transform_7, window_bounds = array<i64: 16, 1>}, {pipeline_mode = #tpu.pipeline_mode<synchronous>, transform_indices = @transform_8, window_bounds = array<i64: 16, 144>}, {pipeline_mode = #tpu.pipeline_mode<synchronous>, transform_indices = @transform_9, window_bounds = array<i64: 16, 1>}, {pipeline_mode = #tpu.pipeline_mode<synchronous>, transform_indices = @transform_10, window_bounds = array<i64: 256, 64>}, {pipeline_mode = #tpu.pipeline_mode<synchronous>, transform_indices = @transform_11, window_bounds = array<i64: 1024, 128>}, {pipeline_mode = #tpu.pipeline_mode<synchronous>, transform_indices = @transform_12, window_bounds = array<i64: 1, 128>}, {pipeline_mode = #tpu.pipeline_mode<synchronous>, transform_indices = @transform_13, window_bounds = array<i64: 128, 512>}, {pipeline_mode = #tpu.pipeline_mode<synchronous>, transform_indices = @transform_14, window_bounds = array<i64: 1, 512>}, {transform_indices = @transform_15, window_bounds = array<i64: 1, 1, 512>}]} {
    %c0 = arith.constant 0 : index
    %c0_0 = arith.constant 0 : index
    %c0_1 = arith.constant 0 : index
    %0 = vector.load %arg1[%c0, %c0_0, %c0_1] : memref<1x8x1024xf32, #tpu.memory_space<vmem>>, vector<1x8x1024xf32>
    %1 = vector.shape_cast %0 : vector<1x8x1024xf32> to vector<8x1024xf32>
    %c0_2 = arith.constant 0 : index
    %c0_3 = arith.constant 0 : index
    %2 = vector.load %arg2[%c0_2, %c0_3] : memref<8x72xf32, #tpu.memory_space<vmem>>, vector<8x72xf32>
    %c0_4 = arith.constant 0 : index
    %c0_5 = arith.constant 0 : index
    %3 = vector.load %arg3[%c0_4, %c0_5] : memref<8x1xf32, #tpu.memory_space<vmem>>, vector<8x1xf32>
    %c0_6 = arith.constant 0 : index
    %c0_7 = arith.constant 0 : index
    %4 = vector.load %arg4[%c0_6, %c0_7] : memref<8x72xf32, #tpu.memory_space<vmem>>, vector<8x72xf32>
    %c0_8 = arith.constant 0 : index
    %c0_9 = arith.constant 0 : index
    %5 = vector.load %arg5[%c0_8, %c0_9] : memref<8x1xf32, #tpu.memory_space<vmem>>, vector<8x1xf32>
    %c0_10 = arith.constant 0 : index
    %c0_11 = arith.constant 0 : index
    %6 = vector.load %arg6[%c0_10, %c0_11] : memref<1024x256xf32, #tpu.memory_space<vmem>>, vector<1024x256xf32>
    %7 = tpu.iota {dimensions = array<i32: 1>} : vector<1x1024xi32>
    %c255_i32 = arith.constant 255 : i32
    %8 = vector.broadcast %c255_i32 : i32 to vector<1x1024xi32>
    %9 = arith.andi %7, %8 : vector<1x1024xi32>
    %c4_i32 = arith.constant 4 : i32
    %10 = vector.broadcast %c4_i32 : i32 to vector<1x1024xi32>
    %11 = arith.shrsi %9, %10 : vector<1x1024xi32>
    %c15_i32 = arith.constant 15 : i32
    %12 = vector.broadcast %c15_i32 : i32 to vector<1x1024xi32>
    %13 = arith.andi %9, %12 : vector<1x1024xi32>
    %c-1_i32 = arith.constant -1 : i32
    %14 = vector.broadcast %c-1_i32 : i32 to vector<1x1024xi32>
    %15 = arith.addi %11, %14 : vector<1x1024xi32>
    %c0_i32 = arith.constant 0 : i32
    %16 = vector.broadcast %c0_i32 : i32 to vector<1x1024xi32>
    %17 = arith.cmpi sge, %15, %16 : vector<1x1024xi32>
    %c-1_i32_12 = arith.constant -1 : i32
    %18 = vector.broadcast %c-1_i32_12 : i32 to vector<1x1024xi32>
    %19 = arith.addi %11, %18 : vector<1x1024xi32>
    %c16_i32 = arith.constant 16 : i32
    %20 = vector.broadcast %c16_i32 : i32 to vector<1x1024xi32>
    %21 = arith.cmpi slt, %19, %20 : vector<1x1024xi32>
    %22 = arith.andi %17, %21 : vector<1x1024xi1>
    %c-1_i32_13 = arith.constant -1 : i32
    %23 = vector.broadcast %c-1_i32_13 : i32 to vector<1x1024xi32>
    %24 = arith.addi %13, %23 : vector<1x1024xi32>
    %c0_i32_14 = arith.constant 0 : i32
    %25 = vector.broadcast %c0_i32_14 : i32 to vector<1x1024xi32>
    %26 = arith.cmpi sge, %24, %25 : vector<1x1024xi32>
    %c-1_i32_15 = arith.constant -1 : i32
    %27 = vector.broadcast %c-1_i32_15 : i32 to vector<1x1024xi32>
    %28 = arith.addi %13, %27 : vector<1x1024xi32>
    %c16_i32_16 = arith.constant 16 : i32
    %29 = vector.broadcast %c16_i32_16 : i32 to vector<1x1024xi32>
    %30 = arith.cmpi slt, %28, %29 : vector<1x1024xi32>
    %31 = arith.andi %26, %30 : vector<1x1024xi1>
    %32 = arith.andi %22, %31 : vector<1x1024xi1>
    %c-1_i32_17 = arith.constant -1 : i32
    %33 = vector.broadcast %c-1_i32_17 : i32 to vector<1x1024xi32>
    %34 = arith.addi %11, %33 : vector<1x1024xi32>
    %c0_i32_18 = arith.constant 0 : i32
    %35 = vector.broadcast %c0_i32_18 : i32 to vector<1x1024xi32>
    %36 = arith.cmpi sge, %34, %35 : vector<1x1024xi32>
    %c-1_i32_19 = arith.constant -1 : i32
    %37 = vector.broadcast %c-1_i32_19 : i32 to vector<1x1024xi32>
    %38 = arith.addi %11, %37 : vector<1x1024xi32>
    %c16_i32_20 = arith.constant 16 : i32
    %39 = vector.broadcast %c16_i32_20 : i32 to vector<1x1024xi32>
    %40 = arith.cmpi slt, %38, %39 : vector<1x1024xi32>
    %41 = arith.andi %36, %40 : vector<1x1024xi1>
    %c-1_i32_21 = arith.constant -1 : i32
    %42 = vector.broadcast %c-1_i32_21 : i32 to vector<1x1024xi32>
    %43 = arith.addi %11, %42 : vector<1x1024xi32>
    %c0_i32_22 = arith.constant 0 : i32
    %44 = vector.broadcast %c0_i32_22 : i32 to vector<1x1024xi32>
    %45 = arith.cmpi sge, %43, %44 : vector<1x1024xi32>
    %c-1_i32_23 = arith.constant -1 : i32
    %46 = vector.broadcast %c-1_i32_23 : i32 to vector<1x1024xi32>
    %47 = arith.addi %11, %46 : vector<1x1024xi32>
    %c16_i32_24 = arith.constant 16 : i32
    %48 = vector.broadcast %c16_i32_24 : i32 to vector<1x1024xi32>
    %49 = arith.cmpi slt, %47, %48 : vector<1x1024xi32>
    %50 = arith.andi %45, %49 : vector<1x1024xi1>
    %c1_i32 = arith.constant 1 : i32
    %51 = vector.broadcast %c1_i32 : i32 to vector<1x1024xi32>
    %52 = arith.addi %13, %51 : vector<1x1024xi32>
    %c0_i32_25 = arith.constant 0 : i32
    %53 = vector.broadcast %c0_i32_25 : i32 to vector<1x1024xi32>
    %54 = arith.cmpi sge, %52, %53 : vector<1x1024xi32>
    %c1_i32_26 = arith.constant 1 : i32
    %55 = vector.broadcast %c1_i32_26 : i32 to vector<1x1024xi32>
    %56 = arith.addi %13, %55 : vector<1x1024xi32>
    %c16_i32_27 = arith.constant 16 : i32
    %57 = vector.broadcast %c16_i32_27 : i32 to vector<1x1024xi32>
    %58 = arith.cmpi slt, %56, %57 : vector<1x1024xi32>
    %59 = arith.andi %54, %58 : vector<1x1024xi1>
    %60 = arith.andi %50, %59 : vector<1x1024xi1>
    %c-1_i32_28 = arith.constant -1 : i32
    %61 = vector.broadcast %c-1_i32_28 : i32 to vector<1x1024xi32>
    %62 = arith.addi %13, %61 : vector<1x1024xi32>
    %c0_i32_29 = arith.constant 0 : i32
    %63 = vector.broadcast %c0_i32_29 : i32 to vector<1x1024xi32>
    %64 = arith.cmpi sge, %62, %63 : vector<1x1024xi32>
    %c-1_i32_30 = arith.constant -1 : i32
    %65 = vector.broadcast %c-1_i32_30 : i32 to vector<1x1024xi32>
    %66 = arith.addi %13, %65 : vector<1x1024xi32>
    %c16_i32_31 = arith.constant 16 : i32
    %67 = vector.broadcast %c16_i32_31 : i32 to vector<1x1024xi32>
    %68 = arith.cmpi slt, %66, %67 : vector<1x1024xi32>
    %69 = arith.andi %64, %68 : vector<1x1024xi1>
    %c1_i32_32 = arith.constant 1 : i32
    %70 = vector.broadcast %c1_i32_32 : i32 to vector<1x1024xi32>
    %71 = arith.addi %13, %70 : vector<1x1024xi32>
    %c0_i32_33 = arith.constant 0 : i32
    %72 = vector.broadcast %c0_i32_33 : i32 to vector<1x1024xi32>
    %73 = arith.cmpi sge, %71, %72 : vector<1x1024xi32>
    %c1_i32_34 = arith.constant 1 : i32
    %74 = vector.broadcast %c1_i32_34 : i32 to vector<1x1024xi32>
    %75 = arith.addi %13, %74 : vector<1x1024xi32>
    %c16_i32_35 = arith.constant 16 : i32
    %76 = vector.broadcast %c16_i32_35 : i32 to vector<1x1024xi32>
    %77 = arith.cmpi slt, %75, %76 : vector<1x1024xi32>
    %78 = arith.andi %73, %77 : vector<1x1024xi1>
    %c1_i32_36 = arith.constant 1 : i32
    %79 = vector.broadcast %c1_i32_36 : i32 to vector<1x1024xi32>
    %80 = arith.addi %11, %79 : vector<1x1024xi32>
    %c0_i32_37 = arith.constant 0 : i32
    %81 = vector.broadcast %c0_i32_37 : i32 to vector<1x1024xi32>
    %82 = arith.cmpi sge, %80, %81 : vector<1x1024xi32>
    %c1_i32_38 = arith.constant 1 : i32
    %83 = vector.broadcast %c1_i32_38 : i32 to vector<1x1024xi32>
    %84 = arith.addi %11, %83 : vector<1x1024xi32>
    %c16_i32_39 = arith.constant 16 : i32
    %85 = vector.broadcast %c16_i32_39 : i32 to vector<1x1024xi32>
    %86 = arith.cmpi slt, %84, %85 : vector<1x1024xi32>
    %87 = arith.andi %82, %86 : vector<1x1024xi1>
    %c-1_i32_40 = arith.constant -1 : i32
    %88 = vector.broadcast %c-1_i32_40 : i32 to vector<1x1024xi32>
    %89 = arith.addi %13, %88 : vector<1x1024xi32>
    %c0_i32_41 = arith.constant 0 : i32
    %90 = vector.broadcast %c0_i32_41 : i32 to vector<1x1024xi32>
    %91 = arith.cmpi sge, %89, %90 : vector<1x1024xi32>
    %c-1_i32_42 = arith.constant -1 : i32
    %92 = vector.broadcast %c-1_i32_42 : i32 to vector<1x1024xi32>
    %93 = arith.addi %13, %92 : vector<1x1024xi32>
    %c16_i32_43 = arith.constant 16 : i32
    %94 = vector.broadcast %c16_i32_43 : i32 to vector<1x1024xi32>
    %95 = arith.cmpi slt, %93, %94 : vector<1x1024xi32>
    %96 = arith.andi %91, %95 : vector<1x1024xi1>
    %97 = arith.andi %87, %96 : vector<1x1024xi1>
    %c1_i32_44 = arith.constant 1 : i32
    %98 = vector.broadcast %c1_i32_44 : i32 to vector<1x1024xi32>
    %99 = arith.addi %11, %98 : vector<1x1024xi32>
    %c0_i32_45 = arith.constant 0 : i32
    %100 = vector.broadcast %c0_i32_45 : i32 to vector<1x1024xi32>
    %101 = arith.cmpi sge, %99, %100 : vector<1x1024xi32>
    %c1_i32_46 = arith.constant 1 : i32
    %102 = vector.broadcast %c1_i32_46 : i32 to vector<1x1024xi32>
    %103 = arith.addi %11, %102 : vector<1x1024xi32>
    %c16_i32_47 = arith.constant 16 : i32
    %104 = vector.broadcast %c16_i32_47 : i32 to vector<1x1024xi32>
    %105 = arith.cmpi slt, %103, %104 : vector<1x1024xi32>
    %106 = arith.andi %101, %105 : vector<1x1024xi1>
    %c1_i32_48 = arith.constant 1 : i32
    %107 = vector.broadcast %c1_i32_48 : i32 to vector<1x1024xi32>
    %108 = arith.addi %11, %107 : vector<1x1024xi32>
    %c0_i32_49 = arith.constant 0 : i32
    %109 = vector.broadcast %c0_i32_49 : i32 to vector<1x1024xi32>
    %110 = arith.cmpi sge, %108, %109 : vector<1x1024xi32>
    %c1_i32_50 = arith.constant 1 : i32
    %111 = vector.broadcast %c1_i32_50 : i32 to vector<1x1024xi32>
    %112 = arith.addi %11, %111 : vector<1x1024xi32>
    %c16_i32_51 = arith.constant 16 : i32
    %113 = vector.broadcast %c16_i32_51 : i32 to vector<1x1024xi32>
    %114 = arith.cmpi slt, %112, %113 : vector<1x1024xi32>
    %115 = arith.andi %110, %114 : vector<1x1024xi1>
    %c1_i32_52 = arith.constant 1 : i32
    %116 = vector.broadcast %c1_i32_52 : i32 to vector<1x1024xi32>
    %117 = arith.addi %13, %116 : vector<1x1024xi32>
    %c0_i32_53 = arith.constant 0 : i32
    %118 = vector.broadcast %c0_i32_53 : i32 to vector<1x1024xi32>
    %119 = arith.cmpi sge, %117, %118 : vector<1x1024xi32>
    %c1_i32_54 = arith.constant 1 : i32
    %120 = vector.broadcast %c1_i32_54 : i32 to vector<1x1024xi32>
    %121 = arith.addi %13, %120 : vector<1x1024xi32>
    %c16_i32_55 = arith.constant 16 : i32
    %122 = vector.broadcast %c16_i32_55 : i32 to vector<1x1024xi32>
    %123 = arith.cmpi slt, %121, %122 : vector<1x1024xi32>
    %124 = arith.andi %119, %123 : vector<1x1024xi1>
    %125 = arith.andi %115, %124 : vector<1x1024xi1>
    %cst = arith.constant 0.000000e+00 : f32
    %126 = vector.broadcast %cst : f32 to vector<8x17xf32>
    %127 = vector.extract_strided_slice %1 {offsets = [0, 0], sizes = [8, 1007], strides = [1, 1]} : vector<8x1024xf32> to vector<8x1007xf32>
    %128 = tpu.concatenate %126, %127 in 1 : vector<8x17xf32>, vector<8x1007xf32> -> vector<8x1024xf32>
    %cst_56 = arith.constant 0.000000e+00 : f32
    %129 = vector.shape_cast %32 : vector<1x1024xi1> to vector<1x1024xi1>
    %130 = vector.broadcast %129 : vector<1x1024xi1> to vector<8x1024xi1>
    %131 = vector.broadcast %cst_56 : f32 to vector<8x1024xf32>
    %132 = arith.select %130, %128, %131 : vector<8x1024xi1>, vector<8x1024xf32>
    %cst_57 = arith.constant 0.000000e+00 : f32
    %133 = vector.broadcast %cst_57 : f32 to vector<8x16xf32>
    %134 = vector.extract_strided_slice %1 {offsets = [0, 0], sizes = [8, 1008], strides = [1, 1]} : vector<8x1024xf32> to vector<8x1008xf32>
    %135 = tpu.concatenate %133, %134 in 1 : vector<8x16xf32>, vector<8x1008xf32> -> vector<8x1024xf32>
    %cst_58 = arith.constant 0.000000e+00 : f32
    %136 = vector.shape_cast %41 : vector<1x1024xi1> to vector<1x1024xi1>
    %137 = vector.broadcast %136 : vector<1x1024xi1> to vector<8x1024xi1>
    %138 = vector.broadcast %cst_58 : f32 to vector<8x1024xf32>
    %139 = arith.select %137, %135, %138 : vector<8x1024xi1>, vector<8x1024xf32>
    %cst_59 = arith.constant 0.000000e+00 : f32
    %140 = vector.broadcast %cst_59 : f32 to vector<8x15xf32>
    %141 = vector.extract_strided_slice %1 {offsets = [0, 0], sizes = [8, 1009], strides = [1, 1]} : vector<8x1024xf32> to vector<8x1009xf32>
    %142 = tpu.concatenate %140, %141 in 1 : vector<8x15xf32>, vector<8x1009xf32> -> vector<8x1024xf32>
    %cst_60 = arith.constant 0.000000e+00 : f32
    %143 = vector.shape_cast %60 : vector<1x1024xi1> to vector<1x1024xi1>
    %144 = vector.broadcast %143 : vector<1x1024xi1> to vector<8x1024xi1>
    %145 = vector.broadcast %cst_60 : f32 to vector<8x1024xf32>
    %146 = arith.select %144, %142, %145 : vector<8x1024xi1>, vector<8x1024xf32>
    %cst_61 = arith.constant 0.000000e+00 : f32
    %147 = vector.broadcast %cst_61 : f32 to vector<8x1xf32>
    %148 = vector.extract_strided_slice %1 {offsets = [0, 0], sizes = [8, 1023], strides = [1, 1]} : vector<8x1024xf32> to vector<8x1023xf32>
    %149 = tpu.concatenate %147, %148 in 1 : vector<8x1xf32>, vector<8x1023xf32> -> vector<8x1024xf32>
    %cst_62 = arith.constant 0.000000e+00 : f32
    %150 = vector.shape_cast %69 : vector<1x1024xi1> to vector<1x1024xi1>
    %151 = vector.broadcast %150 : vector<1x1024xi1> to vector<8x1024xi1>
    %152 = vector.broadcast %cst_62 : f32 to vector<8x1024xf32>
    %153 = arith.select %151, %149, %152 : vector<8x1024xi1>, vector<8x1024xf32>
    %cst_63 = arith.constant 0.000000e+00 : f32
    %154 = vector.broadcast %cst_63 : f32 to vector<8x1xf32>
    %155 = vector.extract_strided_slice %1 {offsets = [0, 1], sizes = [8, 1023], strides = [1, 1]} : vector<8x1024xf32> to vector<8x1023xf32>
    %156 = tpu.concatenate %155, %154 in 1 : vector<8x1023xf32>, vector<8x1xf32> -> vector<8x1024xf32>
    %cst_64 = arith.constant 0.000000e+00 : f32
    %157 = vector.shape_cast %78 : vector<1x1024xi1> to vector<1x1024xi1>
    %158 = vector.broadcast %157 : vector<1x1024xi1> to vector<8x1024xi1>
    %159 = vector.broadcast %cst_64 : f32 to vector<8x1024xf32>
    %160 = arith.select %158, %156, %159 : vector<8x1024xi1>, vector<8x1024xf32>
    %cst_65 = arith.constant 0.000000e+00 : f32
    %161 = vector.broadcast %cst_65 : f32 to vector<8x15xf32>
    %162 = vector.extract_strided_slice %1 {offsets = [0, 15], sizes = [8, 1009], strides = [1, 1]} : vector<8x1024xf32> to vector<8x1009xf32>
    %163 = tpu.concatenate %162, %161 in 1 : vector<8x1009xf32>, vector<8x15xf32> -> vector<8x1024xf32>
    %cst_66 = arith.constant 0.000000e+00 : f32
    %164 = vector.shape_cast %97 : vector<1x1024xi1> to vector<1x1024xi1>
    %165 = vector.broadcast %164 : vector<1x1024xi1> to vector<8x1024xi1>
    %166 = vector.broadcast %cst_66 : f32 to vector<8x1024xf32>
    %167 = arith.select %165, %163, %166 : vector<8x1024xi1>, vector<8x1024xf32>
    %cst_67 = arith.constant 0.000000e+00 : f32
    %168 = vector.broadcast %cst_67 : f32 to vector<8x16xf32>
    %169 = vector.extract_strided_slice %1 {offsets = [0, 16], sizes = [8, 1008], strides = [1, 1]} : vector<8x1024xf32> to vector<8x1008xf32>
    %170 = tpu.concatenate %169, %168 in 1 : vector<8x1008xf32>, vector<8x16xf32> -> vector<8x1024xf32>
    %cst_68 = arith.constant 0.000000e+00 : f32
    %171 = vector.shape_cast %106 : vector<1x1024xi1> to vector<1x1024xi1>
    %172 = vector.broadcast %171 : vector<1x1024xi1> to vector<8x1024xi1>
    %173 = vector.broadcast %cst_68 : f32 to vector<8x1024xf32>
    %174 = arith.select %172, %170, %173 : vector<8x1024xi1>, vector<8x1024xf32>
    %cst_69 = arith.constant 0.000000e+00 : f32
    %175 = vector.broadcast %cst_69 : f32 to vector<8x17xf32>
    %176 = vector.extract_strided_slice %1 {offsets = [0, 17], sizes = [8, 1007], strides = [1, 1]} : vector<8x1024xf32> to vector<8x1007xf32>
    %177 = tpu.concatenate %176, %175 in 1 : vector<8x1007xf32>, vector<8x17xf32> -> vector<8x1024xf32>
    %cst_70 = arith.constant 0.000000e+00 : f32
    %178 = vector.shape_cast %125 : vector<1x1024xi1> to vector<1x1024xi1>
    %179 = vector.broadcast %178 : vector<1x1024xi1> to vector<8x1024xi1>
    %180 = vector.broadcast %cst_70 : f32 to vector<8x1024xf32>
    %181 = arith.select %179, %177, %180 : vector<8x1024xi1>, vector<8x1024xf32>
    %182 = tpu.concatenate %132, %139, %146, %153, %1, %160, %167, %174, %181 in 0 : vector<8x1024xf32>, vector<8x1024xf32>, vector<8x1024xf32>, vector<8x1024xf32>, vector<8x1024xf32>, vector<8x1024xf32>, vector<8x1024xf32>, vector<8x1024xf32>, vector<8x1024xf32> -> vector<72x1024xf32>
    %cst_71 = arith.constant dense<0.000000e+00> : vector<8x1024xf32>
    %183 = tpu.matmul %2, %182, %cst_71 {dimension_numbers = #tpu.dot_dimension_numbers<[1], [0], [0], [1], [0, 0, 1, 1], [], []>} : vector<8x72xf32>, vector<72x1024xf32>, vector<8x1024xf32> -> vector<8x1024xf32>
    %184 = vector.broadcast %3 : vector<8x1xf32> to vector<8x1024xf32>
    %185 = arith.addf %183, %184 : vector<8x1024xf32>
    %cst_72 = arith.constant 0.000000e+00 : f32
    %186 = vector.broadcast %cst_72 : f32 to vector<8x1024xf32>
    %187 = arith.maximumf %185, %186 : vector<8x1024xf32>
    %cst_73 = arith.constant 0.000000e+00 : f32
    %188 = vector.broadcast %cst_73 : f32 to vector<8x17xf32>
    %189 = vector.extract_strided_slice %187 {offsets = [0, 0], sizes = [8, 1007], strides = [1, 1]} : vector<8x1024xf32> to vector<8x1007xf32>
    %190 = tpu.concatenate %188, %189 in 1 : vector<8x17xf32>, vector<8x1007xf32> -> vector<8x1024xf32>
    %cst_74 = arith.constant 0.000000e+00 : f32
    %191 = vector.shape_cast %32 : vector<1x1024xi1> to vector<1x1024xi1>
    %192 = vector.broadcast %191 : vector<1x1024xi1> to vector<8x1024xi1>
    %193 = vector.broadcast %cst_74 : f32 to vector<8x1024xf32>
    %194 = arith.select %192, %190, %193 : vector<8x1024xi1>, vector<8x1024xf32>
    %cst_75 = arith.constant 0.000000e+00 : f32
    %195 = vector.broadcast %cst_75 : f32 to vector<8x16xf32>
    %196 = vector.extract_strided_slice %187 {offsets = [0, 0], sizes = [8, 1008], strides = [1, 1]} : vector<8x1024xf32> to vector<8x1008xf32>
    %197 = tpu.concatenate %195, %196 in 1 : vector<8x16xf32>, vector<8x1008xf32> -> vector<8x1024xf32>
    %cst_76 = arith.constant 0.000000e+00 : f32
    %198 = vector.shape_cast %41 : vector<1x1024xi1> to vector<1x1024xi1>
    %199 = vector.broadcast %198 : vector<1x1024xi1> to vector<8x1024xi1>
    %200 = vector.broadcast %cst_76 : f32 to vector<8x1024xf32>
    %201 = arith.select %199, %197, %200 : vector<8x1024xi1>, vector<8x1024xf32>
    %cst_77 = arith.constant 0.000000e+00 : f32
    %202 = vector.broadcast %cst_77 : f32 to vector<8x15xf32>
    %203 = vector.extract_strided_slice %187 {offsets = [0, 0], sizes = [8, 1009], strides = [1, 1]} : vector<8x1024xf32> to vector<8x1009xf32>
    %204 = tpu.concatenate %202, %203 in 1 : vector<8x15xf32>, vector<8x1009xf32> -> vector<8x1024xf32>
    %cst_78 = arith.constant 0.000000e+00 : f32
    %205 = vector.shape_cast %60 : vector<1x1024xi1> to vector<1x1024xi1>
    %206 = vector.broadcast %205 : vector<1x1024xi1> to vector<8x1024xi1>
    %207 = vector.broadcast %cst_78 : f32 to vector<8x1024xf32>
    %208 = arith.select %206, %204, %207 : vector<8x1024xi1>, vector<8x1024xf32>
    %cst_79 = arith.constant 0.000000e+00 : f32
    %209 = vector.broadcast %cst_79 : f32 to vector<8x1xf32>
    %210 = vector.extract_strided_slice %187 {offsets = [0, 0], sizes = [8, 1023], strides = [1, 1]} : vector<8x1024xf32> to vector<8x1023xf32>
    %211 = tpu.concatenate %209, %210 in 1 : vector<8x1xf32>, vector<8x1023xf32> -> vector<8x1024xf32>
    %cst_80 = arith.constant 0.000000e+00 : f32
    %212 = vector.shape_cast %69 : vector<1x1024xi1> to vector<1x1024xi1>
    %213 = vector.broadcast %212 : vector<1x1024xi1> to vector<8x1024xi1>
    %214 = vector.broadcast %cst_80 : f32 to vector<8x1024xf32>
    %215 = arith.select %213, %211, %214 : vector<8x1024xi1>, vector<8x1024xf32>
    %cst_81 = arith.constant 0.000000e+00 : f32
    %216 = vector.broadcast %cst_81 : f32 to vector<8x1xf32>
    %217 = vector.extract_strided_slice %187 {offsets = [0, 1], sizes = [8, 1023], strides = [1, 1]} : vector<8x1024xf32> to vector<8x1023xf32>
    %218 = tpu.concatenate %217, %216 in 1 : vector<8x1023xf32>, vector<8x1xf32> -> vector<8x1024xf32>
    %cst_82 = arith.constant 0.000000e+00 : f32
    %219 = vector.shape_cast %78 : vector<1x1024xi1> to vector<1x1024xi1>
    %220 = vector.broadcast %219 : vector<1x1024xi1> to vector<8x1024xi1>
    %221 = vector.broadcast %cst_82 : f32 to vector<8x1024xf32>
    %222 = arith.select %220, %218, %221 : vector<8x1024xi1>, vector<8x1024xf32>
    %cst_83 = arith.constant 0.000000e+00 : f32
    %223 = vector.broadcast %cst_83 : f32 to vector<8x15xf32>
    %224 = vector.extract_strided_slice %187 {offsets = [0, 15], sizes = [8, 1009], strides = [1, 1]} : vector<8x1024xf32> to vector<8x1009xf32>
    %225 = tpu.concatenate %224, %223 in 1 : vector<8x1009xf32>, vector<8x15xf32> -> vector<8x1024xf32>
    %cst_84 = arith.constant 0.000000e+00 : f32
    %226 = vector.shape_cast %97 : vector<1x1024xi1> to vector<1x1024xi1>
    %227 = vector.broadcast %226 : vector<1x1024xi1> to vector<8x1024xi1>
    %228 = vector.broadcast %cst_84 : f32 to vector<8x1024xf32>
    %229 = arith.select %227, %225, %228 : vector<8x1024xi1>, vector<8x1024xf32>
    %cst_85 = arith.constant 0.000000e+00 : f32
    %230 = vector.broadcast %cst_85 : f32 to vector<8x16xf32>
    %231 = vector.extract_strided_slice %187 {offsets = [0, 16], sizes = [8, 1008], strides = [1, 1]} : vector<8x1024xf32> to vector<8x1008xf32>
    %232 = tpu.concatenate %231, %230 in 1 : vector<8x1008xf32>, vector<8x16xf32> -> vector<8x1024xf32>
    %cst_86 = arith.constant 0.000000e+00 : f32
    %233 = vector.shape_cast %106 : vector<1x1024xi1> to vector<1x1024xi1>
    %234 = vector.broadcast %233 : vector<1x1024xi1> to vector<8x1024xi1>
    %235 = vector.broadcast %cst_86 : f32 to vector<8x1024xf32>
    %236 = arith.select %234, %232, %235 : vector<8x1024xi1>, vector<8x1024xf32>
    %cst_87 = arith.constant 0.000000e+00 : f32
    %237 = vector.broadcast %cst_87 : f32 to vector<8x17xf32>
    %238 = vector.extract_strided_slice %187 {offsets = [0, 17], sizes = [8, 1007], strides = [1, 1]} : vector<8x1024xf32> to vector<8x1007xf32>
    %239 = tpu.concatenate %238, %237 in 1 : vector<8x1007xf32>, vector<8x17xf32> -> vector<8x1024xf32>
    %cst_88 = arith.constant 0.000000e+00 : f32
    %240 = vector.shape_cast %125 : vector<1x1024xi1> to vector<1x1024xi1>
    %241 = vector.broadcast %240 : vector<1x1024xi1> to vector<8x1024xi1>
    %242 = vector.broadcast %cst_88 : f32 to vector<8x1024xf32>
    %243 = arith.select %241, %239, %242 : vector<8x1024xi1>, vector<8x1024xf32>
    %244 = tpu.concatenate %194, %201, %208, %215, %187, %222, %229, %236, %243 in 0 : vector<8x1024xf32>, vector<8x1024xf32>, vector<8x1024xf32>, vector<8x1024xf32>, vector<8x1024xf32>, vector<8x1024xf32>, vector<8x1024xf32>, vector<8x1024xf32>, vector<8x1024xf32> -> vector<72x1024xf32>
    %cst_89 = arith.constant dense<0.000000e+00> : vector<8x1024xf32>
    %245 = tpu.matmul %4, %244, %cst_89 {dimension_numbers = #tpu.dot_dimension_numbers<[1], [0], [0], [1], [0, 0, 1, 1], [], []>} : vector<8x72xf32>, vector<72x1024xf32>, vector<8x1024xf32> -> vector<8x1024xf32>
    %246 = vector.broadcast %5 : vector<8x1xf32> to vector<8x1024xf32>
    %247 = arith.addf %245, %246 : vector<8x1024xf32>
    %cst_90 = arith.constant 0.000000e+00 : f32
    %248 = vector.broadcast %cst_90 : f32 to vector<8x1024xf32>
    %249 = arith.maximumf %247, %248 : vector<8x1024xf32>
    %cst_91 = arith.constant 0.000000e+00 : f32
    %250 = vector.broadcast %cst_91 : f32 to vector<8x1xf32>
    %251 = vector.extract_strided_slice %249 {offsets = [0, 1], sizes = [8, 1023], strides = [1, 1]} : vector<8x1024xf32> to vector<8x1023xf32>
    %252 = tpu.concatenate %251, %250 in 1 : vector<8x1023xf32>, vector<8x1xf32> -> vector<8x1024xf32>
    %253 = arith.maximumf %249, %252 : vector<8x1024xf32>
    %cst_92 = arith.constant 0.000000e+00 : f32
    %254 = vector.broadcast %cst_92 : f32 to vector<8x16xf32>
    %255 = vector.extract_strided_slice %249 {offsets = [0, 16], sizes = [8, 1008], strides = [1, 1]} : vector<8x1024xf32> to vector<8x1008xf32>
    %256 = tpu.concatenate %255, %254 in 1 : vector<8x1008xf32>, vector<8x16xf32> -> vector<8x1024xf32>
    %cst_93 = arith.constant 0.000000e+00 : f32
    %257 = vector.broadcast %cst_93 : f32 to vector<8x17xf32>
    %258 = vector.extract_strided_slice %249 {offsets = [0, 17], sizes = [8, 1007], strides = [1, 1]} : vector<8x1024xf32> to vector<8x1007xf32>
    %259 = tpu.concatenate %258, %257 in 1 : vector<8x1007xf32>, vector<8x17xf32> -> vector<8x1024xf32>
    %260 = arith.maximumf %256, %259 : vector<8x1024xf32>
    %261 = arith.maximumf %253, %260 : vector<8x1024xf32>
    %cst_94 = arith.constant dense<0.000000e+00> : vector<8x256xf32>
    %262 = tpu.matmul %261, %6, %cst_94 {dimension_numbers = #tpu.dot_dimension_numbers<[1], [0], [0], [1], [0, 0, 1, 1], [], []>} : vector<8x1024xf32>, vector<1024x256xf32>, vector<8x256xf32> -> vector<8x256xf32>
    %c0_95 = arith.constant 0 : index
    %c0_96 = arith.constant 0 : index
    %263 = vector.load %arg7[%c0_95, %c0_96] : memref<16x72xf32, #tpu.memory_space<vmem>>, vector<16x72xf32>
    %c0_97 = arith.constant 0 : index
    %c0_98 = arith.constant 0 : index
    %264 = vector.load %arg8[%c0_97, %c0_98] : memref<16x1xf32, #tpu.memory_space<vmem>>, vector<16x1xf32>
    %c0_99 = arith.constant 0 : index
    %c0_100 = arith.constant 0 : index
    %265 = vector.load %arg9[%c0_99, %c0_100] : memref<16x144xf32, #tpu.memory_space<vmem>>, vector<16x144xf32>
    %c0_101 = arith.constant 0 : index
    %c0_102 = arith.constant 0 : index
    %266 = vector.load %arg10[%c0_101, %c0_102] : memref<16x1xf32, #tpu.memory_space<vmem>>, vector<16x1xf32>
    %c0_103 = arith.constant 0 : index
    %c0_104 = arith.constant 0 : index
    %267 = vector.load %arg11[%c0_103, %c0_104] : memref<256x64xf32, #tpu.memory_space<vmem>>, vector<256x64xf32>
    %268 = tpu.iota {dimensions = array<i32: 1>} : vector<1x256xi32>
    %c63_i32 = arith.constant 63 : i32
    %269 = vector.broadcast %c63_i32 : i32 to vector<1x256xi32>
    %270 = arith.andi %268, %269 : vector<1x256xi32>
    %c3_i32 = arith.constant 3 : i32
    %271 = vector.broadcast %c3_i32 : i32 to vector<1x256xi32>
    %272 = arith.shrsi %270, %271 : vector<1x256xi32>
    %c7_i32 = arith.constant 7 : i32
    %273 = vector.broadcast %c7_i32 : i32 to vector<1x256xi32>
    %274 = arith.andi %270, %273 : vector<1x256xi32>
    %c-1_i32_105 = arith.constant -1 : i32
    %275 = vector.broadcast %c-1_i32_105 : i32 to vector<1x256xi32>
    %276 = arith.addi %272, %275 : vector<1x256xi32>
    %c0_i32_106 = arith.constant 0 : i32
    %277 = vector.broadcast %c0_i32_106 : i32 to vector<1x256xi32>
    %278 = arith.cmpi sge, %276, %277 : vector<1x256xi32>
    %c-1_i32_107 = arith.constant -1 : i32
    %279 = vector.broadcast %c-1_i32_107 : i32 to vector<1x256xi32>
    %280 = arith.addi %272, %279 : vector<1x256xi32>
    %c8_i32 = arith.constant 8 : i32
    %281 = vector.broadcast %c8_i32 : i32 to vector<1x256xi32>
    %282 = arith.cmpi slt, %280, %281 : vector<1x256xi32>
    %283 = arith.andi %278, %282 : vector<1x256xi1>
    %c-1_i32_108 = arith.constant -1 : i32
    %284 = vector.broadcast %c-1_i32_108 : i32 to vector<1x256xi32>
    %285 = arith.addi %274, %284 : vector<1x256xi32>
    %c0_i32_109 = arith.constant 0 : i32
    %286 = vector.broadcast %c0_i32_109 : i32 to vector<1x256xi32>
    %287 = arith.cmpi sge, %285, %286 : vector<1x256xi32>
    %c-1_i32_110 = arith.constant -1 : i32
    %288 = vector.broadcast %c-1_i32_110 : i32 to vector<1x256xi32>
    %289 = arith.addi %274, %288 : vector<1x256xi32>
    %c8_i32_111 = arith.constant 8 : i32
    %290 = vector.broadcast %c8_i32_111 : i32 to vector<1x256xi32>
    %291 = arith.cmpi slt, %289, %290 : vector<1x256xi32>
    %292 = arith.andi %287, %291 : vector<1x256xi1>
    %293 = arith.andi %283, %292 : vector<1x256xi1>
    %c-1_i32_112 = arith.constant -1 : i32
    %294 = vector.broadcast %c-1_i32_112 : i32 to vector<1x256xi32>
    %295 = arith.addi %272, %294 : vector<1x256xi32>
    %c0_i32_113 = arith.constant 0 : i32
    %296 = vector.broadcast %c0_i32_113 : i32 to vector<1x256xi32>
    %297 = arith.cmpi sge, %295, %296 : vector<1x256xi32>
    %c-1_i32_114 = arith.constant -1 : i32
    %298 = vector.broadcast %c-1_i32_114 : i32 to vector<1x256xi32>
    %299 = arith.addi %272, %298 : vector<1x256xi32>
    %c8_i32_115 = arith.constant 8 : i32
    %300 = vector.broadcast %c8_i32_115 : i32 to vector<1x256xi32>
    %301 = arith.cmpi slt, %299, %300 : vector<1x256xi32>
    %302 = arith.andi %297, %301 : vector<1x256xi1>
    %c-1_i32_116 = arith.constant -1 : i32
    %303 = vector.broadcast %c-1_i32_116 : i32 to vector<1x256xi32>
    %304 = arith.addi %272, %303 : vector<1x256xi32>
    %c0_i32_117 = arith.constant 0 : i32
    %305 = vector.broadcast %c0_i32_117 : i32 to vector<1x256xi32>
    %306 = arith.cmpi sge, %304, %305 : vector<1x256xi32>
    %c-1_i32_118 = arith.constant -1 : i32
    %307 = vector.broadcast %c-1_i32_118 : i32 to vector<1x256xi32>
    %308 = arith.addi %272, %307 : vector<1x256xi32>
    %c8_i32_119 = arith.constant 8 : i32
    %309 = vector.broadcast %c8_i32_119 : i32 to vector<1x256xi32>
    %310 = arith.cmpi slt, %308, %309 : vector<1x256xi32>
    %311 = arith.andi %306, %310 : vector<1x256xi1>
    %c1_i32_120 = arith.constant 1 : i32
    %312 = vector.broadcast %c1_i32_120 : i32 to vector<1x256xi32>
    %313 = arith.addi %274, %312 : vector<1x256xi32>
    %c0_i32_121 = arith.constant 0 : i32
    %314 = vector.broadcast %c0_i32_121 : i32 to vector<1x256xi32>
    %315 = arith.cmpi sge, %313, %314 : vector<1x256xi32>
    %c1_i32_122 = arith.constant 1 : i32
    %316 = vector.broadcast %c1_i32_122 : i32 to vector<1x256xi32>
    %317 = arith.addi %274, %316 : vector<1x256xi32>
    %c8_i32_123 = arith.constant 8 : i32
    %318 = vector.broadcast %c8_i32_123 : i32 to vector<1x256xi32>
    %319 = arith.cmpi slt, %317, %318 : vector<1x256xi32>
    %320 = arith.andi %315, %319 : vector<1x256xi1>
    %321 = arith.andi %311, %320 : vector<1x256xi1>
    %c-1_i32_124 = arith.constant -1 : i32
    %322 = vector.broadcast %c-1_i32_124 : i32 to vector<1x256xi32>
    %323 = arith.addi %274, %322 : vector<1x256xi32>
    %c0_i32_125 = arith.constant 0 : i32
    %324 = vector.broadcast %c0_i32_125 : i32 to vector<1x256xi32>
    %325 = arith.cmpi sge, %323, %324 : vector<1x256xi32>
    %c-1_i32_126 = arith.constant -1 : i32
    %326 = vector.broadcast %c-1_i32_126 : i32 to vector<1x256xi32>
    %327 = arith.addi %274, %326 : vector<1x256xi32>
    %c8_i32_127 = arith.constant 8 : i32
    %328 = vector.broadcast %c8_i32_127 : i32 to vector<1x256xi32>
    %329 = arith.cmpi slt, %327, %328 : vector<1x256xi32>
    %330 = arith.andi %325, %329 : vector<1x256xi1>
    %c1_i32_128 = arith.constant 1 : i32
    %331 = vector.broadcast %c1_i32_128 : i32 to vector<1x256xi32>
    %332 = arith.addi %274, %331 : vector<1x256xi32>
    %c0_i32_129 = arith.constant 0 : i32
    %333 = vector.broadcast %c0_i32_129 : i32 to vector<1x256xi32>
    %334 = arith.cmpi sge, %332, %333 : vector<1x256xi32>
    %c1_i32_130 = arith.constant 1 : i32
    %335 = vector.broadcast %c1_i32_130 : i32 to vector<1x256xi32>
    %336 = arith.addi %274, %335 : vector<1x256xi32>
    %c8_i32_131 = arith.constant 8 : i32
    %337 = vector.broadcast %c8_i32_131 : i32 to vector<1x256xi32>
    %338 = arith.cmpi slt, %336, %337 : vector<1x256xi32>
    %339 = arith.andi %334, %338 : vector<1x256xi1>
    %c1_i32_132 = arith.constant 1 : i32
    %340 = vector.broadcast %c1_i32_132 : i32 to vector<1x256xi32>
    %341 = arith.addi %272, %340 : vector<1x256xi32>
    %c0_i32_133 = arith.constant 0 : i32
    %342 = vector.broadcast %c0_i32_133 : i32 to vector<1x256xi32>
    %343 = arith.cmpi sge, %341, %342 : vector<1x256xi32>
    %c1_i32_134 = arith.constant 1 : i32
    %344 = vector.broadcast %c1_i32_134 : i32 to vector<1x256xi32>
    %345 = arith.addi %272, %344 : vector<1x256xi32>
    %c8_i32_135 = arith.constant 8 : i32
    %346 = vector.broadcast %c8_i32_135 : i32 to vector<1x256xi32>
    %347 = arith.cmpi slt, %345, %346 : vector<1x256xi32>
    %348 = arith.andi %343, %347 : vector<1x256xi1>
    %c-1_i32_136 = arith.constant -1 : i32
    %349 = vector.broadcast %c-1_i32_136 : i32 to vector<1x256xi32>
    %350 = arith.addi %274, %349 : vector<1x256xi32>
    %c0_i32_137 = arith.constant 0 : i32
    %351 = vector.broadcast %c0_i32_137 : i32 to vector<1x256xi32>
    %352 = arith.cmpi sge, %350, %351 : vector<1x256xi32>
    %c-1_i32_138 = arith.constant -1 : i32
    %353 = vector.broadcast %c-1_i32_138 : i32 to vector<1x256xi32>
    %354 = arith.addi %274, %353 : vector<1x256xi32>
    %c8_i32_139 = arith.constant 8 : i32
    %355 = vector.broadcast %c8_i32_139 : i32 to vector<1x256xi32>
    %356 = arith.cmpi slt, %354, %355 : vector<1x256xi32>
    %357 = arith.andi %352, %356 : vector<1x256xi1>
    %358 = arith.andi %348, %357 : vector<1x256xi1>
    %c1_i32_140 = arith.constant 1 : i32
    %359 = vector.broadcast %c1_i32_140 : i32 to vector<1x256xi32>
    %360 = arith.addi %272, %359 : vector<1x256xi32>
    %c0_i32_141 = arith.constant 0 : i32
    %361 = vector.broadcast %c0_i32_141 : i32 to vector<1x256xi32>
    %362 = arith.cmpi sge, %360, %361 : vector<1x256xi32>
    %c1_i32_142 = arith.constant 1 : i32
    %363 = vector.broadcast %c1_i32_142 : i32 to vector<1x256xi32>
    %364 = arith.addi %272, %363 : vector<1x256xi32>
    %c8_i32_143 = arith.constant 8 : i32
    %365 = vector.broadcast %c8_i32_143 : i32 to vector<1x256xi32>
    %366 = arith.cmpi slt, %364, %365 : vector<1x256xi32>
    %367 = arith.andi %362, %366 : vector<1x256xi1>
    %c1_i32_144 = arith.constant 1 : i32
    %368 = vector.broadcast %c1_i32_144 : i32 to vector<1x256xi32>
    %369 = arith.addi %272, %368 : vector<1x256xi32>
    %c0_i32_145 = arith.constant 0 : i32
    %370 = vector.broadcast %c0_i32_145 : i32 to vector<1x256xi32>
    %371 = arith.cmpi sge, %369, %370 : vector<1x256xi32>
    %c1_i32_146 = arith.constant 1 : i32
    %372 = vector.broadcast %c1_i32_146 : i32 to vector<1x256xi32>
    %373 = arith.addi %272, %372 : vector<1x256xi32>
    %c8_i32_147 = arith.constant 8 : i32
    %374 = vector.broadcast %c8_i32_147 : i32 to vector<1x256xi32>
    %375 = arith.cmpi slt, %373, %374 : vector<1x256xi32>
    %376 = arith.andi %371, %375 : vector<1x256xi1>
    %c1_i32_148 = arith.constant 1 : i32
    %377 = vector.broadcast %c1_i32_148 : i32 to vector<1x256xi32>
    %378 = arith.addi %274, %377 : vector<1x256xi32>
    %c0_i32_149 = arith.constant 0 : i32
    %379 = vector.broadcast %c0_i32_149 : i32 to vector<1x256xi32>
    %380 = arith.cmpi sge, %378, %379 : vector<1x256xi32>
    %c1_i32_150 = arith.constant 1 : i32
    %381 = vector.broadcast %c1_i32_150 : i32 to vector<1x256xi32>
    %382 = arith.addi %274, %381 : vector<1x256xi32>
    %c8_i32_151 = arith.constant 8 : i32
    %383 = vector.broadcast %c8_i32_151 : i32 to vector<1x256xi32>
    %384 = arith.cmpi slt, %382, %383 : vector<1x256xi32>
    %385 = arith.andi %380, %384 : vector<1x256xi1>
    %386 = arith.andi %376, %385 : vector<1x256xi1>
    %cst_152 = arith.constant 0.000000e+00 : f32
    %387 = vector.broadcast %cst_152 : f32 to vector<8x9xf32>
    %388 = vector.extract_strided_slice %262 {offsets = [0, 0], sizes = [8, 247], strides = [1, 1]} : vector<8x256xf32> to vector<8x247xf32>
    %389 = tpu.concatenate %387, %388 in 1 : vector<8x9xf32>, vector<8x247xf32> -> vector<8x256xf32>
    %cst_153 = arith.constant 0.000000e+00 : f32
    %390 = vector.shape_cast %293 : vector<1x256xi1> to vector<1x256xi1>
    %391 = vector.broadcast %390 : vector<1x256xi1> to vector<8x256xi1>
    %392 = vector.broadcast %cst_153 : f32 to vector<8x256xf32>
    %393 = arith.select %391, %389, %392 : vector<8x256xi1>, vector<8x256xf32>
    %cst_154 = arith.constant 0.000000e+00 : f32
    %394 = vector.broadcast %cst_154 : f32 to vector<8x8xf32>
    %395 = vector.extract_strided_slice %262 {offsets = [0, 0], sizes = [8, 248], strides = [1, 1]} : vector<8x256xf32> to vector<8x248xf32>
    %396 = tpu.concatenate %394, %395 in 1 : vector<8x8xf32>, vector<8x248xf32> -> vector<8x256xf32>
    %cst_155 = arith.constant 0.000000e+00 : f32
    %397 = vector.shape_cast %302 : vector<1x256xi1> to vector<1x256xi1>
    %398 = vector.broadcast %397 : vector<1x256xi1> to vector<8x256xi1>
    %399 = vector.broadcast %cst_155 : f32 to vector<8x256xf32>
    %400 = arith.select %398, %396, %399 : vector<8x256xi1>, vector<8x256xf32>
    %cst_156 = arith.constant 0.000000e+00 : f32
    %401 = vector.broadcast %cst_156 : f32 to vector<8x7xf32>
    %402 = vector.extract_strided_slice %262 {offsets = [0, 0], sizes = [8, 249], strides = [1, 1]} : vector<8x256xf32> to vector<8x249xf32>
    %403 = tpu.concatenate %401, %402 in 1 : vector<8x7xf32>, vector<8x249xf32> -> vector<8x256xf32>
    %cst_157 = arith.constant 0.000000e+00 : f32
    %404 = vector.shape_cast %321 : vector<1x256xi1> to vector<1x256xi1>
    %405 = vector.broadcast %404 : vector<1x256xi1> to vector<8x256xi1>
    %406 = vector.broadcast %cst_157 : f32 to vector<8x256xf32>
    %407 = arith.select %405, %403, %406 : vector<8x256xi1>, vector<8x256xf32>
    %cst_158 = arith.constant 0.000000e+00 : f32
    %408 = vector.broadcast %cst_158 : f32 to vector<8x1xf32>
    %409 = vector.extract_strided_slice %262 {offsets = [0, 0], sizes = [8, 255], strides = [1, 1]} : vector<8x256xf32> to vector<8x255xf32>
    %410 = tpu.concatenate %408, %409 in 1 : vector<8x1xf32>, vector<8x255xf32> -> vector<8x256xf32>
    %cst_159 = arith.constant 0.000000e+00 : f32
    %411 = vector.shape_cast %330 : vector<1x256xi1> to vector<1x256xi1>
    %412 = vector.broadcast %411 : vector<1x256xi1> to vector<8x256xi1>
    %413 = vector.broadcast %cst_159 : f32 to vector<8x256xf32>
    %414 = arith.select %412, %410, %413 : vector<8x256xi1>, vector<8x256xf32>
    %cst_160 = arith.constant 0.000000e+00 : f32
    %415 = vector.broadcast %cst_160 : f32 to vector<8x1xf32>
    %416 = vector.extract_strided_slice %262 {offsets = [0, 1], sizes = [8, 255], strides = [1, 1]} : vector<8x256xf32> to vector<8x255xf32>
    %417 = tpu.concatenate %416, %415 in 1 : vector<8x255xf32>, vector<8x1xf32> -> vector<8x256xf32>
    %cst_161 = arith.constant 0.000000e+00 : f32
    %418 = vector.shape_cast %339 : vector<1x256xi1> to vector<1x256xi1>
    %419 = vector.broadcast %418 : vector<1x256xi1> to vector<8x256xi1>
    %420 = vector.broadcast %cst_161 : f32 to vector<8x256xf32>
    %421 = arith.select %419, %417, %420 : vector<8x256xi1>, vector<8x256xf32>
    %cst_162 = arith.constant 0.000000e+00 : f32
    %422 = vector.broadcast %cst_162 : f32 to vector<8x7xf32>
    %423 = vector.extract_strided_slice %262 {offsets = [0, 7], sizes = [8, 249], strides = [1, 1]} : vector<8x256xf32> to vector<8x249xf32>
    %424 = tpu.concatenate %423, %422 in 1 : vector<8x249xf32>, vector<8x7xf32> -> vector<8x256xf32>
    %cst_163 = arith.constant 0.000000e+00 : f32
    %425 = vector.shape_cast %358 : vector<1x256xi1> to vector<1x256xi1>
    %426 = vector.broadcast %425 : vector<1x256xi1> to vector<8x256xi1>
    %427 = vector.broadcast %cst_163 : f32 to vector<8x256xf32>
    %428 = arith.select %426, %424, %427 : vector<8x256xi1>, vector<8x256xf32>
    %cst_164 = arith.constant 0.000000e+00 : f32
    %429 = vector.broadcast %cst_164 : f32 to vector<8x8xf32>
    %430 = vector.extract_strided_slice %262 {offsets = [0, 8], sizes = [8, 248], strides = [1, 1]} : vector<8x256xf32> to vector<8x248xf32>
    %431 = tpu.concatenate %430, %429 in 1 : vector<8x248xf32>, vector<8x8xf32> -> vector<8x256xf32>
    %cst_165 = arith.constant 0.000000e+00 : f32
    %432 = vector.shape_cast %367 : vector<1x256xi1> to vector<1x256xi1>
    %433 = vector.broadcast %432 : vector<1x256xi1> to vector<8x256xi1>
    %434 = vector.broadcast %cst_165 : f32 to vector<8x256xf32>
    %435 = arith.select %433, %431, %434 : vector<8x256xi1>, vector<8x256xf32>
    %cst_166 = arith.constant 0.000000e+00 : f32
    %436 = vector.broadcast %cst_166 : f32 to vector<8x9xf32>
    %437 = vector.extract_strided_slice %262 {offsets = [0, 9], sizes = [8, 247], strides = [1, 1]} : vector<8x256xf32> to vector<8x247xf32>
    %438 = tpu.concatenate %437, %436 in 1 : vector<8x247xf32>, vector<8x9xf32> -> vector<8x256xf32>
    %cst_167 = arith.constant 0.000000e+00 : f32
    %439 = vector.shape_cast %386 : vector<1x256xi1> to vector<1x256xi1>
    %440 = vector.broadcast %439 : vector<1x256xi1> to vector<8x256xi1>
    %441 = vector.broadcast %cst_167 : f32 to vector<8x256xf32>
    %442 = arith.select %440, %438, %441 : vector<8x256xi1>, vector<8x256xf32>
    %443 = tpu.concatenate %393, %400, %407, %414, %262, %421, %428, %435, %442 in 0 : vector<8x256xf32>, vector<8x256xf32>, vector<8x256xf32>, vector<8x256xf32>, vector<8x256xf32>, vector<8x256xf32>, vector<8x256xf32>, vector<8x256xf32>, vector<8x256xf32> -> vector<72x256xf32>
    %cst_168 = arith.constant dense<0.000000e+00> : vector<16x256xf32>
    %444 = tpu.matmul %263, %443, %cst_168 {dimension_numbers = #tpu.dot_dimension_numbers<[1], [0], [0], [1], [0, 0, 1, 1], [], []>} : vector<16x72xf32>, vector<72x256xf32>, vector<16x256xf32> -> vector<16x256xf32>
    %445 = vector.broadcast %264 : vector<16x1xf32> to vector<16x256xf32>
    %446 = arith.addf %444, %445 : vector<16x256xf32>
    %cst_169 = arith.constant 0.000000e+00 : f32
    %447 = vector.broadcast %cst_169 : f32 to vector<16x256xf32>
    %448 = arith.maximumf %446, %447 : vector<16x256xf32>
    %cst_170 = arith.constant 0.000000e+00 : f32
    %449 = vector.broadcast %cst_170 : f32 to vector<16x9xf32>
    %450 = vector.extract_strided_slice %448 {offsets = [0, 0], sizes = [16, 247], strides = [1, 1]} : vector<16x256xf32> to vector<16x247xf32>
    %451 = tpu.concatenate %449, %450 in 1 : vector<16x9xf32>, vector<16x247xf32> -> vector<16x256xf32>
    %cst_171 = arith.constant 0.000000e+00 : f32
    %452 = vector.shape_cast %293 : vector<1x256xi1> to vector<1x256xi1>
    %453 = vector.broadcast %452 : vector<1x256xi1> to vector<16x256xi1>
    %454 = vector.broadcast %cst_171 : f32 to vector<16x256xf32>
    %455 = arith.select %453, %451, %454 : vector<16x256xi1>, vector<16x256xf32>
    %cst_172 = arith.constant 0.000000e+00 : f32
    %456 = vector.broadcast %cst_172 : f32 to vector<16x8xf32>
    %457 = vector.extract_strided_slice %448 {offsets = [0, 0], sizes = [16, 248], strides = [1, 1]} : vector<16x256xf32> to vector<16x248xf32>
    %458 = tpu.concatenate %456, %457 in 1 : vector<16x8xf32>, vector<16x248xf32> -> vector<16x256xf32>
    %cst_173 = arith.constant 0.000000e+00 : f32
    %459 = vector.shape_cast %302 : vector<1x256xi1> to vector<1x256xi1>
    %460 = vector.broadcast %459 : vector<1x256xi1> to vector<16x256xi1>
    %461 = vector.broadcast %cst_173 : f32 to vector<16x256xf32>
    %462 = arith.select %460, %458, %461 : vector<16x256xi1>, vector<16x256xf32>
    %cst_174 = arith.constant 0.000000e+00 : f32
    %463 = vector.broadcast %cst_174 : f32 to vector<16x7xf32>
    %464 = vector.extract_strided_slice %448 {offsets = [0, 0], sizes = [16, 249], strides = [1, 1]} : vector<16x256xf32> to vector<16x249xf32>
    %465 = tpu.concatenate %463, %464 in 1 : vector<16x7xf32>, vector<16x249xf32> -> vector<16x256xf32>
    %cst_175 = arith.constant 0.000000e+00 : f32
    %466 = vector.shape_cast %321 : vector<1x256xi1> to vector<1x256xi1>
    %467 = vector.broadcast %466 : vector<1x256xi1> to vector<16x256xi1>
    %468 = vector.broadcast %cst_175 : f32 to vector<16x256xf32>
    %469 = arith.select %467, %465, %468 : vector<16x256xi1>, vector<16x256xf32>
    %cst_176 = arith.constant 0.000000e+00 : f32
    %470 = vector.broadcast %cst_176 : f32 to vector<16x1xf32>
    %471 = vector.extract_strided_slice %448 {offsets = [0, 0], sizes = [16, 255], strides = [1, 1]} : vector<16x256xf32> to vector<16x255xf32>
    %472 = tpu.concatenate %470, %471 in 1 : vector<16x1xf32>, vector<16x255xf32> -> vector<16x256xf32>
    %cst_177 = arith.constant 0.000000e+00 : f32
    %473 = vector.shape_cast %330 : vector<1x256xi1> to vector<1x256xi1>
    %474 = vector.broadcast %473 : vector<1x256xi1> to vector<16x256xi1>
    %475 = vector.broadcast %cst_177 : f32 to vector<16x256xf32>
    %476 = arith.select %474, %472, %475 : vector<16x256xi1>, vector<16x256xf32>
    %cst_178 = arith.constant 0.000000e+00 : f32
    %477 = vector.broadcast %cst_178 : f32 to vector<16x1xf32>
    %478 = vector.extract_strided_slice %448 {offsets = [0, 1], sizes = [16, 255], strides = [1, 1]} : vector<16x256xf32> to vector<16x255xf32>
    %479 = tpu.concatenate %478, %477 in 1 : vector<16x255xf32>, vector<16x1xf32> -> vector<16x256xf32>
    %cst_179 = arith.constant 0.000000e+00 : f32
    %480 = vector.shape_cast %339 : vector<1x256xi1> to vector<1x256xi1>
    %481 = vector.broadcast %480 : vector<1x256xi1> to vector<16x256xi1>
    %482 = vector.broadcast %cst_179 : f32 to vector<16x256xf32>
    %483 = arith.select %481, %479, %482 : vector<16x256xi1>, vector<16x256xf32>
    %cst_180 = arith.constant 0.000000e+00 : f32
    %484 = vector.broadcast %cst_180 : f32 to vector<16x7xf32>
    %485 = vector.extract_strided_slice %448 {offsets = [0, 7], sizes = [16, 249], strides = [1, 1]} : vector<16x256xf32> to vector<16x249xf32>
    %486 = tpu.concatenate %485, %484 in 1 : vector<16x249xf32>, vector<16x7xf32> -> vector<16x256xf32>
    %cst_181 = arith.constant 0.000000e+00 : f32
    %487 = vector.shape_cast %358 : vector<1x256xi1> to vector<1x256xi1>
    %488 = vector.broadcast %487 : vector<1x256xi1> to vector<16x256xi1>
    %489 = vector.broadcast %cst_181 : f32 to vector<16x256xf32>
    %490 = arith.select %488, %486, %489 : vector<16x256xi1>, vector<16x256xf32>
    %cst_182 = arith.constant 0.000000e+00 : f32
    %491 = vector.broadcast %cst_182 : f32 to vector<16x8xf32>
    %492 = vector.extract_strided_slice %448 {offsets = [0, 8], sizes = [16, 248], strides = [1, 1]} : vector<16x256xf32> to vector<16x248xf32>
    %493 = tpu.concatenate %492, %491 in 1 : vector<16x248xf32>, vector<16x8xf32> -> vector<16x256xf32>
    %cst_183 = arith.constant 0.000000e+00 : f32
    %494 = vector.shape_cast %367 : vector<1x256xi1> to vector<1x256xi1>
    %495 = vector.broadcast %494 : vector<1x256xi1> to vector<16x256xi1>
    %496 = vector.broadcast %cst_183 : f32 to vector<16x256xf32>
    %497 = arith.select %495, %493, %496 : vector<16x256xi1>, vector<16x256xf32>
    %cst_184 = arith.constant 0.000000e+00 : f32
    %498 = vector.broadcast %cst_184 : f32 to vector<16x9xf32>
    %499 = vector.extract_strided_slice %448 {offsets = [0, 9], sizes = [16, 247], strides = [1, 1]} : vector<16x256xf32> to vector<16x247xf32>
    %500 = tpu.concatenate %499, %498 in 1 : vector<16x247xf32>, vector<16x9xf32> -> vector<16x256xf32>
    %cst_185 = arith.constant 0.000000e+00 : f32
    %501 = vector.shape_cast %386 : vector<1x256xi1> to vector<1x256xi1>
    %502 = vector.broadcast %501 : vector<1x256xi1> to vector<16x256xi1>
    %503 = vector.broadcast %cst_185 : f32 to vector<16x256xf32>
    %504 = arith.select %502, %500, %503 : vector<16x256xi1>, vector<16x256xf32>
    %505 = tpu.concatenate %455, %462, %469, %476, %448, %483, %490, %497, %504 in 0 : vector<16x256xf32>, vector<16x256xf32>, vector<16x256xf32>, vector<16x256xf32>, vector<16x256xf32>, vector<16x256xf32>, vector<16x256xf32>, vector<16x256xf32>, vector<16x256xf32> -> vector<144x256xf32>
    %cst_186 = arith.constant dense<0.000000e+00> : vector<16x256xf32>
    %506 = tpu.matmul %265, %505, %cst_186 {dimension_numbers = #tpu.dot_dimension_numbers<[1], [0], [0], [1], [0, 0, 1, 1], [], []>} : vector<16x144xf32>, vector<144x256xf32>, vector<16x256xf32> -> vector<16x256xf32>
    %507 = vector.broadcast %266 : vector<16x1xf32> to vector<16x256xf32>
    %508 = arith.addf %506, %507 : vector<16x256xf32>
    %cst_187 = arith.constant 0.000000e+00 : f32
    %509 = vector.broadcast %cst_187 : f32 to vector<16x256xf32>
    %510 = arith.maximumf %508, %509 : vector<16x256xf32>
    %cst_188 = arith.constant 0.000000e+00 : f32
    %511 = vector.broadcast %cst_188 : f32 to vector<16x1xf32>
    %512 = vector.extract_strided_slice %510 {offsets = [0, 1], sizes = [16, 255], strides = [1, 1]} : vector<16x256xf32> to vector<16x255xf32>
    %513 = tpu.concatenate %512, %511 in 1 : vector<16x255xf32>, vector<16x1xf32> -> vector<16x256xf32>
    %514 = arith.maximumf %510, %513 : vector<16x256xf32>
    %cst_189 = arith.constant 0.000000e+00 : f32
    %515 = vector.broadcast %cst_189 : f32 to vector<16x8xf32>
    %516 = vector.extract_strided_slice %510 {offsets = [0, 8], sizes = [16, 248], strides = [1, 1]} : vector<16x256xf32> to vector<16x248xf32>
    %517 = tpu.concatenate %516, %515 in 1 : vector<16x248xf32>, vector<16x8xf32> -> vector<16x256xf32>
    %cst_190 = arith.constant 0.000000e+00 : f32
    %518 = vector.broadcast %cst_190 : f32 to vector<16x9xf32>
    %519 = vector.extract_strided_slice %510 {offsets = [0, 9], sizes = [16, 247], strides = [1, 1]} : vector<16x256xf32> to vector<16x247xf32>
    %520 = tpu.concatenate %519, %518 in 1 : vector<16x247xf32>, vector<16x9xf32> -> vector<16x256xf32>
    %521 = arith.maximumf %517, %520 : vector<16x256xf32>
    %522 = arith.maximumf %514, %521 : vector<16x256xf32>
    %cst_191 = arith.constant dense<0.000000e+00> : vector<16x64xf32>
    %523 = tpu.matmul %522, %267, %cst_191 {dimension_numbers = #tpu.dot_dimension_numbers<[1], [0], [0], [1], [0, 0, 1, 1], [], []>} : vector<16x256xf32>, vector<256x64xf32>, vector<16x64xf32> -> vector<16x64xf32>
    %524 = vector.extract_strided_slice %523 {offsets = [0, 0], sizes = [1, 64], strides = [1, 1]} : vector<16x64xf32> to vector<1x64xf32>
    %525 = vector.extract_strided_slice %523 {offsets = [1, 0], sizes = [1, 64], strides = [1, 1]} : vector<16x64xf32> to vector<1x64xf32>
    %526 = vector.extract_strided_slice %523 {offsets = [2, 0], sizes = [1, 64], strides = [1, 1]} : vector<16x64xf32> to vector<1x64xf32>
    %527 = vector.extract_strided_slice %523 {offsets = [3, 0], sizes = [1, 64], strides = [1, 1]} : vector<16x64xf32> to vector<1x64xf32>
    %528 = vector.extract_strided_slice %523 {offsets = [4, 0], sizes = [1, 64], strides = [1, 1]} : vector<16x64xf32> to vector<1x64xf32>
    %529 = vector.extract_strided_slice %523 {offsets = [5, 0], sizes = [1, 64], strides = [1, 1]} : vector<16x64xf32> to vector<1x64xf32>
    %530 = vector.extract_strided_slice %523 {offsets = [6, 0], sizes = [1, 64], strides = [1, 1]} : vector<16x64xf32> to vector<1x64xf32>
    %531 = vector.extract_strided_slice %523 {offsets = [7, 0], sizes = [1, 64], strides = [1, 1]} : vector<16x64xf32> to vector<1x64xf32>
    %532 = vector.extract_strided_slice %523 {offsets = [8, 0], sizes = [1, 64], strides = [1, 1]} : vector<16x64xf32> to vector<1x64xf32>
    %533 = vector.extract_strided_slice %523 {offsets = [9, 0], sizes = [1, 64], strides = [1, 1]} : vector<16x64xf32> to vector<1x64xf32>
    %534 = vector.extract_strided_slice %523 {offsets = [10, 0], sizes = [1, 64], strides = [1, 1]} : vector<16x64xf32> to vector<1x64xf32>
    %535 = vector.extract_strided_slice %523 {offsets = [11, 0], sizes = [1, 64], strides = [1, 1]} : vector<16x64xf32> to vector<1x64xf32>
    %536 = vector.extract_strided_slice %523 {offsets = [12, 0], sizes = [1, 64], strides = [1, 1]} : vector<16x64xf32> to vector<1x64xf32>
    %537 = vector.extract_strided_slice %523 {offsets = [13, 0], sizes = [1, 64], strides = [1, 1]} : vector<16x64xf32> to vector<1x64xf32>
    %538 = vector.extract_strided_slice %523 {offsets = [14, 0], sizes = [1, 64], strides = [1, 1]} : vector<16x64xf32> to vector<1x64xf32>
    %539 = vector.extract_strided_slice %523 {offsets = [15, 0], sizes = [1, 64], strides = [1, 1]} : vector<16x64xf32> to vector<1x64xf32>
    %540 = tpu.concatenate %524, %525, %526, %527, %528, %529, %530, %531, %532, %533, %534, %535, %536, %537, %538, %539 in 1 : vector<1x64xf32>, vector<1x64xf32>, vector<1x64xf32>, vector<1x64xf32>, vector<1x64xf32>, vector<1x64xf32>, vector<1x64xf32>, vector<1x64xf32>, vector<1x64xf32>, vector<1x64xf32>, vector<1x64xf32>, vector<1x64xf32>, vector<1x64xf32>, vector<1x64xf32>, vector<1x64xf32>, vector<1x64xf32> -> vector<1x1024xf32>
    %c0_192 = arith.constant 0 : index
    %c0_193 = arith.constant 0 : index
    %541 = vector.load %arg12[%c0_192, %c0_193] : memref<1024x128xf32, #tpu.memory_space<vmem>>, vector<1024x128xf32>
    %cst_194 = arith.constant dense<0.000000e+00> : vector<1x128xf32>
    %542 = tpu.matmul %540, %541, %cst_194 {dimension_numbers = #tpu.dot_dimension_numbers<[1], [0], [0], [1], [0, 0, 1, 1], [], []>} : vector<1x1024xf32>, vector<1024x128xf32>, vector<1x128xf32> -> vector<1x128xf32>
    %c0_195 = arith.constant 0 : index
    %c0_196 = arith.constant 0 : index
    %543 = vector.load %arg13[%c0_195, %c0_196] : memref<1x128xf32, #tpu.memory_space<vmem>>, vector<1x128xf32>
    %544 = arith.addf %542, %543 : vector<1x128xf32>
    %cst_197 = arith.constant 0.000000e+00 : f32
    %545 = vector.broadcast %cst_197 : f32 to vector<1x128xf32>
    %546 = arith.maximumf %544, %545 : vector<1x128xf32>
    %c0_198 = arith.constant 0 : index
    %c0_199 = arith.constant 0 : index
    %547 = vector.load %arg14[%c0_198, %c0_199] : memref<128x512xf32, #tpu.memory_space<vmem>>, vector<128x512xf32>
    %cst_200 = arith.constant dense<0.000000e+00> : vector<1x512xf32>
    %548 = tpu.matmul %546, %547, %cst_200 {dimension_numbers = #tpu.dot_dimension_numbers<[1], [0], [0], [1], [0, 0, 1, 1], [], []>} : vector<1x128xf32>, vector<128x512xf32>, vector<1x512xf32> -> vector<1x512xf32>
    %c0_201 = arith.constant 0 : index
    %c0_202 = arith.constant 0 : index
    %549 = vector.load %arg15[%c0_201, %c0_202] : memref<1x512xf32, #tpu.memory_space<vmem>>, vector<1x512xf32>
    %550 = arith.addf %548, %549 : vector<1x512xf32>
    %c0_203 = arith.constant 0 : index
    %c0_204 = arith.constant 0 : index
    %c0_205 = arith.constant 0 : index
    %551 = vector.load %arg16[%c0_203, %c0_204, %c0_205] : memref<1x1x512xf32, #tpu.memory_space<vmem>>, vector<1x1x512xf32>
    %552 = vector.shape_cast %551 : vector<1x1x512xf32> to vector<1x512xf32>
    %553 = vector.shape_cast %550 : vector<1x512xf32> to vector<1x1x512xf32>
    tpu.vector_store %arg16[%c0_203, %c0_204, %c0_205], %553 {strides = array<i32>} : memref<1x1x512xf32, #tpu.memory_space<vmem>>, vector<1x1x512xf32>,
    return
  }
  func.func @transform_0(%arg0: i32) -> (i32, i32, i32) {
    %c0_i32 = arith.constant 0 : i32
    %c0_i32_0 = arith.constant 0 : i32
    %c0_i32_1 = arith.constant 0 : i32
    return %arg0, %c0_i32, %c0_i32_0 : i32, i32, i32
  }
  func.func @transform_1(%arg0: i32) -> (i32, i32) {
    %c0_i32 = arith.constant 0 : i32
    %c0_i32_0 = arith.constant 0 : i32
    %c0_i32_1 = arith.constant 0 : i32
    return %c0_i32, %c0_i32_0 : i32, i32
  }
  func.func @transform_2(%arg0: i32) -> (i32, i32) {
    %c0_i32 = arith.constant 0 : i32
    %c0_i32_0 = arith.constant 0 : i32
    %c0_i32_1 = arith.constant 0 : i32
    return %c0_i32, %c0_i32_0 : i32, i32
  }
  func.func @transform_3(%arg0: i32) -> (i32, i32) {
    %c0_i32 = arith.constant 0 : i32
    %c0_i32_0 = arith.constant 0 : i32
    %c0_i32_1 = arith.constant 0 : i32
    return %c0_i32, %c0_i32_0 : i32, i32
  }
  func.func @transform_4(%arg0: i32) -> (i32, i32) {
    %c0_i32 = arith.constant 0 : i32
    %c0_i32_0 = arith.constant 0 : i32
    %c0_i32_1 = arith.constant 0 : i32
    return %c0_i32, %c0_i32_0 : i32, i32
  }
  func.func @transform_5(%arg0: i32) -> (i32, i32) {
    %c0_i32 = arith.constant 0 : i32
    %c0_i32_0 = arith.constant 0 : i32
    %c0_i32_1 = arith.constant 0 : i32
    return %c0_i32, %c0_i32_0 : i32, i32
  }
  func.func @transform_6(%arg0: i32) -> (i32, i32) {
    %c0_i32 = arith.constant 0 : i32
    %c0_i32_0 = arith.constant 0 : i32
    %c0_i32_1 = arith.constant 0 : i32
    return %c0_i32, %c0_i32_0 : i32, i32
  }
  func.func @transform_7(%arg0: i32) -> (i32, i32) {
    %c0_i32 = arith.constant 0 : i32
    %c0_i32_0 = arith.constant 0 : i32
    %c0_i32_1 = arith.constant 0 : i32
    return %c0_i32, %c0_i32_0 : i32, i32
  }
  func.func @transform_8(%arg0: i32) -> (i32, i32) {
    %c0_i32 = arith.constant 0 : i32
    %c0_i32_0 = arith.constant 0 : i32
    %c0_i32_1 = arith.constant 0 : i32
    return %c0_i32, %c0_i32_0 : i32, i32
  }
  func.func @transform_9(%arg0: i32) -> (i32, i32) {
    %c0_i32 = arith.constant 0 : i32
    %c0_i32_0 = arith.constant 0 : i32
    %c0_i32_1 = arith.constant 0 : i32
    return %c0_i32, %c0_i32_0 : i32, i32
  }
  func.func @transform_10(%arg0: i32) -> (i32, i32) {
    %c0_i32 = arith.constant 0 : i32
    %c0_i32_0 = arith.constant 0 : i32
    %c0_i32_1 = arith.constant 0 : i32
    return %c0_i32, %c0_i32_0 : i32, i32
  }
  func.func @transform_11(%arg0: i32) -> (i32, i32) {
    %c0_i32 = arith.constant 0 : i32
    %c0_i32_0 = arith.constant 0 : i32
    %c0_i32_1 = arith.constant 0 : i32
    return %c0_i32, %c0_i32_0 : i32, i32
  }
  func.func @transform_12(%arg0: i32) -> (i32, i32) {
    %c0_i32 = arith.constant 0 : i32
    %c0_i32_0 = arith.constant 0 : i32
    %c0_i32_1 = arith.constant 0 : i32
    return %c0_i32, %c0_i32_0 : i32, i32
  }
  func.func @transform_13(%arg0: i32) -> (i32, i32) {
    %c0_i32 = arith.constant 0 : i32
    %c0_i32_0 = arith.constant 0 : i32
    %c0_i32_1 = arith.constant 0 : i32
    return %c0_i32, %c0_i32_0 : i32, i32
  }
  func.func @transform_14(%arg0: i32) -> (i32, i32) {
    %c0_i32 = arith.constant 0 : i32
    %c0_i32_0 = arith.constant 0 : i32
    %c0_i32_1 = arith.constant 0 : i32
    return %c0_i32, %c0_i32_0 : i32, i32
  }
  func.func @transform_15(%arg0: i32) -> (i32, i32, i32) {
    %c0_i32 = arith.constant 0 : i32
    %c0_i32_0 = arith.constant 0 : i32
    %c0_i32_1 = arith.constant 0 : i32
    return %arg0, %c0_i32, %c0_i32_0 : i32, i32, i32
  }
}

</mosaic_0001>

<llo_original>
// kernel: _forward_padded.1
$region0: #{_forward_padded.1}
  #allocation0 [shape = 'u32[]', space=smem, size = 0x4, offset = 0x4, fixed_abs, tag = 'smem constant byte address 0x4 - core index']
  #allocation1 [shape = 'u32[72,128]{1,0:T(1,128)}', space=vmem, size = 0x9000, scoped, tag = 'internal scratch']
  %s0 = inlined_call_operand.vmem [shape: f32[2,8,1024], index: 0, kind: input, shape index: {}]
  %s1 = inlined_call_operand.vmem [shape: f32[8,72], index: 1, kind: input, shape index: {}]
  %s2 = inlined_call_operand.vmem [shape: f32[8,1], index: 2, kind: input, shape index: {}]
  %s3 = inlined_call_operand.vmem [shape: f32[8,72], index: 3, kind: input, shape index: {}]
  %s4 = inlined_call_operand.vmem [shape: f32[8,1], index: 4, kind: input, shape index: {}]
  %s5 = inlined_call_operand.hbm [shape: f32[1024,256], index: 5, kind: input, shape index: {}]
  %s6 = inlined_call_operand.vmem [shape: f32[16,72], index: 6, kind: input, shape index: {}]
  %s7 = inlined_call_operand.vmem [shape: f32[16,1], index: 7, kind: input, shape index: {}]
  %s8 = inlined_call_operand.vmem [shape: f32[16,144], index: 8, kind: input, shape index: {}]
  %s9 = inlined_call_operand.vmem [shape: f32[16,1], index: 9, kind: input, shape index: {}]
  %s10 = inlined_call_operand.vmem [shape: f32[256,64], index: 10, kind: input, shape index: {}]
  %s11 = inlined_call_operand.hbm [shape: f32[1024,128], index: 11, kind: input, shape index: {}]
  %s12 = inlined_call_operand.vmem [shape: f32[1,128], index: 12, kind: input, shape index: {}]
  %s13 = inlined_call_operand.vmem [shape: f32[128,512], index: 13, kind: input, shape index: {}]
  %s14 = inlined_call_operand.vmem [shape: f32[1,512], index: 14, kind: input, shape index: {}]
  %s15 = inlined_call_operand.hbm [shape: f32[2,1,512], index: 15, kind: output, shape index: {}]
  %s16 = sld [smem:[#allocation0]]
  $region101: #{_forward_padded.1} parent=0
    _
  %s18 = ssub.s32 1, %s16
  %s19 = scalar_select 0, %s18, %s16
  $region1: #{_forward_padded.1} parent=0
    #allocation2 [shape = 'u8[1048576]{0}', space=vmem, size = 0x100000, scoped, tag = 'input window, operand 5, single buffered']
    #allocation3 [shape = 's32[2]{0}', space=sflag, size = 0x8, scoped, tag = 'scoped memory for _forward_padded.1']
    #allocation4 [shape = 's32[2]{0}', space=sflag, size = 0x8, scoped, tag = 'scoped memory for _forward_padded.1']
    #allocation5 [shape = 'u8[524288]{0}', space=vmem, size = 0x80000, scoped, tag = 'input window, operand 11, single buffered']
    #allocation6 [shape = 's32[1]{0}', space=sflag, size = 0x4, scoped, tag = 'scoped memory for _forward_padded.1']
    #allocation7 [shape = 'u8[4096]{0}', space=vmem, size = 0x1000, scoped, tag = 'output window, operand 0']
    %20 = vsyncpa [#allocation3], 0
    %21 = vsyncpa [#allocation6], 0
    %22 = vsyncpa [#allocation4], 0
    %s23 = scalar_lea.sflag [#allocation4], 1
    %24 = vsyncpa %s23, 0
    loop: start=0, step=1, limit=4
    $region2: #{_forward_padded.1} parent=1 // loop_pre_header
      _
    $region3: #{_forward_padded.1} parent=1 // loop_header
      %s26 = sphi 0, %s30
      %p27 = scmp.ge.s32.totalorder %s26, 4
      %s36 = sphi 0, %s38
      %s39 = sphi 0, %s36
      %s40 = sphi 0, %s39
      %s56 = sphi 0, %s40
      %s60 = sphi 0, %s60
      %s62 = sphi 0, %s60
      %s63 = sphi 0, %s62
      %s77 = sphi 0, %s63
      %s81 = sphi 0, %s81
      %s83 = sphi 0, %s81
      %s84 = sphi 0, %s83
      %s98 = sphi 0, %s84
      %s102 = sphi 0, %s102
      %s104 = sphi 0, %s102
      %s105 = sphi 0, %s104
      %s119 = sphi 0, %s105
      %s123 = sphi 0, %s123
      %s125 = sphi 0, %s123
      %s126 = sphi 0, %s125
      %s140 = sphi 0, %s126
      %s144 = sphi 0, %s144
      %s146 = sphi 0, %s144
      %s147 = sphi 0, %s146
      %s161 = sphi 0, %s147
      %s165 = sphi 0, %s165
      %s167 = sphi 0, %s165
      %s168 = sphi 0, %s167
      %s182 = sphi 0, %s168
      %s186 = sphi 0, %s186
      %s188 = sphi 0, %s186
      %s189 = sphi 0, %s188
      %s203 = sphi 0, %s189
      %s207 = sphi 0, %s207
      %s209 = sphi 0, %s207
      %s210 = sphi 0, %s209
      %s224 = sphi 0, %s210
      %s228 = sphi 0, %s228
      %s230 = sphi 0, %s228
      %s231 = sphi 0, %s230
      %s245 = sphi 0, %s231
      %s249 = sphi 0, %s249
      %s251 = sphi 0, %s249
      %s252 = sphi 0, %s251
      %s266 = sphi 0, %s252
      %s270 = sphi 0, %s270
      %s272 = sphi 0, %s270
      %s273 = sphi 0, %s272
      %s287 = sphi 0, %s273
      %s291 = sphi 0, %s291
      %s293 = sphi 0, %s291
      %s294 = sphi 0, %s293
      %s308 = sphi 0, %s294
      %s312 = sphi 0, %s312
      %s314 = sphi 0, %s312
      %s315 = sphi 0, %s314
      %s329 = sphi 0, %s315
      %s333 = sphi 0, %s333
      %s335 = sphi 0, %s333
      %s336 = sphi 0, %s335
      %s350 = sphi 0, %s336
      %s356 = sphi 0, %s358
      %s359 = sphi 0, %s356
      %s360 = sphi 0, %s359
      %s376 = sphi 0, %s360
    $region4: #{_forward_padded.1} parent=1 // loop_header_branch
      %29 = sbr.rel (%p27) target = $region8
    $region5: #{_forward_padded.1} parent=1 // loop_body
      %s31 = ssub.s32 %s26, 1
      %s32 = ssub.s32 %s26, 2
      %s33 = sadd.s32 %s26, 1
      %s34 = ssub.s32 %s26, %s33
      %p35 = scmp.eq.s32.totalorder %s34, 0
      %s37 = sadd.s32 %s36, 1
      %s38 = scalar_select %p35, %s36, %s37
      %p41 = pneg %p35
      %p42 = scmp.eq.s32.totalorder %s26, 1
      %p43 = por %p41, %p42
      %p44 = scmp.ne.s32.totalorder %s36, %s39
      %p45 = scmp.eq.s32.totalorder %s26, 0
      %p46 = por %p44, %p45
      %p47 = scmp.ne.s32.totalorder %s36, %s39
      %p48 = scmp.eq.s32.totalorder %s31, 1
      %p49 = por %p47, %p48
      %p50 = scmp.ne.s32.totalorder %s39, %s40
      %p51 = scmp.eq.s32.totalorder %s31, 0
      %p52 = por %p50, %p51
      %p53 = scmp.ne.s32.totalorder %s39, %s40
      %p54 = scmp.eq.s32.totalorder %s32, 1
      %p55 = por %p53, %p54
      %p57 = scmp.ne.s32.totalorder %s40, %s56
      %p58 = scmp.eq.s32.totalorder %s32, 0
      %p59 = por %p57, %p58
      %s61 = sadd.s32 %s60, 1
      %p64 = scmp.eq.s32.totalorder %s26, 1
      %p65 = scmp.ne.s32.totalorder %s60, %s62
      %p66 = scmp.eq.s32.totalorder %s26, 0
      %p67 = por %p65, %p66
      %p68 = scmp.ne.s32.totalorder %s60, %s62
      %p69 = scmp.eq.s32.totalorder %s31, 1
      %p70 = por %p68, %p69
      %p71 = scmp.ne.s32.totalorder %s62, %s63
      %p72 = scmp.eq.s32.totalorder %s31, 0
      %p73 = por %p71, %p72
      %p74 = scmp.ne.s32.totalorder %s62, %s63
      %p75 = scmp.eq.s32.totalorder %s32, 1
      %p76 = por %p74, %p75
      %p78 = scmp.ne.s32.totalorder %s63, %s77
      %p79 = scmp.eq.s32.totalorder %s32, 0
      %p80 = por %p78, %p79
      %s82 = sadd.s32 %s81, 1
      %p85 = scmp.eq.s32.totalorder %s26, 1
      %p86 = scmp.ne.s32.totalorder %s81, %s83
      %p87 = scmp.eq.s32.totalorder %s26, 0
      %p88 = por %p86, %p87
      %p89 = scmp.ne.s32.totalorder %s81, %s83
      %p90 = scmp.eq.s32.totalorder %s31, 1
      %p91 = por %p89, %p90
      %p92 = scmp.ne.s32.totalorder %s83, %s84
      %p93 = scmp.eq.s32.totalorder %s31, 0
      %p94 = por %p92, %p93
      %p95 = scmp.ne.s32.totalorder %s83, %s84
      %p96 = scmp.eq.s32.totalorder %s32, 1
      %p97 = por %p95, %p96
      %p99 = scmp.ne.s32.totalorder %s84, %s98
      %p100 = scmp.eq.s32.totalorder %s32, 0
      %p101 = por %p99, %p100
      %s103 = sadd.s32 %s102, 1
      %p106 = scmp.eq.s32.totalorder %s26, 1
      %p107 = scmp.ne.s32.totalorder %s102, %s104
      %p108 = scmp.eq.s32.totalorder %s26, 0
      %p109 = por %p107, %p108
      %p110 = scmp.ne.s32.totalorder %s102, %s104
      %p111 = scmp.eq.s32.totalorder %s31, 1
      %p112 = por %p110, %p111
      %p113 = scmp.ne.s32.totalorder %s104, %s105
      %p114 = scmp.eq.s32.totalorder %s31, 0
      %p115 = por %p113, %p114
      %p116 = scmp.ne.s32.totalorder %s104, %s105
      %p117 = scmp.eq.s32.totalorder %s32, 1
      %p118 = por %p116, %p117
      %p120 = scmp.ne.s32.totalorder %s105, %s119
      %p121 = scmp.eq.s32.totalorder %s32, 0
      %p122 = por %p120, %p121
      %s124 = sadd.s32 %s123, 1
      %p127 = scmp.eq.s32.totalorder %s26, 1
      %p128 = scmp.ne.s32.totalorder %s123, %s125
      %p129 = scmp.eq.s32.totalorder %s26, 0
      %p130 = por %p128, %p129
      %p131 = scmp.ne.s32.totalorder %s123, %s125
      %p132 = scmp.eq.s32.totalorder %s31, 1
      %p133 = por %p131, %p132
      %p134 = scmp.ne.s32.totalorder %s125, %s126
      %p135 = scmp.eq.s32.totalorder %s31, 0
      %p136 = por %p134, %p135
      %p137 = scmp.ne.s32.totalorder %s125, %s126
      %p138 = scmp.eq.s32.totalorder %s32, 1
      %p139 = por %p137, %p138
      %p141 = scmp.ne.s32.totalorder %s126, %s140
      %p142 = scmp.eq.s32.totalorder %s32, 0
      %p143 = por %p141, %p142
      %s145 = sadd.s32 %s144, 1
      %p148 = scmp.eq.s32.totalorder %s26, 1
      %p149 = scmp.ne.s32.totalorder %s144, %s146
      %p150 = scmp.eq.s32.totalorder %s26, 0
      %p151 = por %p149, %p150
      %p152 = scmp.ne.s32.totalorder %s144, %s146
      %p153 = scmp.eq.s32.totalorder %s31, 1
      %p154 = por %p152, %p153
      %p155 = scmp.ne.s32.totalorder %s146, %s147
      %p156 = scmp.eq.s32.totalorder %s31, 0
      %p157 = por %p155, %p156
      %p158 = scmp.ne.s32.totalorder %s146, %s147
      %p159 = scmp.eq.s32.totalorder %s32, 1
      %p160 = por %p158, %p159
      %p162 = scmp.ne.s32.totalorder %s147, %s161
      %p163 = scmp.eq.s32.totalorder %s32, 0
      %p164 = por %p162, %p163
      %s166 = sadd.s32 %s165, 1
      %p169 = scmp.eq.s32.totalorder %s26, 1
      %p170 = scmp.ne.s32.totalorder %s165, %s167
      %p171 = scmp.eq.s32.totalorder %s26, 0
      %p172 = por %p170, %p171
      %p173 = scmp.ne.s32.totalorder %s165, %s167
      %p174 = scmp.eq.s32.totalorder %s31, 1
      %p175 = por %p173, %p174
      %p176 = scmp.ne.s32.totalorder %s167, %s168
      %p177 = scmp.eq.s32.totalorder %s31, 0
      %p178 = por %p176, %p177
      %p179 = scmp.ne.s32.totalorder %s167, %s168
      %p180 = scmp.eq.s32.totalorder %s32, 1
      %p181 = por %p179, %p180
      %p183 = scmp.ne.s32.totalorder %s168, %s182
      %p184 = scmp.eq.s32.totalorder %s32, 0
      %p185 = por %p183, %p184
      %s187 = sadd.s32 %s186, 1
      %p190 = scmp.eq.s32.totalorder %s26, 1
      %p191 = scmp.ne.s32.totalorder %s186, %s188
      %p192 = scmp.eq.s32.totalorder %s26, 0
      %p193 = por %p191, %p192
      %p194 = scmp.ne.s32.totalorder %s186, %s188
      %p195 = scmp.eq.s32.totalorder %s31, 1
      %p196 = por %p194, %p195
      %p197 = scmp.ne.s32.totalorder %s188, %s189
      %p198 = scmp.eq.s32.totalorder %s31, 0
      %p199 = por %p197, %p198
      %p200 = scmp.ne.s32.totalorder %s188, %s189
      %p201 = scmp.eq.s32.totalorder %s32, 1
      %p202 = por %p200, %p201
      %p204 = scmp.ne.s32.totalorder %s189, %s203
      %p205 = scmp.eq.s32.totalorder %s32, 0
      %p206 = por %p204, %p205
      %s208 = sadd.s32 %s207, 1
      %p211 = scmp.eq.s32.totalorder %s26, 1
      %p212 = scmp.ne.s32.totalorder %s207, %s209
      %p213 = scmp.eq.s32.totalorder %s26, 0
      %p214 = por %p212, %p213
      %p215 = scmp.ne.s32.totalorder %s207, %s209
      %p216 = scmp.eq.s32.totalorder %s31, 1
      %p217 = por %p215, %p216
      %p218 = scmp.ne.s32.totalorder %s209, %s210
      %p219 = scmp.eq.s32.totalorder %s31, 0
      %p220 = por %p218, %p219
      %p221 = scmp.ne.s32.totalorder %s209, %s210
      %p222 = scmp.eq.s32.totalorder %s32, 1
      %p223 = por %p221, %p222
      %p225 = scmp.ne.s32.totalorder %s210, %s224
      %p226 = scmp.eq.s32.totalorder %s32, 0
      %p227 = por %p225, %p226
      %s229 = sadd.s32 %s228, 1
      %p232 = scmp.eq.s32.totalorder %s26, 1
      %p233 = scmp.ne.s32.totalorder %s228, %s230
      %p234 = scmp.eq.s32.totalorder %s26, 0
      %p235 = por %p233, %p234
      %p236 = scmp.ne.s32.totalorder %s228, %s230
      %p237 = scmp.eq.s32.totalorder %s31, 1
      %p238 = por %p236, %p237
      %p239 = scmp.ne.s32.totalorder %s230, %s231
      %p240 = scmp.eq.s32.totalorder %s31, 0
      %p241 = por %p239, %p240
      %p242 = scmp.ne.s32.totalorder %s230, %s231
      %p243 = scmp.eq.s32.totalorder %s32, 1
      %p244 = por %p242, %p243
      %p246 = scmp.ne.s32.totalorder %s231, %s245
      %p247 = scmp.eq.s32.totalorder %s32, 0
      %p248 = por %p246, %p247
      %s250 = sadd.s32 %s249, 1
      %p253 = scmp.eq.s32.totalorder %s26, 1
      %p254 = scmp.ne.s32.totalorder %s249, %s251
      %p255 = scmp.eq.s32.totalorder %s26, 0
      %p256 = por %p254, %p255
      %p257 = scmp.ne.s32.totalorder %s249, %s251
      %p258 = scmp.eq.s32.totalorder %s31, 1
      %p259 = por %p257, %p258
      %p260 = scmp.ne.s32.totalorder %s251, %s252
      %p261 = scmp.eq.s32.totalorder %s31, 0
      %p262 = por %p260, %p261
      %p263 = scmp.ne.s32.totalorder %s251, %s252
      %p264 = scmp.eq.s32.totalorder %s32, 1
      %p265 = por %p263, %p264
      %p267 = scmp.ne.s32.totalorder %s252, %s266
      %p268 = scmp.eq.s32.totalorder %s32, 0
      %p269 = por %p267, %p268
      %s271 = sadd.s32 %s270, 1
      %p274 = scmp.eq.s32.totalorder %s26, 1
      %p275 = scmp.ne.s32.totalorder %s270, %s272
      %p276 = scmp.eq.s32.totalorder %s26, 0
      %p277 = por %p275, %p276
      %p278 = scmp.ne.s32.totalorder %s270, %s272
      %p279 = scmp.eq.s32.totalorder %s31, 1
      %p280 = por %p278, %p279
      %p281 = scmp.ne.s32.totalorder %s272, %s273
      %p282 = scmp.eq.s32.totalorder %s31, 0
      %p283 = por %p281, %p282
      %p284 = scmp.ne.s32.totalorder %s272, %s273
      %p285 = scmp.eq.s32.totalorder %s32, 1
      %p286 = por %p284, %p285
      %p288 = scmp.ne.s32.totalorder %s273, %s287
      %p289 = scmp.eq.s32.totalorder %s32, 0
      %p290 = por %p288, %p289
      %s292 = sadd.s32 %s291, 1
      %p295 = scmp.eq.s32.totalorder %s26, 1
      %p296 = scmp.ne.s32.totalorder %s291, %s293
      %p297 = scmp.eq.s32.totalorder %s26, 0
      %p298 = por %p296, %p297
      %p299 = scmp.ne.s32.totalorder %s291, %s293
      %p300 = scmp.eq.s32.totalorder %s31, 1
      %p301 = por %p299, %p300
      %p302 = scmp.ne.s32.totalorder %s293, %s294
      %p303 = scmp.eq.s32.totalorder %s31, 0
      %p304 = por %p302, %p303
      %p305 = scmp.ne.s32.totalorder %s293, %s294
      %p306 = scmp.eq.s32.totalorder %s32, 1
      %p307 = por %p305, %p306
      %p309 = scmp.ne.s32.totalorder %s294, %s308
      %p310 = scmp.eq.s32.totalorder %s32, 0
      %p311 = por %p309, %p310
      %s313 = sadd.s32 %s312, 1
      %p316 = scmp.eq.s32.totalorder %s26, 1
      %p317 = scmp.ne.s32.totalorder %s312, %s314
      %p318 = scmp.eq.s32.totalorder %s26, 0
      %p319 = por %p317, %p318
      %p320 = scmp.ne.s32.totalorder %s312, %s314
      %p321 = scmp.eq.s32.totalorder %s31, 1
      %p322 = por %p320, %p321
      %p323 = scmp.ne.s32.totalorder %s314, %s315
      %p324 = scmp.eq.s32.totalorder %s31, 0
      %p325 = por %p323, %p324
      %p326 = scmp.ne.s32.totalorder %s314, %s315
      %p327 = scmp.eq.s32.totalorder %s32, 1
      %p328 = por %p326, %p327
      %p330 = scmp.ne.s32.totalorder %s315, %s329
      %p331 = scmp.eq.s32.totalorder %s32, 0
      %p332 = por %p330, %p331
      %s334 = sadd.s32 %s333, 1
      %p337 = scmp.eq.s32.totalorder %s26, 1
      %p338 = scmp.ne.s32.totalorder %s333, %s335
      %p339 = scmp.eq.s32.totalorder %s26, 0
      %p340 = por %p338, %p339
      %p341 = scmp.ne.s32.totalorder %s333, %s335
      %p342 = scmp.eq.s32.totalorder %s31, 1
      %p343 = por %p341, %p342
      %p344 = scmp.ne.s32.totalorder %s335, %s336
      %p345 = scmp.eq.s32.totalorder %s31, 0
      %p346 = por %p344, %p345
      %p347 = scmp.ne.s32.totalorder %s335, %s336
      %p348 = scmp.eq.s32.totalorder %s32, 1
      %p349 = por %p347, %p348
      %p351 = scmp.ne.s32.totalorder %s336, %s350
      %p352 = scmp.eq.s32.totalorder %s32, 0
      %p353 = por %p351, %p352
      %s354 = ssub.s32 %s26, %s33
      %p355 = scmp.eq.s32.totalorder %s354, 0
      %s357 = sadd.s32 %s356, 1
      %s358 = scalar_select %p355, %s356, %s357
      %p361 = pneg %p355
      %p362 = scmp.eq.s32.totalorder %s26, 1
      %p363 = por %p361, %p362
      %p364 = scmp.ne.s32.totalorder %s356, %s359
      %p365 = scmp.eq.s32.totalorder %s26, 0
      %p366 = por %p364, %p365
      %p367 = scmp.ne.s32.totalorder %s356, %s359
      %p368 = scmp.eq.s32.totalorder %s31, 1
      %p369 = por %p367, %p368
      %p370 = scmp.ne.s32.totalorder %s359, %s360
      %p371 = scmp.eq.s32.totalorder %s31, 0
      %p372 = por %p370, %p371
      %p373 = scmp.ne.s32.totalorder %s359, %s360
      %p374 = scmp.eq.s32.totalorder %s32, 1
      %p375 = por %p373, %p374
      %p377 = scmp.ne.s32.totalorder %s360, %s376
      %p378 = scmp.eq.s32.totalorder %s32, 0
      %p379 = por %p377, %p378
      %p380 = scmp.le.s32.totalorder 1, %s26
      %p381 = scmp.lt.s32.totalorder %s26, 3
      %p382 = pnand %p380, %p381
      %p383 = pneg %p382
      // Predicated region
      $region9: #{_forward_padded.1} parent=5 // pred_check
        _
      $region10: #{_forward_padded.1} parent=5 // pred_check_branch
        %385 = sbr.rel (%p382) target = $region12
      $region11: #{_forward_padded.1} parent=5 // pred_region
        %s386 = ssub.s32 %s26, 1
        // Predicated region
        $region13: #{_forward_padded.1} parent=11 // pred_check
          %p387 = pneg %p73
        $region14: #{_forward_padded.1} parent=11 // pred_check_branch
          %389 = sbr.rel (%p387) target = $region16
        $region15: #{_forward_padded.1} parent=11 // pred_region
          _
        $region16: #{_forward_padded.1} parent=11 // pred_fallthru
          _
        // Predicated region
        $region17: #{_forward_padded.1} parent=11 // pred_check
          %p390 = pneg %p94
        $region18: #{_forward_padded.1} parent=11 // pred_check_branch
          %392 = sbr.rel (%p390) target = $region20
        $region19: #{_forward_padded.1} parent=11 // pred_region
          _
        $region20: #{_forward_padded.1} parent=11 // pred_fallthru
          _
        // Predicated region
        $region21: #{_forward_padded.1} parent=11 // pred_check
          %p393 = pneg %p115
        $region22: #{_forward_padded.1} parent=11 // pred_check_branch
          %395 = sbr.rel (%p393) target = $region24
        $region23: #{_forward_padded.1} parent=11 // pred_region
          _
        $region24: #{_forward_padded.1} parent=11 // pred_fallthru
          _
        // Predicated region
        $region25: #{_forward_padded.1} parent=11 // pred_check
          %p396 = pneg %p136
        $region26: #{_forward_padded.1} parent=11 // pred_check_branch
          %398 = sbr.rel (%p396) target = $region28
        $region27: #{_forward_padded.1} parent=11 // pred_region
          _
        $region28: #{_forward_padded.1} parent=11 // pred_fallthru
          _
        // Predicated region
        $region29: #{_forward_padded.1} parent=11 // pred_check
          %p399 = pneg %p157
        $region30: #{_forward_padded.1} parent=11 // pred_check_branch
          %401 = sbr.rel (%p399) target = $region32
        $region31: #{_forward_padded.1} parent=11 // pred_region
          %403 = vsyncadd [#allocation3], 0
          %s404 = sshll.u32 %s5, 4
          %s405 = int_to_ptr.hbm [resolvable:$true] %s404
          %s406 = sshll.u32 [#allocation2], 4
          %s407 = int_to_ptr.vmem [resolvable:$true] %s406
          %412 = dma.hbm_to_vmem [thread:$0]  %s405, 32768, %s407, [#allocation3], 256, 256, 16
        $region32: #{_forward_padded.1} parent=11 // pred_fallthru
          _
        // Predicated region
        $region33: #{_forward_padded.1} parent=11 // pred_check
          %p413 = pneg %p178
        $region34: #{_forward_padded.1} parent=11 // pred_check_branch
          %415 = sbr.rel (%p413) target = $region36
        $region35: #{_forward_padded.1} parent=11 // pred_region
          _
        $region36: #{_forward_padded.1} parent=11 // pred_fallthru
          _
        // Predicated region
        $region37: #{_forward_padded.1} parent=11 // pred_check
          %p416 = pneg %p199
        $region38: #{_forward_padded.1} parent=11 // pred_check_branch
          %418 = sbr.rel (%p416) target = $region40
        $region39: #{_forward_padded.1} parent=11 // pred_region
          _
        $region40: #{_forward_padded.1} parent=11 // pred_fallthru
          _
        // Predicated region
        $region41: #{_forward_padded.1} parent=11 // pred_check
          %p419 = pneg %p220
        $region42: #{_forward_padded.1} parent=11 // pred_check_branch
          %421 = sbr.rel (%p419) target = $region44
        $region43: #{_forward_padded.1} parent=11 // pred_region
          _
        $region44: #{_forward_padded.1} parent=11 // pred_fallthru
          _
        // Predicated region
        $region45: #{_forward_padded.1} parent=11 // pred_check
          %p422 = pneg %p241
        $region46: #{_forward_padded.1} parent=11 // pred_check_branch
          %424 = sbr.rel (%p422) target = $region48
        $region47: #{_forward_padded.1} parent=11 // pred_region
          _
        $region48: #{_forward_padded.1} parent=11 // pred_fallthru
          _
        // Predicated region
        $region49: #{_forward_padded.1} parent=11 // pred_check
          %p425 = pneg %p262
        $region50: #{_forward_padded.1} parent=11 // pred_check_branch
          %427 = sbr.rel (%p425) target = $region52
        $region51: #{_forward_padded.1} parent=11 // pred_region
          _
        $region52: #{_forward_padded.1} parent=11 // pred_fallthru
          _
        // Predicated region
        $region53: #{_forward_padded.1} parent=11 // pred_check
          %p428 = pneg %p283
        $region54: #{_forward_padded.1} parent=11 // pred_check_branch
          %430 = sbr.rel (%p428) target = $region56
        $region55: #{_forward_padded.1} parent=11 // pred_region
          %432 = vsyncadd [#allocation6], 0
          %s433 = sshll.u32 %s11, 4
          %s434 = int_to_ptr.hbm [resolvable:$true] %s433
          %s435 = sshll.u32 [#allocation5], 4
          %s436 = int_to_ptr.vmem [resolvable:$true] %s435
          %441 = dma.hbm_to_vmem [thread:$0]  %s434, 16384, %s436, [#allocation6], 128, 128, 8
        $region56: #{_forward_padded.1} parent=11 // pred_fallthru
          _
        // Predicated region
        $region57: #{_forward_padded.1} parent=11 // pred_check
          %p442 = pneg %p304
        $region58: #{_forward_padded.1} parent=11 // pred_check_branch
          %444 = sbr.rel (%p442) target = $region60
        $region59: #{_forward_padded.1} parent=11 // pred_region
          _
        $region60: #{_forward_padded.1} parent=11 // pred_fallthru
          _
        // Predicated region
        $region61: #{_forward_padded.1} parent=11 // pred_check
          %p445 = pneg %p325
        $region62: #{_forward_padded.1} parent=11 // pred_check_branch
          %447 = sbr.rel (%p445) target = $region64
        $region63: #{_forward_padded.1} parent=11 // pred_region
          _
        $region64: #{_forward_padded.1} parent=11 // pred_fallthru
          _
        // Predicated region
        $region65: #{_forward_padded.1} parent=11 // pred_check
          %p448 = pneg %p346
        $region66: #{_forward_padded.1} parent=11 // pred_check_branch
          %450 = sbr.rel (%p448) target = $region68
        $region67: #{_forward_padded.1} parent=11 // pred_region
          _
        $region68: #{_forward_padded.1} parent=11 // pred_fallthru
          _
      $region12: #{_forward_padded.1} parent=5 // pred_fallthru
        _
      %p451 = scmp.lt.s32.totalorder %s26, 2
      // Predicated region
      $region69: #{_forward_padded.1} parent=5 // pred_check
        %p452 = pneg %p451
      $region70: #{_forward_padded.1} parent=5 // pred_check_branch
        %454 = sbr.rel (%p452) target = $region72
      $region71: #{_forward_padded.1} parent=5 // pred_region
        // Predicated region
        $region73: #{_forward_padded.1} parent=71 // pred_check
          %p455 = pneg %p46
        $region74: #{_forward_padded.1} parent=71 // pred_check_branch
          %457 = sbr.rel (%p455) target = $region76
        $region75: #{_forward_padded.1} parent=71 // pred_region
          %p458 = scmp.lt.s32.totalorder %s26, 1
          %s459 = scalar_select %p458, %s26, 1
          %s460 = smul.addr %s459, 8
          %s461 = smul.addr %s460, 8
          %s462 = scalar_lea.vmem %s0, %s461
        $region76: #{_forward_padded.1} parent=71 // pred_fallthru
          _
      $region72: #{_forward_padded.1} parent=5 // pred_fallthru
        _
      %p463 = scmp.le.s32.totalorder 1, %s26
      %p464 = scmp.lt.s32.totalorder %s26, 3
      %p465 = pnand %p463, %p464
      %p466 = pneg %p465
      // Predicated region
      $region77: #{_forward_padded.1} parent=5 // pred_check
        _
      $region78: #{_forward_padded.1} parent=5 // pred_check_branch
        %468 = sbr.rel (%p465) target = $region80
      $region79: #{_forward_padded.1} parent=5 // pred_region
        %s469 = ssub.s32 %s26, 1
        // Predicated region
        $region81: #{_forward_padded.1} parent=79 // pred_check
          %p470 = pneg %p157
        $region82: #{_forward_padded.1} parent=79 // pred_check_branch
          %472 = sbr.rel (%p470) target = $region84
        $region83: #{_forward_padded.1} parent=79 // pred_region
          %474 = dma.done [#allocation3], 32768
        $region84: #{_forward_padded.1} parent=79 // pred_fallthru
          _
        // Predicated region
        $region85: #{_forward_padded.1} parent=79 // pred_check
          %p475 = pneg %p283
        $region86: #{_forward_padded.1} parent=79 // pred_check_branch
          %477 = sbr.rel (%p475) target = $region88
        $region87: #{_forward_padded.1} parent=79 // pred_region
          %479 = dma.done [#allocation6], 16384
        $region88: #{_forward_padded.1} parent=79 // pred_fallthru
          _
        %p480 = scmp.lt.s32.totalorder %s31, 1
        %s481 = scalar_select %p480, %s31, 1
        %s482 = smul.addr %s481, 8
        %s483 = smul.addr %s482, 8
        %s484 = scalar_lea.vmem %s0, %s483
        %p485 = pneg %p52
        %p486 = pneg %p49
        %p487 = pneg %p73
        %p488 = pneg %p70
        %p489 = pneg %p94
        %p490 = pneg %p91
        %p491 = pneg %p115
        %p492 = pneg %p112
        %p493 = pneg %p136
        %p494 = pneg %p133
        %p495 = pneg %p157
        %p496 = pneg %p154
        %p497 = pneg %p178
        %p498 = pneg %p175
        %p499 = pneg %p199
        %p500 = pneg %p196
        %p501 = pneg %p220
        %p502 = pneg %p217
        %p503 = pneg %p241
        %p504 = pneg %p238
        %p505 = pneg %p262
        %p506 = pneg %p259
        %p507 = pneg %p283
        %p508 = pneg %p280
        %p509 = pneg %p304
        %p510 = pneg %p301
        %p511 = pneg %p325
        %p512 = pneg %p322
        %p513 = pneg %p346
        %p514 = pneg %p343
        %p515 = pneg %p372
        %p516 = pneg %p369
        %s517 = sand.u32 %s359, 1
        %s518 = scalar_lea.sflag [#allocation4], %s517
        %s519 = sand.u32 %s359, 1
        %s520 = smul.addr %s519, 4
        %s521 = scalar_lea.vmem [#allocation7], %s520
        %p522 = scmp.lt.s32.totalorder %s31, 1
        %s523 = scalar_select %p522, %s31, 1
        %s524 = smul.addr %s523, 8
        %s525 = smul.addr %s524, 8
        %s526 = scalar_lea.vmem %s0, %s525
        %v527 = vld [vmem:[%s526] sm:$0xff]
        %v528 = vld [vmem:[%s526 + $0x8] sm:$0xff]
        %v529 = vld [vmem:[%s526 + $0x10] sm:$0xff]
        %v530 = vld [vmem:[%s526 + $0x18] sm:$0xff]
        %v531 = vld [vmem:[%s526 + $0x20] sm:$0xff]
        %v532 = vld [vmem:[%s526 + $0x28] sm:$0xff]
        %v533 = vld [vmem:[%s526 + $0x30] sm:$0xff]
        %v534 = vld [vmem:[%s526 + $0x38] sm:$0xff]
        %v535 = vld [vmem:[%s1] sm:$0xff]
        %v536 = vld [vmem:[%s2] sm:$0xff]
        %v537 = vld [vmem:[%s3] sm:$0xff]
        %v538 = vld [vmem:[%s4] sm:$0xff]
        %v539 = vld [vmem:[#allocation2] sm:$0xff]
        %v540 = vld [vmem:[#allocation2 + $0x8] sm:$0xff]
        %v541 = vld [vmem:[#allocation2 + $0x10] sm:$0xff]
        %v542 = vld [vmem:[#allocation2 + $0x18] sm:$0xff]
        %v543 = vld [vmem:[#allocation2 + $0x20] sm:$0xff]
        %v544 = vld [vmem:[#allocation2 + $0x28] sm:$0xff]
        %v545 = vld [vmem:[#allocation2 + $0x30] sm:$0xff]
        %v546 = vld [vmem:[#allocation2 + $0x38] sm:$0xff]
        %v547 = vld [vmem:[#allocation2 + $0x40] sm:$0xff]
        %v548 = vld [vmem:[#allocation2 + $0x48] sm:$0xff]
        %v549 = vld [vmem:[#allocation2 + $0x50] sm:$0xff]
        %v550 = vld [vmem:[#allocation2 + $0x58] sm:$0xff]
        %v551 = vld [vmem:[#allocation2 + $0x60] sm:$0xff]
        %v552 = vld [vmem:[#allocation2 + $0x68] sm:$0xff]
        %v553 = vld [vmem:[#allocation2 + $0x70] sm:$0xff]
        %v554 = vld [vmem:[#allocation2 + $0x78] sm:$0xff]
        %v555 = vld [vmem:[#allocation2 + $0x80] sm:$0xff]
        %v556 = vld [vmem:[#allocation2 + $0x88] sm:$0xff]
        %v557 = vld [vmem:[#allocation2 + $0x90] sm:$0xff]
        %v558 = vld [vmem:[#allocation2 + $0x98] sm:$0xff]
        %v559 = vld [vmem:[#allocation2 + $0xa0] sm:$0xff]
        %v560 = vld [vmem:[#allocation2 + $0xa8] sm:$0xff]
        %v561 = vld [vmem:[#allocation2 + $0xb0] sm:$0xff]
        %v562 = vld [vmem:[#allocation2 + $0xb8] sm:$0xff]
        %v563 = vld [vmem:[#allocation2 + $0xc0] sm:$0xff]
        %v564 = vld [vmem:[#allocation2 + $0xc8] sm:$0xff]
        %v565 = vld [vmem:[#allocation2 + $0xd0] sm:$0xff]
        %v566 = vld [vmem:[#allocation2 + $0xd8] sm:$0xff]
        %v567 = vld [vmem:[#allocation2 + $0xe0] sm:$0xff]
        %v568 = vld [vmem:[#allocation2 + $0xe8] sm:$0xff]
        %v569 = vld [vmem:[#allocation2 + $0xf0] sm:$0xff]
        %v570 = vld [vmem:[#allocation2 + $0xf8] sm:$0xff]
        %v571 = vld [vmem:[#allocation2 + $0x100] sm:$0xff]
        %v572 = vld [vmem:[#allocation2 + $0x108] sm:$0xff]
        %v573 = vld [vmem:[#allocation2 + $0x110] sm:$0xff]
        %v574 = vld [vmem:[#allocation2 + $0x118] sm:$0xff]
        %v575 = vld [vmem:[#allocation2 + $0x120] sm:$0xff]
        %v576 = vld [vmem:[#allocation2 + $0x128] sm:$0xff]
        %v577 = vld [vmem:[#allocation2 + $0x130] sm:$0xff]
        %v578 = vld [vmem:[#allocation2 + $0x138] sm:$0xff]
        %v579 = vld [vmem:[#allocation2 + $0x140] sm:$0xff]
        %v580 = vld [vmem:[#allocation2 + $0x148] sm:$0xff]
        %v581 = vld [vmem:[#allocation2 + $0x150] sm:$0xff]
        %v582 = vld [vmem:[#allocation2 + $0x158] sm:$0xff]
        %v583 = vld [vmem:[#allocation2 + $0x160] sm:$0xff]
        %v584 = vld [vmem:[#allocation2 + $0x168] sm:$0xff]
        %v585 = vld [vmem:[#allocation2 + $0x170] sm:$0xff]
        %v586 = vld [vmem:[#allocation2 + $0x178] sm:$0xff]
        %v587 = vld [vmem:[#allocation2 + $0x180] sm:$0xff]
        %v588 = vld [vmem:[#allocation2 + $0x188] sm:$0xff]
        %v589 = vld [vmem:[#allocation2 + $0x190] sm:$0xff]
        %v590 = vld [vmem:[#allocation2 + $0x198] sm:$0xff]
        %v591 = vld [vmem:[#allocation2 + $0x1a0] sm:$0xff]
        %v592 = vld [vmem:[#allocation2 + $0x1a8] sm:$0xff]
        %v593 = vld [vmem:[#allocation2 + $0x1b0] sm:$0xff]
        %v594 = vld [vmem:[#allocation2 + $0x1b8] sm:$0xff]
        %v595 = vld [vmem:[#allocation2 + $0x1c0] sm:$0xff]
        %v596 = vld [vmem:[#allocation2 + $0x1c8] sm:$0xff]
        %v597 = vld [vmem:[#allocation2 + $0x1d0] sm:$0xff]
        %v598 = vld [vmem:[#allocation2 + $0x1d8] sm:$0xff]
        %v599 = vld [vmem:[#allocation2 + $0x1e0] sm:$0xff]
        %v600 = vld [vmem:[#allocation2 + $0x1e8] sm:$0xff]
        %v601 = vld [vmem:[#allocation2 + $0x1f0] sm:$0xff]
        %v602 = vld [vmem:[#allocation2 + $0x1f8] sm:$0xff]
        %v603 = vld [vmem:[#allocation2 + $0x200] sm:$0xff]
        %v604 = vld [vmem:[#allocation2 + $0x208] sm:$0xff]
        %v605 = vld [vmem:[#allocation2 + $0x210] sm:$0xff]
        %v606 = vld [vmem:[#allocation2 + $0x218] sm:$0xff]
        %v607 = vld [vmem:[#allocation2 + $0x220] sm:$0xff]
        %v608 = vld [vmem:[#allocation2 + $0x228] sm:$0xff]
        %v609 = vld [vmem:[#allocation2 + $0x230] sm:$0xff]
        %v610 = vld [vmem:[#allocation2 + $0x238] sm:$0xff]
        %v611 = vld [vmem:[#allocation2 + $0x240] sm:$0xff]
        %v612 = vld [vmem:[#allocation2 + $0x248] sm:$0xff]
        %v613 = vld [vmem:[#allocation2 + $0x250] sm:$0xff]
        %v614 = vld [vmem:[#allocation2 + $0x258] sm:$0xff]
        %v615 = vld [vmem:[#allocation2 + $0x260] sm:$0xff]
        %v616 = vld [vmem:[#allocation2 + $0x268] sm:$0xff]
        %v617 = vld [vmem:[#allocation2 + $0x270] sm:$0xff]
        %v618 = vld [vmem:[#allocation2 + $0x278] sm:$0xff]
        %v619 = vld [vmem:[#allocation2 + $0x280] sm:$0xff]
        %v620 = vld [vmem:[#allocation2 + $0x288] sm:$0xff]
        %v621 = vld [vmem:[#allocation2 + $0x290] sm:$0xff]
        %v622 = vld [vmem:[#allocation2 + $0x298] sm:$0xff]
        %v623 = vld [vmem:[#allocation2 + $0x2a0] sm:$0xff]
        %v624 = vld [vmem:[#allocation2 + $0x2a8] sm:$0xff]
        %v625 = vld [vmem:[#allocation2 + $0x2b0] sm:$0xff]
        %v626 = vld [vmem:[#allocation2 + $0x2b8] sm:$0xff]
        %v627 = vld [vmem:[#allocation2 + $0x2c0] sm:$0xff]
        %v628 = vld [vmem:[#allocation2 + $0x2c8] sm:$0xff]
        %v629 = vld [vmem:[#allocation2 + $0x2d0] sm:$0xff]
        %v630 = vld [vmem:[#allocation2 + $0x2d8] sm:$0xff]
        %v631 = vld [vmem:[#allocation2 + $0x2e0] sm:$0xff]
        %v632 = vld [vmem:[#allocation2 + $0x2e8] sm:$0xff]
        %v633 = vld [vmem:[#allocation2 + $0x2f0] sm:$0xff]
        %v634 = vld [vmem:[#allocation2 + $0x2f8] sm:$0xff]
        %v635 = vld [vmem:[#allocation2 + $0x300] sm:$0xff]
        %v636 = vld [vmem:[#allocation2 + $0x308] sm:$0xff]
        %v637 = vld [vmem:[#allocation2 + $0x310] sm:$0xff]
        %v638 = vld [vmem:[#allocation2 + $0x318] sm:$0xff]
        %v639 = vld [vmem:[#allocation2 + $0x320] sm:$0xff]
        %v640 = vld [vmem:[#allocation2 + $0x328] sm:$0xff]
        %v641 = vld [vmem:[#allocation2 + $0x330] sm:$0xff]
        %v642 = vld [vmem:[#allocation2 + $0x338] sm:$0xff]
        %v643 = vld [vmem:[#allocation2 + $0x340] sm:$0xff]
        %v644 = vld [vmem:[#allocation2 + $0x348] sm:$0xff]
        %v645 = vld [vmem:[#allocation2 + $0x350] sm:$0xff]
        %v646 = vld [vmem:[#allocation2 + $0x358] sm:$0xff]
        %v647 = vld [vmem:[#allocation2 + $0x360] sm:$0xff]
        %v648 = vld [vmem:[#allocation2 + $0x368] sm:$0xff]
        %v649 = vld [vmem:[#allocation2 + $0x370] sm:$0xff]
        %v650 = vld [vmem:[#allocation2 + $0x378] sm:$0xff]
        %v651 = vld [vmem:[#allocation2 + $0x380] sm:$0xff]
        %v652 = vld [vmem:[#allocation2 + $0x388] sm:$0xff]
        %v653 = vld [vmem:[#allocation2 + $0x390] sm:$0xff]
        %v654 = vld [vmem:[#allocation2 + $0x398] sm:$0xff]
        %v655 = vld [vmem:[#allocation2 + $0x3a0] sm:$0xff]
        %v656 = vld [vmem:[#allocation2 + $0x3a8] sm:$0xff]
        %v657 = vld [vmem:[#allocation2 + $0x3b0] sm:$0xff]
        %v658 = vld [vmem:[#allocation2 + $0x3b8] sm:$0xff]
        %v659 = vld [vmem:[#allocation2 + $0x3c0] sm:$0xff]
        %v660 = vld [vmem:[#allocation2 + $0x3c8] sm:$0xff]
        %v661 = vld [vmem:[#allocation2 + $0x3d0] sm:$0xff]
        %v662 = vld [vmem:[#allocation2 + $0x3d8] sm:$0xff]
        %v663 = vld [vmem:[#allocation2 + $0x3e0] sm:$0xff]
        %v664 = vld [vmem:[#allocation2 + $0x3e8] sm:$0xff]
        %v665 = vld [vmem:[#allocation2 + $0x3f0] sm:$0xff]
        %v666 = vld [vmem:[#allocation2 + $0x3f8] sm:$0xff]
        %v667 = vld [vmem:[#allocation2 + $0x400] sm:$0xff]
        %v668 = vld [vmem:[#allocation2 + $0x408] sm:$0xff]
        %v669 = vld [vmem:[#allocation2 + $0x410] sm:$0xff]
        %v670 = vld [vmem:[#allocation2 + $0x418] sm:$0xff]
        %v671 = vld [vmem:[#allocation2 + $0x420] sm:$0xff]
        %v672 = vld [vmem:[#allocation2 + $0x428] sm:$0xff]
        %v673 = vld [vmem:[#allocation2 + $0x430] sm:$0xff]
        %v674 = vld [vmem:[#allocation2 + $0x438] sm:$0xff]
        %v675 = vld [vmem:[#allocation2 + $0x440] sm:$0xff]
        %v676 = vld [vmem:[#allocation2 + $0x448] sm:$0xff]
        %v677 = vld [vmem:[#allocation2 + $0x450] sm:$0xff]
        %v678 = vld [vmem:[#allocation2 + $0x458] sm:$0xff]
        %v679 = vld [vmem:[#allocation2 + $0x460] sm:$0xff]
        %v680 = vld [vmem:[#allocation2 + $0x468] sm:$0xff]
        %v681 = vld [vmem:[#allocation2 + $0x470] sm:$0xff]
        %v682 = vld [vmem:[#allocation2 + $0x478] sm:$0xff]
        %v683 = vld [vmem:[#allocation2 + $0x480] sm:$0xff]
        %v684 = vld [vmem:[#allocation2 + $0x488] sm:$0xff]
        %v685 = vld [vmem:[#allocation2 + $0x490] sm:$0xff]
        %v686 = vld [vmem:[#allocation2 + $0x498] sm:$0xff]
        %v687 = vld [vmem:[#allocation2 + $0x4a0] sm:$0xff]
        %v688 = vld [vmem:[#allocation2 + $0x4a8] sm:$0xff]
        %v689 = vld [vmem:[#allocation2 + $0x4b0] sm:$0xff]
        %v690 = vld [vmem:[#allocation2 + $0x4b8] sm:$0xff]
        %v691 = vld [vmem:[#allocation2 + $0x4c0] sm:$0xff]
        %v692 = vld [vmem:[#allocation2 + $0x4c8] sm:$0xff]
        %v693 = vld [vmem:[#allocation2 + $0x4d0] sm:$0xff]
        %v694 = vld [vmem:[#allocation2 + $0x4d8] sm:$0xff]
        %v695 = vld [vmem:[#allocation2 + $0x4e0] sm:$0xff]
        %v696 = vld [vmem:[#allocation2 + $0x4e8] sm:$0xff]
        %v697 = vld [vmem:[#allocation2 + $0x4f0] sm:$0xff]
        %v698 = vld [vmem:[#allocation2 + $0x4f8] sm:$0xff]
        %v699 = vld [vmem:[#allocation2 + $0x500] sm:$0xff]
        %v700 = vld [vmem:[#allocation2 + $0x508] sm:$0xff]
        %v701 = vld [vmem:[#allocation2 + $0x510] sm:$0xff]
        %v702 = vld [vmem:[#allocation2 + $0x518] sm:$0xff]
        %v703 = vld [vmem:[#allocation2 + $0x520] sm:$0xff]
        %v704 = vld [vmem:[#allocation2 + $0x528] sm:$0xff]
        %v705 = vld [vmem:[#allocation2 + $0x530] sm:$0xff]
        %v706 = vld [vmem:[#allocation2 + $0x538] sm:$0xff]
        %v707 = vld [vmem:[#allocation2 + $0x540] sm:$0xff]
        %v708 = vld [vmem:[#allocation2 + $0x548] sm:$0xff]
        %v709 = vld [vmem:[#allocation2 + $0x550] sm:$0xff]
        %v710 = vld [vmem:[#allocation2 + $0x558] sm:$0xff]
        %v711 = vld [vmem:[#allocation2 + $0x560] sm:$0xff]
        %v712 = vld [vmem:[#allocation2 + $0x568] sm:$0xff]
        %v713 = vld [vmem:[#allocation2 + $0x570] sm:$0xff]
        %v714 = vld [vmem:[#allocation2 + $0x578] sm:$0xff]
        %v715 = vld [vmem:[#allocation2 + $0x580] sm:$0xff]
        %v716 = vld [vmem:[#allocation2 + $0x588] sm:$0xff]
        %v717 = vld [vmem:[#allocation2 + $0x590] sm:$0xff]
        %v718 = vld [vmem:[#allocation2 + $0x598] sm:$0xff]
        %v719 = vld [vmem:[#allocation2 + $0x5a0] sm:$0xff]
        %v720 = vld [vmem:[#allocation2 + $0x5a8] sm:$0xff]
        %v721 = vld [vmem:[#allocation2 + $0x5b0] sm:$0xff]
        %v722 = vld [vmem:[#allocation2 + $0x5b8] sm:$0xff]
        %v723 = vld [vmem:[#allocation2 + $0x5c0] sm:$0xff]
        %v724 = vld [vmem:[#allocation2 + $0x5c8] sm:$0xff]
        %v725 = vld [vmem:[#allocation2 + $0x5d0] sm:$0xff]
        %v726 = vld [vmem:[#allocation2 + $0x5d8] sm:$0xff]
        %v727 = vld [vmem:[#allocation2 + $0x5e0] sm:$0xff]
        %v728 = vld [vmem:[#allocation2 + $0x5e8] sm:$0xff]
        %v729 = vld [vmem:[#allocation2 + $0x5f0] sm:$0xff]
        %v730 = vld [vmem:[#allocation2 + $0x5f8] sm:$0xff]
        %v731 = vld [vmem:[#allocation2 + $0x600] sm:$0xff]
        %v732 = vld [vmem:[#allocation2 + $0x608] sm:$0xff]
        %v733 = vld [vmem:[#allocation2 + $0x610] sm:$0xff]
        %v734 = vld [vmem:[#allocation2 + $0x618] sm:$0xff]
        %v735 = vld [vmem:[#allocation2 + $0x620] sm:$0xff]
        %v736 = vld [vmem:[#allocation2 + $0x628] sm:$0xff]
        %v737 = vld [vmem:[#allocation2 + $0x630] sm:$0xff]
        %v738 = vld [vmem:[#allocation2 + $0x638] sm:$0xff]
        %v739 = vld [vmem:[#allocation2 + $0x640] sm:$0xff]
        %v740 = vld [vmem:[#allocation2 + $0x648] sm:$0xff]
        %v741 = vld [vmem:[#allocation2 + $0x650] sm:$0xff]
        %v742 = vld [vmem:[#allocation2 + $0x658] sm:$0xff]
        %v743 = vld [vmem:[#allocation2 + $0x660] sm:$0xff]
        %v744 = vld [vmem:[#allocation2 + $0x668] sm:$0xff]
        %v745 = vld [vmem:[#allocation2 + $0x670] sm:$0xff]
        %v746 = vld [vmem:[#allocation2 + $0x678] sm:$0xff]
        %v747 = vld [vmem:[#allocation2 + $0x680] sm:$0xff]
        %v748 = vld [vmem:[#allocation2 + $0x688] sm:$0xff]
        %v749 = vld [vmem:[#allocation2 + $0x690] sm:$0xff]
        %v750 = vld [vmem:[#allocation2 + $0x698] sm:$0xff]
        %v751 = vld [vmem:[#allocation2 + $0x6a0] sm:$0xff]
        %v752 = vld [vmem:[#allocation2 + $0x6a8] sm:$0xff]
        %v753 = vld [vmem:[#allocation2 + $0x6b0] sm:$0xff]
        %v754 = vld [vmem:[#allocation2 + $0x6b8] sm:$0xff]
        %v755 = vld [vmem:[#allocation2 + $0x6c0] sm:$0xff]
        %v756 = vld [vmem:[#allocation2 + $0x6c8] sm:$0xff]
        %v757 = vld [vmem:[#allocation2 + $0x6d0] sm:$0xff]
        %v758 = vld [vmem:[#allocation2 + $0x6d8] sm:$0xff]
        %v759 = vld [vmem:[#allocation2 + $0x6e0] sm:$0xff]
        %v760 = vld [vmem:[#allocation2 + $0x6e8] sm:$0xff]
        %v761 = vld [vmem:[#allocation2 + $0x6f0] sm:$0xff]
        %v762 = vld [vmem:[#allocation2 + $0x6f8] sm:$0xff]
        %v763 = vld [vmem:[#allocation2 + $0x700] sm:$0xff]
        %v764 = vld [vmem:[#allocation2 + $0x708] sm:$0xff]
        %v765 = vld [vmem:[#allocation2 + $0x710] sm:$0xff]
        %v766 = vld [vmem:[#allocation2 + $0x718] sm:$0xff]
        %v767 = vld [vmem:[#allocation2 + $0x720] sm:$0xff]
        %v768 = vld [vmem:[#allocation2 + $0x728] sm:$0xff]
        %v769 = vld [vmem:[#allocation2 + $0x730] sm:$0xff]
        %v770 = vld [vmem:[#allocation2 + $0x738] sm:$0xff]
        %v771 = vld [vmem:[#allocation2 + $0x740] sm:$0xff]
        %v772 = vld [vmem:[#allocation2 + $0x748] sm:$0xff]
        %v773 = vld [vmem:[#allocation2 + $0x750] sm:$0xff]
        %v774 = vld [vmem:[#allocation2 + $0x758] sm:$0xff]
        %v775 = vld [vmem:[#allocation2 + $0x760] sm:$0xff]
        %v776 = vld [vmem:[#allocation2 + $0x768] sm:$0xff]
        %v777 = vld [vmem:[#allocation2 + $0x770] sm:$0xff]
        %v778 = vld [vmem:[#allocation2 + $0x778] sm:$0xff]
        %v779 = vld [vmem:[#allocation2 + $0x780] sm:$0xff]
        %v780 = vld [vmem:[#allocation2 + $0x788] sm:$0xff]
        %v781 = vld [vmem:[#allocation2 + $0x790] sm:$0xff]
        %v782 = vld [vmem:[#allocation2 + $0x798] sm:$0xff]
        %v783 = vld [vmem:[#allocation2 + $0x7a0] sm:$0xff]
        %v784 = vld [vmem:[#allocation2 + $0x7a8] sm:$0xff]
        %v785 = vld [vmem:[#allocation2 + $0x7b0] sm:$0xff]
        %v786 = vld [vmem:[#allocation2 + $0x7b8] sm:$0xff]
        %v787 = vld [vmem:[#allocation2 + $0x7c0] sm:$0xff]
        %v788 = vld [vmem:[#allocation2 + $0x7c8] sm:$0xff]
        %v789 = vld [vmem:[#allocation2 + $0x7d0] sm:$0xff]
        %v790 = vld [vmem:[#allocation2 + $0x7d8] sm:$0xff]
        %v791 = vld [vmem:[#allocation2 + $0x7e0] sm:$0xff]
        %v792 = vld [vmem:[#allocation2 + $0x7e8] sm:$0xff]
        %v793 = vld [vmem:[#allocation2 + $0x7f0] sm:$0xff]
        %v794 = vld [vmem:[#allocation2 + $0x7f8] sm:$0xff]
        %v795 = vlaneseq
        %v796 = vand.u32 %v795, 127
        %v797 = vadd.s32 %v796, 128
        %v798 = vadd.s32 %v796, 256
        %v799 = vadd.s32 %v796, 384
        %v800 = vadd.s32 %v796, 512
        %v801 = vadd.s32 %v796, 640
        %v802 = vadd.s32 %v796, 768
        %v803 = vadd.s32 %v796, 896
        %v804 = vand.u32 %v796, 255
        %v805 = vand.u32 %v797, 255
        %v806 = vand.u32 %v798, 255
        %v807 = vand.u32 %v799, 255
        %v808 = vand.u32 %v800, 255
        %v809 = vand.u32 %v801, 255
        %v810 = vand.u32 %v802, 255
        %v811 = vand.u32 %v803, 255
        %v812 = vshra.s32 %v804, 4
        %v813 = vshra.s32 %v805, 4
        %v814 = vshra.s32 %v806, 4
        %v815 = vshra.s32 %v807, 4
        %v816 = vshra.s32 %v808, 4
        %v817 = vshra.s32 %v809, 4
        %v818 = vshra.s32 %v810, 4
        %v819 = vshra.s32 %v811, 4
        %v820 = vand.u32 %v804, 15
        %v821 = vand.u32 %v805, 15
        %v822 = vand.u32 %v806, 15
        %v823 = vand.u32 %v807, 15
        %v824 = vand.u32 %v808, 15
        %v825 = vand.u32 %v809, 15
        %v826 = vand.u32 %v810, 15
        %v827 = vand.u32 %v811, 15
        %v828 = vadd.s32 %v812, 4294967295
        %v829 = vadd.s32 %v813, 4294967295
        %v830 = vadd.s32 %v814, 4294967295
        %v831 = vadd.s32 %v815, 4294967295
        %v832 = vadd.s32 %v816, 4294967295
        %v833 = vadd.s32 %v817, 4294967295
        %v834 = vadd.s32 %v818, 4294967295
        %v835 = vadd.s32 %v819, 4294967295
        %vm836 = vcmp.ge.s32.totalorder %v828, 0
        %vm837 = vcmp.ge.s32.totalorder %v829, 0
        %vm838 = vcmp.ge.s32.totalorder %v830, 0
        %vm839 = vcmp.ge.s32.totalorder %v831, 0
        %vm840 = vcmp.ge.s32.totalorder %v832, 0
        %vm841 = vcmp.ge.s32.totalorder %v833, 0
        %vm842 = vcmp.ge.s32.totalorder %v834, 0
        %vm843 = vcmp.ge.s32.totalorder %v835, 0
        %vm844 = vcmp.lt.s32.totalorder %v828, 16
        %vm845 = vcmp.lt.s32.totalorder %v829, 16
        %vm846 = vcmp.lt.s32.totalorder %v830, 16
        %vm847 = vcmp.lt.s32.totalorder %v831, 16
        %vm848 = vcmp.lt.s32.totalorder %v832, 16
        %vm849 = vcmp.lt.s32.totalorder %v833, 16
        %vm850 = vcmp.lt.s32.totalorder %v834, 16
        %vm851 = vcmp.lt.s32.totalorder %v835, 16
        %vm852 = vmand %vm836, %vm844
        %vm853 = vmand %vm837, %vm845
        %vm854 = vmand %vm838, %vm846
        %vm855 = vmand %vm839, %vm847
        %vm856 = vmand %vm840, %vm848
        %vm857 = vmand %vm841, %vm849
        %vm858 = vmand %vm842, %vm850
        %vm859 = vmand %vm843, %vm851
        %v860 = vadd.s32 %v820, 4294967295
        %v861 = vadd.s32 %v821, 4294967295
        %v862 = vadd.s32 %v822, 4294967295
        %v863 = vadd.s32 %v823, 4294967295
        %v864 = vadd.s32 %v824, 4294967295
        %v865 = vadd.s32 %v825, 4294967295
        %v866 = vadd.s32 %v826, 4294967295
        %v867 = vadd.s32 %v827, 4294967295
        %vm868 = vcmp.ge.s32.totalorder %v860, 0
        %vm869 = vcmp.ge.s32.totalorder %v861, 0
        %vm870 = vcmp.ge.s32.totalorder %v862, 0
        %vm871 = vcmp.ge.s32.totalorder %v863, 0
        %vm872 = vcmp.ge.s32.totalorder %v864, 0
        %vm873 = vcmp.ge.s32.totalorder %v865, 0
        %vm874 = vcmp.ge.s32.totalorder %v866, 0
        %vm875 = vcmp.ge.s32.totalorder %v867, 0
        %vm876 = vcmp.lt.s32.totalorder %v860, 16
        %vm877 = vcmp.lt.s32.totalorder %v861, 16
        %vm878 = vcmp.lt.s32.totalorder %v862, 16
        %vm879 = vcmp.lt.s32.totalorder %v863, 16
        %vm880 = vcmp.lt.s32.totalorder %v864, 16
        %vm881 = vcmp.lt.s32.totalorder %v865, 16
        %vm882 = vcmp.lt.s32.totalorder %v866, 16
        %vm883 = vcmp.lt.s32.totalorder %v867, 16
        %vm884 = vmand %vm868, %vm876
        %vm885 = vmand %vm869, %vm877
        %vm886 = vmand %vm870, %vm878
        %vm887 = vmand %vm871, %vm879
        %vm888 = vmand %vm872, %vm880
        %vm889 = vmand %vm873, %vm881
        %vm890 = vmand %vm874, %vm882
        %vm891 = vmand %vm875, %vm883
        %vm892 = vmand %vm852, %vm884
        %vm893 = vmand %vm853, %vm885
        %vm894 = vmand %vm854, %vm886
        %vm895 = vmand %vm855, %vm887
        %vm896 = vmand %vm856, %vm888
        %vm897 = vmand %vm857, %vm889
        %vm898 = vmand %vm858, %vm890
        %vm899 = vmand %vm859, %vm891
        %v900 = vadd.s32 %v820, 1
        %v901 = vadd.s32 %v821, 1
        %v902 = vadd.s32 %v822, 1
        %v903 = vadd.s32 %v823, 1
        %v904 = vadd.s32 %v824, 1
        %v905 = vadd.s32 %v825, 1
        %v906 = vadd.s32 %v826, 1
        %v907 = vadd.s32 %v827, 1
        %vm908 = vcmp.ge.s32.totalorder %v900, 0
        %vm909 = vcmp.ge.s32.totalorder %v901, 0
        %vm910 = vcmp.ge.s32.totalorder %v902, 0
        %vm911 = vcmp.ge.s32.totalorder %v903, 0
        %vm912 = vcmp.ge.s32.totalorder %v904, 0
        %vm913 = vcmp.ge.s32.totalorder %v905, 0
        %vm914 = vcmp.ge.s32.totalorder %v906, 0
        %vm915 = vcmp.ge.s32.totalorder %v907, 0
        %vm916 = vcmp.lt.s32.totalorder %v900, 16
        %vm917 = vcmp.lt.s32.totalorder %v901, 16
        %vm918 = vcmp.lt.s32.totalorder %v902, 16
        %vm919 = vcmp.lt.s32.totalorder %v903, 16
        %vm920 = vcmp.lt.s32.totalorder %v904, 16
        %vm921 = vcmp.lt.s32.totalorder %v905, 16
        %vm922 = vcmp.lt.s32.totalorder %v906, 16
        %vm923 = vcmp.lt.s32.totalorder %v907, 16
        %vm924 = vmand %vm908, %vm916
        %vm925 = vmand %vm909, %vm917
        %vm926 = vmand %vm910, %vm918
        %vm927 = vmand %vm911, %vm919
        %vm928 = vmand %vm912, %vm920
        %vm929 = vmand %vm913, %vm921
        %vm930 = vmand %vm914, %vm922
        %vm931 = vmand %vm915, %vm923
        %vm932 = vmand %vm852, %vm924
        %vm933 = vmand %vm853, %vm925
        %vm934 = vmand %vm854, %vm926
        %vm935 = vmand %vm855, %vm927
        %vm936 = vmand %vm856, %vm928
        %vm937 = vmand %vm857, %vm929
        %vm938 = vmand %vm858, %vm930
        %vm939 = vmand %vm859, %vm931
        %v940 = vadd.s32 %v812, 1
        %v941 = vadd.s32 %v813, 1
        %v942 = vadd.s32 %v814, 1
        %v943 = vadd.s32 %v815, 1
        %v944 = vadd.s32 %v816, 1
        %v945 = vadd.s32 %v817, 1
        %v946 = vadd.s32 %v818, 1
        %v947 = vadd.s32 %v819, 1
        %vm948 = vcmp.ge.s32.totalorder %v940, 0
        %vm949 = vcmp.ge.s32.totalorder %v941, 0
        %vm950 = vcmp.ge.s32.totalorder %v942, 0
        %vm951 = vcmp.ge.s32.totalorder %v943, 0
        %vm952 = vcmp.ge.s32.totalorder %v944, 0
        %vm953 = vcmp.ge.s32.totalorder %v945, 0
        %vm954 = vcmp.ge.s32.totalorder %v946, 0
        %vm955 = vcmp.ge.s32.totalorder %v947, 0
        %vm956 = vcmp.lt.s32.totalorder %v940, 16
        %vm957 = vcmp.lt.s32.totalorder %v941, 16
        %vm958 = vcmp.lt.s32.totalorder %v942, 16
        %vm959 = vcmp.lt.s32.totalorder %v943, 16
        %vm960 = vcmp.lt.s32.totalorder %v944, 16
        %vm961 = vcmp.lt.s32.totalorder %v945, 16
        %vm962 = vcmp.lt.s32.totalorder %v946, 16
        %vm963 = vcmp.lt.s32.totalorder %v947, 16
        %vm964 = vmand %vm948, %vm956
        %vm965 = vmand %vm949, %vm957
        %vm966 = vmand %vm950, %vm958
        %vm967 = vmand %vm951, %vm959
        %vm968 = vmand %vm952, %vm960
        %vm969 = vmand %vm953, %vm961
        %vm970 = vmand %vm954, %vm962
        %vm971 = vmand %vm955, %vm963
        %vm972 = vmand %vm964, %vm884
        %vm973 = vmand %vm965, %vm885
        %vm974 = vmand %vm966, %vm886
        %vm975 = vmand %vm967, %vm887
        %vm976 = vmand %vm968, %vm888
        %vm977 = vmand %vm969, %vm889
        %vm978 = vmand %vm970, %vm890
        %vm979 = vmand %vm971, %vm891
        %vm980 = vmand %vm964, %vm924
        %vm981 = vmand %vm965, %vm925
        %vm982 = vmand %vm966, %vm926
        %vm983 = vmand %vm967, %vm927
        %vm984 = vmand %vm968, %vm928
        %vm985 = vmand %vm969, %vm929
        %vm986 = vmand %vm970, %vm930
        %vm987 = vmand %vm971, %vm931
        %996 = vrot.lane.b32.xlu0 %v527, 17
        %v997 = vpop.permute.xlu0 %996
        %998 = vrot.lane.b32.xlu0 %v528, 17
        %v999 = vpop.permute.xlu0 %998
        %1000 = vrot.lane.b32.xlu0 %v529, 17
        %v1001 = vpop.permute.xlu0 %1000
        %1002 = vrot.lane.b32.xlu0 %v530, 17
        %v1003 = vpop.permute.xlu0 %1002
        %1004 = vrot.lane.b32.xlu0 %v531, 17
        %v1005 = vpop.permute.xlu0 %1004
        %1006 = vrot.lane.b32.xlu0 %v532, 17
        %v1007 = vpop.permute.xlu0 %1006
        %1008 = vrot.lane.b32.xlu0 %v533, 17
        %v1009 = vpop.permute.xlu0 %1008
        %1010 = vrot.lane.b32.xlu0 %v534, 17
        %v1011 = vpop.permute.xlu0 %1010
        %vm1012 = vcmask 138240
        %v1013 = vsel %vm1012, %v997, %v999
        %v1014 = vsel %vm1012, %v999, %v1001
        %v1015 = vsel %vm1012, %v1001, %v1003
        %v1016 = vsel %vm1012, %v1003, %v1005
        %v1017 = vsel %vm1012, %v1005, %v1007
        %v1018 = vsel %vm1012, %v1007, %v1009
        %v1019 = vsel %vm1012, %v1009, %v1011
        %v1028 = vsel %vm1012, 0.0, %v997
        %v1029 = vsel %vm892, 1, 0
        %v1030 = vsel %vm893, 1, 0
        %v1031 = vsel %vm894, 1, 0
        %v1032 = vsel %vm895, 1, 0
        %v1033 = vsel %vm896, 1, 0
        %v1034 = vsel %vm897, 1, 0
        %v1035 = vsel %vm898, 1, 0
        %v1036 = vsel %vm899, 1, 0
        %vm1037 = vcmp.eq.s32.totalorder %v1029, 1
        %vm1038 = vcmp.eq.s32.totalorder %v1030, 1
        %vm1039 = vcmp.eq.s32.totalorder %v1031, 1
        %vm1040 = vcmp.eq.s32.totalorder %v1032, 1
        %vm1041 = vcmp.eq.s32.totalorder %v1033, 1
        %vm1042 = vcmp.eq.s32.totalorder %v1034, 1
        %vm1043 = vcmp.eq.s32.totalorder %v1035, 1
        %vm1044 = vcmp.eq.s32.totalorder %v1036, 1
        %v1045 = vsel %vm1037, %v1028, 0.0
        %v1046 = vsel %vm1038, %v1013, 0.0
        %v1047 = vsel %vm1039, %v1014, 0.0
        %v1048 = vsel %vm1040, %v1015, 0.0
        %v1049 = vsel %vm1041, %v1016, 0.0
        %v1050 = vsel %vm1042, %v1017, 0.0
        %v1051 = vsel %vm1043, %v1018, 0.0
        %v1052 = vsel %vm1044, %v1019, 0.0
        %1053 = vrot.lane.b32.xlu0 %v527, 16
        %v1054 = vpop.permute.xlu0 %1053
        %1055 = vrot.lane.b32.xlu0 %v528, 16
        %v1056 = vpop.permute.xlu0 %1055
        %1057 = vrot.lane.b32.xlu0 %v529, 16
        %v1058 = vpop.permute.xlu0 %1057
        %1059 = vrot.lane.b32.xlu0 %v530, 16
        %v1060 = vpop.permute.xlu0 %1059
        %1061 = vrot.lane.b32.xlu0 %v531, 16
        %v1062 = vpop.permute.xlu0 %1061
        %1063 = vrot.lane.b32.xlu0 %v532, 16
        %v1064 = vpop.permute.xlu0 %1063
        %1065 = vrot.lane.b32.xlu0 %v533, 16
        %v1066 = vpop.permute.xlu0 %1065
        %1067 = vrot.lane.b32.xlu0 %v534, 16
        %v1068 = vpop.permute.xlu0 %1067
        %vm1069 = vcmask 130048
        %v1070 = vsel %vm1069, %v1054, %v1056
        %v1071 = vsel %vm1069, %v1056, %v1058
        %v1072 = vsel %vm1069, %v1058, %v1060
        %v1073 = vsel %vm1069, %v1060, %v1062
        %v1074 = vsel %vm1069, %v1062, %v1064
        %v1075 = vsel %vm1069, %v1064, %v1066
        %v1076 = vsel %vm1069, %v1066, %v1068
        %v1085 = vsel %vm1069, 0.0, %v1054
        %v1086 = vsel %vm852, 1, 0
        %v1087 = vsel %vm853, 1, 0
        %v1088 = vsel %vm854, 1, 0
        %v1089 = vsel %vm855, 1, 0
        %v1090 = vsel %vm856, 1, 0
        %v1091 = vsel %vm857, 1, 0
        %v1092 = vsel %vm858, 1, 0
        %v1093 = vsel %vm859, 1, 0
        %vm1094 = vcmp.eq.s32.totalorder %v1086, 1
        %vm1095 = vcmp.eq.s32.totalorder %v1087, 1
        %vm1096 = vcmp.eq.s32.totalorder %v1088, 1
        %vm1097 = vcmp.eq.s32.totalorder %v1089, 1
        %vm1098 = vcmp.eq.s32.totalorder %v1090, 1
        %vm1099 = vcmp.eq.s32.totalorder %v1091, 1
        %vm1100 = vcmp.eq.s32.totalorder %v1092, 1
        %vm1101 = vcmp.eq.s32.totalorder %v1093, 1
        %v1102 = vsel %vm1094, %v1085, 0.0
        %v1103 = vsel %vm1095, %v1070, 0.0
        %v1104 = vsel %vm1096, %v1071, 0.0
        %v1105 = vsel %vm1097, %v1072, 0.0
        %v1106 = vsel %vm1098, %v1073, 0.0
        %v1107 = vsel %vm1099, %v1074, 0.0
        %v1108 = vsel %vm1100, %v1075, 0.0
        %v1109 = vsel %vm1101, %v1076, 0.0
        %1110 = vrot.lane.b32.xlu0 %v527, 15
        %v1111 = vpop.permute.xlu0 %1110
        %1112 = vrot.lane.b32.xlu0 %v528, 15
        %v1113 = vpop.permute.xlu0 %1112
        %1114 = vrot.lane.b32.xlu0 %v529, 15
        %v1115 = vpop.permute.xlu0 %1114
        %1116 = vrot.lane.b32.xlu0 %v530, 15
        %v1117 = vpop.permute.xlu0 %1116
        %1118 = vrot.lane.b32.xlu0 %v531, 15
        %v1119 = vpop.permute.xlu0 %1118
        %1120 = vrot.lane.b32.xlu0 %v532, 15
        %v1121 = vpop.permute.xlu0 %1120
        %1122 = vrot.lane.b32.xlu0 %v533, 15
        %v1123 = vpop.permute.xlu0 %1122
        %1124 = vrot.lane.b32.xlu0 %v534, 15
        %v1125 = vpop.permute.xlu0 %1124
        %vm1126 = vcmask 121856
        %v1127 = vsel %vm1126, %v1111, %v1113
        %v1128 = vsel %vm1126, %v1113, %v1115
        %v1129 = vsel %vm1126, %v1115, %v1117
        %v1130 = vsel %vm1126, %v1117, %v1119
        %v1131 = vsel %vm1126, %v1119, %v1121
        %v1132 = vsel %vm1126, %v1121, %v1123
        %v1133 = vsel %vm1126, %v1123, %v1125
        %v1142 = vsel %vm1126, 0.0, %v1111
        %v1143 = vsel %vm932, 1, 0
        %v1144 = vsel %vm933, 1, 0
        %v1145 = vsel %vm934, 1, 0
        %v1146 = vsel %vm935, 1, 0
        %v1147 = vsel %vm936, 1, 0
        %v1148 = vsel %vm937, 1, 0
        %v1149 = vsel %vm938, 1, 0
        %v1150 = vsel %vm939, 1, 0
        %vm1151 = vcmp.eq.s32.totalorder %v1143, 1
        %vm1152 = vcmp.eq.s32.totalorder %v1144, 1
        %vm1153 = vcmp.eq.s32.totalorder %v1145, 1
        %vm1154 = vcmp.eq.s32.totalorder %v1146, 1
        %vm1155 = vcmp.eq.s32.totalorder %v1147, 1
        %vm1156 = vcmp.eq.s32.totalorder %v1148, 1
        %vm1157 = vcmp.eq.s32.totalorder %v1149, 1
        %vm1158 = vcmp.eq.s32.totalorder %v1150, 1
        %v1159 = vsel %vm1151, %v1142, 0.0
        %v1160 = vsel %vm1152, %v1127, 0.0
        %v1161 = vsel %vm1153, %v1128, 0.0
        %v1162 = vsel %vm1154, %v1129, 0.0
        %v1163 = vsel %vm1155, %v1130, 0.0
        %v1164 = vsel %vm1156, %v1131, 0.0
        %v1165 = vsel %vm1157, %v1132, 0.0
        %v1166 = vsel %vm1158, %v1133, 0.0
        %1167 = vrot.lane.b32.xlu0 %v527, 1
        %v1168 = vpop.permute.xlu0 %1167
        %1169 = vrot.lane.b32.xlu0 %v528, 1
        %v1170 = vpop.permute.xlu0 %1169
        %1171 = vrot.lane.b32.xlu0 %v529, 1
        %v1172 = vpop.permute.xlu0 %1171
        %1173 = vrot.lane.b32.xlu0 %v530, 1
        %v1174 = vpop.permute.xlu0 %1173
        %1175 = vrot.lane.b32.xlu0 %v531, 1
        %v1176 = vpop.permute.xlu0 %1175
        %1177 = vrot.lane.b32.xlu0 %v532, 1
        %v1178 = vpop.permute.xlu0 %1177
        %1179 = vrot.lane.b32.xlu0 %v533, 1
        %v1180 = vpop.permute.xlu0 %1179
        %1181 = vrot.lane.b32.xlu0 %v534, 1
        %v1182 = vpop.permute.xlu0 %1181
        %vm1183 = vcmask 7168
        %v1184 = vsel %vm1183, %v1168, %v1170
        %v1185 = vsel %vm1183, %v1170, %v1172
        %v1186 = vsel %vm1183, %v1172, %v1174
        %v1187 = vsel %vm1183, %v1174, %v1176
        %v1188 = vsel %vm1183, %v1176, %v1178
        %v1189 = vsel %vm1183, %v1178, %v1180
        %v1190 = vsel %vm1183, %v1180, %v1182
        %v1199 = vsel %vm1183, 0.0, %v1168
        %v1200 = vsel %vm884, 1, 0
        %v1201 = vsel %vm885, 1, 0
        %v1202 = vsel %vm886, 1, 0
        %v1203 = vsel %vm887, 1, 0
        %v1204 = vsel %vm888, 1, 0
        %v1205 = vsel %vm889, 1, 0
        %v1206 = vsel %vm890, 1, 0
        %v1207 = vsel %vm891, 1, 0
        %vm1208 = vcmp.eq.s32.totalorder %v1200, 1
        %vm1209 = vcmp.eq.s32.totalorder %v1201, 1
        %vm1210 = vcmp.eq.s32.totalorder %v1202, 1
        %vm1211 = vcmp.eq.s32.totalorder %v1203, 1
        %vm1212 = vcmp.eq.s32.totalorder %v1204, 1
        %vm1213 = vcmp.eq.s32.totalorder %v1205, 1
        %vm1214 = vcmp.eq.s32.totalorder %v1206, 1
        %vm1215 = vcmp.eq.s32.totalorder %v1207, 1
        %v1216 = vsel %vm1208, %v1199, 0.0
        %v1217 = vsel %vm1209, %v1184, 0.0
        %v1218 = vsel %vm1210, %v1185, 0.0
        %v1219 = vsel %vm1211, %v1186, 0.0
        %v1220 = vsel %vm1212, %v1187, 0.0
        %v1221 = vsel %vm1213, %v1188, 0.0
        %v1222 = vsel %vm1214, %v1189, 0.0
        %v1223 = vsel %vm1215, %v1190, 0.0
        %1224 = vrot.lane.b32.xlu0 %v527, 127
        %v1225 = vpop.permute.xlu0 %1224
        %1226 = vrot.lane.b32.xlu0 %v528, 127
        %v1227 = vpop.permute.xlu0 %1226
        %1228 = vrot.lane.b32.xlu0 %v529, 127
        %v1229 = vpop.permute.xlu0 %1228
        %1230 = vrot.lane.b32.xlu0 %v530, 127
        %v1231 = vpop.permute.xlu0 %1230
        %1232 = vrot.lane.b32.xlu0 %v531, 127
        %v1233 = vpop.permute.xlu0 %1232
        %1234 = vrot.lane.b32.xlu0 %v532, 127
        %v1235 = vpop.permute.xlu0 %1234
        %1236 = vrot.lane.b32.xlu0 %v533, 127
        %v1237 = vpop.permute.xlu0 %1236
        %1238 = vrot.lane.b32.xlu0 %v534, 127
        %v1239 = vpop.permute.xlu0 %1238
        %vm1240 = vcmask 1039360
        %v1241 = vsel %vm1240, %v1225, %v1227
        %v1242 = vsel %vm1240, %v1227, %v1229
        %v1243 = vsel %vm1240, %v1229, %v1231
        %v1244 = vsel %vm1240, %v1231, %v1233
        %v1245 = vsel %vm1240, %v1233, %v1235
        %v1246 = vsel %vm1240, %v1235, %v1237
        %v1247 = vsel %vm1240, %v1237, %v1239
        %v1256 = vsel %vm1240, %v1239, 0.0
        %v1257 = vsel %vm924, 1, 0
        %v1258 = vsel %vm925, 1, 0
        %v1259 = vsel %vm926, 1, 0
        %v1260 = vsel %vm927, 1, 0
        %v1261 = vsel %vm928, 1, 0
        %v1262 = vsel %vm929, 1, 0
        %v1263 = vsel %vm930, 1, 0
        %v1264 = vsel %vm931, 1, 0
        %vm1265 = vcmp.eq.s32.totalorder %v1257, 1
        %vm1266 = vcmp.eq.s32.totalorder %v1258, 1
        %vm1267 = vcmp.eq.s32.totalorder %v1259, 1
        %vm1268 = vcmp.eq.s32.totalorder %v1260, 1
        %vm1269 = vcmp.eq.s32.totalorder %v1261, 1
        %vm1270 = vcmp.eq.s32.totalorder %v1262, 1
        %vm1271 = vcmp.eq.s32.totalorder %v1263, 1
        %vm1272 = vcmp.eq.s32.totalorder %v1264, 1
        %v1273 = vsel %vm1265, %v1241, 0.0
        %v1274 = vsel %vm1266, %v1242, 0.0
        %v1275 = vsel %vm1267, %v1243, 0.0
        %v1276 = vsel %vm1268, %v1244, 0.0
        %v1277 = vsel %vm1269, %v1245, 0.0
        %v1278 = vsel %vm1270, %v1246, 0.0
        %v1279 = vsel %vm1271, %v1247, 0.0
        %v1280 = vsel %vm1272, %v1256, 0.0
        %1281 = vrot.lane.b32.xlu0 %v527, 113
        %v1282 = vpop.permute.xlu0 %1281
        %1283 = vrot.lane.b32.xlu0 %v528, 113
        %v1284 = vpop.permute.xlu0 %1283
        %1285 = vrot.lane.b32.xlu0 %v529, 113
        %v1286 = vpop.permute.xlu0 %1285
        %1287 = vrot.lane.b32.xlu0 %v530, 113
        %v1288 = vpop.permute.xlu0 %1287
        %1289 = vrot.lane.b32.xlu0 %v531, 113
        %v1290 = vpop.permute.xlu0 %1289
        %1291 = vrot.lane.b32.xlu0 %v532, 113
        %v1292 = vpop.permute.xlu0 %1291
        %1293 = vrot.lane.b32.xlu0 %v533, 113
        %v1294 = vpop.permute.xlu0 %1293
        %1295 = vrot.lane.b32.xlu0 %v534, 113
        %v1296 = vpop.permute.xlu0 %1295
        %vm1297 = vcmask 924672
        %v1298 = vsel %vm1297, %v1282, %v1284
        %v1299 = vsel %vm1297, %v1284, %v1286
        %v1300 = vsel %vm1297, %v1286, %v1288
        %v1301 = vsel %vm1297, %v1288, %v1290
        %v1302 = vsel %vm1297, %v1290, %v1292
        %v1303 = vsel %vm1297, %v1292, %v1294
        %v1304 = vsel %vm1297, %v1294, %v1296
        %v1313 = vsel %vm1297, %v1296, 0.0
        %v1314 = vsel %vm972, 1, 0
        %v1315 = vsel %vm973, 1, 0
        %v1316 = vsel %vm974, 1, 0
        %v1317 = vsel %vm975, 1, 0
        %v1318 = vsel %vm976, 1, 0
        %v1319 = vsel %vm977, 1, 0
        %v1320 = vsel %vm978, 1, 0
        %v1321 = vsel %vm979, 1, 0
        %vm1322 = vcmp.eq.s32.totalorder %v1314, 1
        %vm1323 = vcmp.eq.s32.totalorder %v1315, 1
        %vm1324 = vcmp.eq.s32.totalorder %v1316, 1
        %vm1325 = vcmp.eq.s32.totalorder %v1317, 1
        %vm1326 = vcmp.eq.s32.totalorder %v1318, 1
        %vm1327 = vcmp.eq.s32.totalorder %v1319, 1
        %vm1328 = vcmp.eq.s32.totalorder %v1320, 1
        %vm1329 = vcmp.eq.s32.totalorder %v1321, 1
        %v1330 = vsel %vm1322, %v1298, 0.0
        %v1331 = vsel %vm1323, %v1299, 0.0
        %v1332 = vsel %vm1324, %v1300, 0.0
        %v1333 = vsel %vm1325, %v1301, 0.0
        %v1334 = vsel %vm1326, %v1302, 0.0
        %v1335 = vsel %vm1327, %v1303, 0.0
        %v1336 = vsel %vm1328, %v1304, 0.0
        %v1337 = vsel %vm1329, %v1313, 0.0
        %1338 = vrot.lane.b32.xlu0 %v527, 112
        %v1339 = vpop.permute.xlu0 %1338
        %1340 = vrot.lane.b32.xlu0 %v528, 112
        %v1341 = vpop.permute.xlu0 %1340
        %1342 = vrot.lane.b32.xlu0 %v529, 112
        %v1343 = vpop.permute.xlu0 %1342
        %1344 = vrot.lane.b32.xlu0 %v530, 112
        %v1345 = vpop.permute.xlu0 %1344
        %1346 = vrot.lane.b32.xlu0 %v531, 112
        %v1347 = vpop.permute.xlu0 %1346
        %1348 = vrot.lane.b32.xlu0 %v532, 112
        %v1349 = vpop.permute.xlu0 %1348
        %1350 = vrot.lane.b32.xlu0 %v533, 112
        %v1351 = vpop.permute.xlu0 %1350
        %1352 = vrot.lane.b32.xlu0 %v534, 112
        %v1353 = vpop.permute.xlu0 %1352
        %vm1354 = vcmask 916480
        %v1355 = vsel %vm1354, %v1339, %v1341
        %v1356 = vsel %vm1354, %v1341, %v1343
        %v1357 = vsel %vm1354, %v1343, %v1345
        %v1358 = vsel %vm1354, %v1345, %v1347
        %v1359 = vsel %vm1354, %v1347, %v1349
        %v1360 = vsel %vm1354, %v1349, %v1351
        %v1361 = vsel %vm1354, %v1351, %v1353
        %v1370 = vsel %vm1354, %v1353, 0.0
        %v1371 = vsel %vm964, 1, 0
        %v1372 = vsel %vm965, 1, 0
        %v1373 = vsel %vm966, 1, 0
        %v1374 = vsel %vm967, 1, 0
        %v1375 = vsel %vm968, 1, 0
        %v1376 = vsel %vm969, 1, 0
        %v1377 = vsel %vm970, 1, 0
        %v1378 = vsel %vm971, 1, 0
        %vm1379 = vcmp.eq.s32.totalorder %v1371, 1
        %vm1380 = vcmp.eq.s32.totalorder %v1372, 1
        %vm1381 = vcmp.eq.s32.totalorder %v1373, 1
        %vm1382 = vcmp.eq.s32.totalorder %v1374, 1
        %vm1383 = vcmp.eq.s32.totalorder %v1375, 1
        %vm1384 = vcmp.eq.s32.totalorder %v1376, 1
        %vm1385 = vcmp.eq.s32.totalorder %v1377, 1
        %vm1386 = vcmp.eq.s32.totalorder %v1378, 1
        %v1387 = vsel %vm1379, %v1355, 0.0
        %v1388 = vsel %vm1380, %v1356, 0.0
        %v1389 = vsel %vm1381, %v1357, 0.0
        %v1390 = vsel %vm1382, %v1358, 0.0
        %v1391 = vsel %vm1383, %v1359, 0.0
        %v1392 = vsel %vm1384, %v1360, 0.0
        %v1393 = vsel %vm1385, %v1361, 0.0
        %v1394 = vsel %vm1386, %v1370, 0.0
        %1395 = vrot.lane.b32.xlu0 %v527, 111
        %v1396 = vpop.permute.xlu0 %1395
        %1397 = vrot.lane.b32.xlu0 %v528, 111
        %v1398 = vpop.permute.xlu0 %1397
        %1399 = vrot.lane.b32.xlu0 %v529, 111
        %v1400 = vpop.permute.xlu0 %1399
        %1401 = vrot.lane.b32.xlu0 %v530, 111
        %v1402 = vpop.permute.xlu0 %1401
        %1403 = vrot.lane.b32.xlu0 %v531, 111
        %v1404 = vpop.permute.xlu0 %1403
        %1405 = vrot.lane.b32.xlu0 %v532, 111
        %v1406 = vpop.permute.xlu0 %1405
        %1407 = vrot.lane.b32.xlu0 %v533, 111
        %v1408 = vpop.permute.xlu0 %1407
        %1409 = vrot.lane.b32.xlu0 %v534, 111
        %v1410 = vpop.permute.xlu0 %1409
        %vm1411 = vcmask 908288
        %v1412 = vsel %vm1411, %v1396, %v1398
        %v1413 = vsel %vm1411, %v1398, %v1400
        %v1414 = vsel %vm1411, %v1400, %v1402
        %v1415 = vsel %vm1411, %v1402, %v1404
        %v1416 = vsel %vm1411, %v1404, %v1406
        %v1417 = vsel %vm1411, %v1406, %v1408
        %v1418 = vsel %vm1411, %v1408, %v1410
        %v1427 = vsel %vm1411, %v1410, 0.0
        %v1428 = vsel %vm980, 1, 0
        %v1429 = vsel %vm981, 1, 0
        %v1430 = vsel %vm982, 1, 0
        %v1431 = vsel %vm983, 1, 0
        %v1432 = vsel %vm984, 1, 0
        %v1433 = vsel %vm985, 1, 0
        %v1434 = vsel %vm986, 1, 0
        %v1435 = vsel %vm987, 1, 0
        %vm1436 = vcmp.eq.s32.totalorder %v1428, 1
        %vm1437 = vcmp.eq.s32.totalorder %v1429, 1
        %vm1438 = vcmp.eq.s32.totalorder %v1430, 1
        %vm1439 = vcmp.eq.s32.totalorder %v1431, 1
        %vm1440 = vcmp.eq.s32.totalorder %v1432, 1
        %vm1441 = vcmp.eq.s32.totalorder %v1433, 1
        %vm1442 = vcmp.eq.s32.totalorder %v1434, 1
        %vm1443 = vcmp.eq.s32.totalorder %v1435, 1
        %v1444 = vsel %vm1436, %v1412, 0.0
        %v1445 = vsel %vm1437, %v1413, 0.0
        %v1446 = vsel %vm1438, %v1414, 0.0
        %v1447 = vsel %vm1439, %v1415, 0.0
        %v1448 = vsel %vm1440, %v1416, 0.0
        %v1449 = vsel %vm1441, %v1417, 0.0
        %v1450 = vsel %vm1442, %v1418, 0.0
        %v1451 = vsel %vm1443, %v1427, 0.0
        %1453 = vset.pattern.permute.xlu0 0
        %1454 = vperm.xlu0 %1453, %v536
        %v1455 = vpop.permute.xlu0 %1454
        %vm1457 = vcmask 588800
        %v1459 = vsel %vm1457, %v535, 0
        %1461 = vmatpush.msra.mxu0 0.0
        %1462 = vmatpush.msra.mxu0 0.0
        %1463 = vmatpush.msra.mxu0 0.0
        %1464 = vmatpush.msra.mxu0 0.0
        %1465 = vmatpush.msra.mxu0 0.0
        %1466 = vmatpush.msra.mxu0 0.0
        %1467 = vmatpush.msra.mxu0 0.0
        %1468 = vmatpush.msra.mxu0 %v1444
        %1469 = vmatpush.msra.mxu0 %v1387
        %1470 = vmatpush.msra.mxu0 %v1330
        %1471 = vmatpush.msra.mxu0 %v1273
        %1472 = vmatpush.msra.mxu0 %v527
        %1473 = vmatpush.msra.mxu0 %v1216
        %1474 = vmatpush.msra.mxu0 %v1159
        %1475 = vmatpush.msra.mxu0 %v1102
        %1476 = vmatpush.msra.mxu0 %v1045
        %1477 = vmatmul.f32.gmra.mxu0 %v1459
        %v1478 = vpop.f32.mrf.mxu0
        %v1479 = vadd.f32 %v1455, %v1478
        %1480 = vdwg.mxu0
        %1481 = vmatpush.msra.mxu0 0.0
        %1482 = vmatpush.msra.mxu0 0.0
        %1483 = vmatpush.msra.mxu0 0.0
        %1484 = vmatpush.msra.mxu0 0.0
        %1485 = vmatpush.msra.mxu0 0.0
        %1486 = vmatpush.msra.mxu0 0.0
        %1487 = vmatpush.msra.mxu0 0.0
        %1488 = vmatpush.msra.mxu0 %v1445
        %1489 = vmatpush.msra.mxu0 %v1388
        %1490 = vmatpush.msra.mxu0 %v1331
        %1491 = vmatpush.msra.mxu0 %v1274
        %1492 = vmatpush.msra.mxu0 %v528
        %1493 = vmatpush.msra.mxu0 %v1217
        %1494 = vmatpush.msra.mxu0 %v1160
        %1495 = vmatpush.msra.mxu0 %v1103
        %1496 = vmatpush.msra.mxu0 %v1046
        %1497 = vmatmul.f32.gmra.mxu0 %v1459
        %v1498 = vpop.f32.mrf.mxu0
        %v1499 = vadd.f32 %v1455, %v1498
        %1500 = vdwg.mxu0
        %1501 = vmatpush.msra.mxu0 0.0
        %1502 = vmatpush.msra.mxu0 0.0
        %1503 = vmatpush.msra.mxu0 0.0
        %1504 = vmatpush.msra.mxu0 0.0
        %1505 = vmatpush.msra.mxu0 0.0
        %1506 = vmatpush.msra.mxu0 0.0
        %1507 = vmatpush.msra.mxu0 0.0
        %1508 = vmatpush.msra.mxu0 %v1446
        %1509 = vmatpush.msra.mxu0 %v1389
        %1510 = vmatpush.msra.mxu0 %v1332
        %1511 = vmatpush.msra.mxu0 %v1275
        %1512 = vmatpush.msra.mxu0 %v529
        %1513 = vmatpush.msra.mxu0 %v1218
        %1514 = vmatpush.msra.mxu0 %v1161
        %1515 = vmatpush.msra.mxu0 %v1104
        %1516 = vmatpush.msra.mxu0 %v1047
        %1517 = vmatmul.f32.gmra.mxu0 %v1459
        %v1518 = vpop.f32.mrf.mxu0
        %v1519 = vadd.f32 %v1455, %v1518
        %1520 = vdwg.mxu0
        %1521 = vmatpush.msra.mxu0 0.0
        %1522 = vmatpush.msra.mxu0 0.0
        %1523 = vmatpush.msra.mxu0 0.0
        %1524 = vmatpush.msra.mxu0 0.0
        %1525 = vmatpush.msra.mxu0 0.0
        %1526 = vmatpush.msra.mxu0 0.0
        %1527 = vmatpush.msra.mxu0 0.0
        %1528 = vmatpush.msra.mxu0 %v1447
        %1529 = vmatpush.msra.mxu0 %v1390
        %1530 = vmatpush.msra.mxu0 %v1333
        %1531 = vmatpush.msra.mxu0 %v1276
        %1532 = vmatpush.msra.mxu0 %v530
        %1533 = vmatpush.msra.mxu0 %v1219
        %1534 = vmatpush.msra.mxu0 %v1162
        %1535 = vmatpush.msra.mxu0 %v1105
        %1536 = vmatpush.msra.mxu0 %v1048
        %1537 = vmatmul.f32.gmra.mxu0 %v1459
        %v1538 = vpop.f32.mrf.mxu0
        %v1539 = vadd.f32 %v1455, %v1538
        %1540 = vdwg.mxu0
        %1541 = vmatpush.msra.mxu0 0.0
        %1542 = vmatpush.msra.mxu0 0.0
        %1543 = vmatpush.msra.mxu0 0.0
        %1544 = vmatpush.msra.mxu0 0.0
        %1545 = vmatpush.msra.mxu0 0.0
        %1546 = vmatpush.msra.mxu0 0.0
        %1547 = vmatpush.msra.mxu0 0.0
        %1548 = vmatpush.msra.mxu0 %v1448
        %1549 = vmatpush.msra.mxu0 %v1391
        %1550 = vmatpush.msra.mxu0 %v1334
        %1551 = vmatpush.msra.mxu0 %v1277
        %1552 = vmatpush.msra.mxu0 %v531
        %1553 = vmatpush.msra.mxu0 %v1220
        %1554 = vmatpush.msra.mxu0 %v1163
        %1555 = vmatpush.msra.mxu0 %v1106
        %1556 = vmatpush.msra.mxu0 %v1049
        %1557 = vmatmul.f32.gmra.mxu0 %v1459
        %v1558 = vpop.f32.mrf.mxu0
        %v1559 = vadd.f32 %v1455, %v1558
        %1560 = vdwg.mxu0
        %1561 = vmatpush.msra.mxu0 0.0
        %1562 = vmatpush.msra.mxu0 0.0
        %1563 = vmatpush.msra.mxu0 0.0
        %1564 = vmatpush.msra.mxu0 0.0
        %1565 = vmatpush.msra.mxu0 0.0
        %1566 = vmatpush.msra.mxu0 0.0
        %1567 = vmatpush.msra.mxu0 0.0
        %1568 = vmatpush.msra.mxu0 %v1449
        %1569 = vmatpush.msra.mxu0 %v1392
        %1570 = vmatpush.msra.mxu0 %v1335
        %1571 = vmatpush.msra.mxu0 %v1278
        %1572 = vmatpush.msra.mxu0 %v532
        %1573 = vmatpush.msra.mxu0 %v1221
        %1574 = vmatpush.msra.mxu0 %v1164
        %1575 = vmatpush.msra.mxu0 %v1107
        %1576 = vmatpush.msra.mxu0 %v1050
        %1577 = vmatmul.f32.gmra.mxu0 %v1459
        %v1578 = vpop.f32.mrf.mxu0
        %v1579 = vadd.f32 %v1455, %v1578
        %1580 = vdwg.mxu0
        %1581 = vmatpush.msra.mxu0 0.0
        %1582 = vmatpush.msra.mxu0 0.0
        %1583 = vmatpush.msra.mxu0 0.0
        %1584 = vmatpush.msra.mxu0 0.0
        %1585 = vmatpush.msra.mxu0 0.0
        %1586 = vmatpush.msra.mxu0 0.0
        %1587 = vmatpush.msra.mxu0 0.0
        %1588 = vmatpush.msra.mxu0 %v1450
        %1589 = vmatpush.msra.mxu0 %v1393
        %1590 = vmatpush.msra.mxu0 %v1336
        %1591 = vmatpush.msra.mxu0 %v1279
        %1592 = vmatpush.msra.mxu0 %v533
        %1593 = vmatpush.msra.mxu0 %v1222
        %1594 = vmatpush.msra.mxu0 %v1165
        %1595 = vmatpush.msra.mxu0 %v1108
        %1596 = vmatpush.msra.mxu0 %v1051
        %1597 = vmatmul.f32.gmra.mxu0 %v1459
        %v1598 = vpop.f32.mrf.mxu0
        %v1599 = vadd.f32 %v1455, %v1598
        %1600 = vdwg.mxu0
        %1601 = vmatpush.msra.mxu0 0.0
        %1602 = vmatpush.msra.mxu0 0.0
        %1603 = vmatpush.msra.mxu0 0.0
        %1604 = vmatpush.msra.mxu0 0.0
        %1605 = vmatpush.msra.mxu0 0.0
        %1606 = vmatpush.msra.mxu0 0.0
        %1607 = vmatpush.msra.mxu0 0.0
        %1608 = vmatpush.msra.mxu0 %v1451
        %1609 = vmatpush.msra.mxu0 %v1394
        %1610 = vmatpush.msra.mxu0 %v1337
        %1611 = vmatpush.msra.mxu0 %v1280
        %1612 = vmatpush.msra.mxu0 %v534
        %1613 = vmatpush.msra.mxu0 %v1223
        %1614 = vmatpush.msra.mxu0 %v1166
        %1615 = vmatpush.msra.mxu0 %v1109
        %1616 = vmatpush.msra.mxu0 %v1052
        %1617 = vmatmul.f32.gmra.mxu0 %v1459
        %v1618 = vpop.f32.mrf.mxu0
        %v1619 = vadd.f32 %v1455, %v1618
        %1620 = vdwg.mxu0
        %v1621 = vmax.f32 %v1479, 0.0
        %v1622 = vmax.f32 %v1499, 0.0
        %v1623 = vmax.f32 %v1519, 0.0
        %v1624 = vmax.f32 %v1539, 0.0
        %v1625 = vmax.f32 %v1559, 0.0
        %v1626 = vmax.f32 %v1579, 0.0
        %v1627 = vmax.f32 %v1599, 0.0
        %v1628 = vmax.f32 %v1619, 0.0
        %1637 = vrot.lane.b32.xlu0 %v1621, 17
        %v1638 = vpop.permute.xlu0 %1637
        %1639 = vrot.lane.b32.xlu0 %v1622, 17
        %v1640 = vpop.permute.xlu0 %1639
        %1641 = vrot.lane.b32.xlu0 %v1623, 17
        %v1642 = vpop.permute.xlu0 %1641
        %1643 = vrot.lane.b32.xlu0 %v1624, 17
        %v1644 = vpop.permute.xlu0 %1643
        %1645 = vrot.lane.b32.xlu0 %v1625, 17
        %v1646 = vpop.permute.xlu0 %1645
        %1647 = vrot.lane.b32.xlu0 %v1626, 17
        %v1648 = vpop.permute.xlu0 %1647
        %1649 = vrot.lane.b32.xlu0 %v1627, 17
        %v1650 = vpop.permute.xlu0 %1649
        %1651 = vrot.lane.b32.xlu0 %v1628, 17
        %v1652 = vpop.permute.xlu0 %1651
        %v1653 = vsel %vm1012, %v1638, %v1640
        %v1654 = vsel %vm1012, %v1640, %v1642
        %v1655 = vsel %vm1012, %v1642, %v1644
        %v1656 = vsel %vm1012, %v1644, %v1646
        %v1657 = vsel %vm1012, %v1646, %v1648
        %v1658 = vsel %vm1012, %v1648, %v1650
        %v1659 = vsel %vm1012, %v1650, %v1652
        %v1668 = vsel %vm1012, 0.0, %v1638
        %v1669 = vsel %vm1037, %v1668, 0.0
        %v1670 = vsel %vm1038, %v1653, 0.0
        %v1671 = vsel %vm1039, %v1654, 0.0
        %v1672 = vsel %vm1040, %v1655, 0.0
        %v1673 = vsel %vm1041, %v1656, 0.0
        %v1674 = vsel %vm1042, %v1657, 0.0
        %v1675 = vsel %vm1043, %v1658, 0.0
        %v1676 = vsel %vm1044, %v1659, 0.0
        %1677 = vrot.lane.b32.xlu0 %v1621, 16
        %v1678 = vpop.permute.xlu0 %1677
        %1679 = vrot.lane.b32.xlu0 %v1622, 16
        %v1680 = vpop.permute.xlu0 %1679
        %1681 = vrot.lane.b32.xlu0 %v1623, 16
        %v1682 = vpop.permute.xlu0 %1681
        %1683 = vrot.lane.b32.xlu0 %v1624, 16
        %v1684 = vpop.permute.xlu0 %1683
        %1685 = vrot.lane.b32.xlu0 %v1625, 16
        %v1686 = vpop.permute.xlu0 %1685
        %1687 = vrot.lane.b32.xlu0 %v1626, 16
        %v1688 = vpop.permute.xlu0 %1687
        %1689 = vrot.lane.b32.xlu0 %v1627, 16
        %v1690 = vpop.permute.xlu0 %1689
        %1691 = vrot.lane.b32.xlu0 %v1628, 16
        %v1692 = vpop.permute.xlu0 %1691
        %v1693 = vsel %vm1069, %v1678, %v1680
        %v1694 = vsel %vm1069, %v1680, %v1682
        %v1695 = vsel %vm1069, %v1682, %v1684
        %v1696 = vsel %vm1069, %v1684, %v1686
        %v1697 = vsel %vm1069, %v1686, %v1688
        %v1698 = vsel %vm1069, %v1688, %v1690
        %v1699 = vsel %vm1069, %v1690, %v1692
        %v1708 = vsel %vm1069, 0.0, %v1678
        %v1709 = vsel %vm1094, %v1708, 0.0
        %v1710 = vsel %vm1095, %v1693, 0.0
        %v1711 = vsel %vm1096, %v1694, 0.0
        %v1712 = vsel %vm1097, %v1695, 0.0
        %v1713 = vsel %vm1098, %v1696, 0.0
        %v1714 = vsel %vm1099, %v1697, 0.0
        %v1715 = vsel %vm1100, %v1698, 0.0
        %v1716 = vsel %vm1101, %v1699, 0.0
        %1717 = vrot.lane.b32.xlu0 %v1621, 15
        %v1718 = vpop.permute.xlu0 %1717
        %1719 = vrot.lane.b32.xlu0 %v1622, 15
        %v1720 = vpop.permute.xlu0 %1719
        %1721 = vrot.lane.b32.xlu0 %v1623, 15
        %v1722 = vpop.permute.xlu0 %1721
        %1723 = vrot.lane.b32.xlu0 %v1624, 15
        %v1724 = vpop.permute.xlu0 %1723
        %1725 = vrot.lane.b32.xlu0 %v1625, 15
        %v1726 = vpop.permute.xlu0 %1725
        %1727 = vrot.lane.b32.xlu0 %v1626, 15
        %v1728 = vpop.permute.xlu0 %1727
        %1729 = vrot.lane.b32.xlu0 %v1627, 15
        %v1730 = vpop.permute.xlu0 %1729
        %1731 = vrot.lane.b32.xlu0 %v1628, 15
        %v1732 = vpop.permute.xlu0 %1731
        %v1733 = vsel %vm1126, %v1718, %v1720
        %v1734 = vsel %vm1126, %v1720, %v1722
        %v1735 = vsel %vm1126, %v1722, %v1724
        %v1736 = vsel %vm1126, %v1724, %v1726
        %v1737 = vsel %vm1126, %v1726, %v1728
        %v1738 = vsel %vm1126, %v1728, %v1730
        %v1739 = vsel %vm1126, %v1730, %v1732
        %v1748 = vsel %vm1126, 0.0, %v1718
        %v1749 = vsel %vm1151, %v1748, 0.0
        %v1750 = vsel %vm1152, %v1733, 0.0
        %v1751 = vsel %vm1153, %v1734, 0.0
        %v1752 = vsel %vm1154, %v1735, 0.0
        %v1753 = vsel %vm1155, %v1736, 0.0
        %v1754 = vsel %vm1156, %v1737, 0.0
        %v1755 = vsel %vm1157, %v1738, 0.0
        %v1756 = vsel %vm1158, %v1739, 0.0
        %1757 = vrot.lane.b32.xlu0 %v1621, 1
        %v1758 = vpop.permute.xlu0 %1757
        %1759 = vrot.lane.b32.xlu0 %v1622, 1
        %v1760 = vpop.permute.xlu0 %1759
        %1761 = vrot.lane.b32.xlu0 %v1623, 1
        %v1762 = vpop.permute.xlu0 %1761
        %1763 = vrot.lane.b32.xlu0 %v1624, 1
        %v1764 = vpop.permute.xlu0 %1763
        %1765 = vrot.lane.b32.xlu0 %v1625, 1
        %v1766 = vpop.permute.xlu0 %1765
        %1767 = vrot.lane.b32.xlu0 %v1626, 1
        %v1768 = vpop.permute.xlu0 %1767
        %1769 = vrot.lane.b32.xlu0 %v1627, 1
        %v1770 = vpop.permute.xlu0 %1769
        %1771 = vrot.lane.b32.xlu0 %v1628, 1
        %v1772 = vpop.permute.xlu0 %1771
        %v1773 = vsel %vm1183, %v1758, %v1760
        %v1774 = vsel %vm1183, %v1760, %v1762
        %v1775 = vsel %vm1183, %v1762, %v1764
        %v1776 = vsel %vm1183, %v1764, %v1766
        %v1777 = vsel %vm1183, %v1766, %v1768
        %v1778 = vsel %vm1183, %v1768, %v1770
        %v1779 = vsel %vm1183, %v1770, %v1772
        %v1788 = vsel %vm1183, 0.0, %v1758
        %v1789 = vsel %vm1208, %v1788, 0.0
        %v1790 = vsel %vm1209, %v1773, 0.0
        %v1791 = vsel %vm1210, %v1774, 0.0
        %v1792 = vsel %vm1211, %v1775, 0.0
        %v1793 = vsel %vm1212, %v1776, 0.0
        %v1794 = vsel %vm1213, %v1777, 0.0
        %v1795 = vsel %vm1214, %v1778, 0.0
        %v1796 = vsel %vm1215, %v1779, 0.0
        %1797 = vrot.lane.b32.xlu0 %v1621, 127
        %v1798 = vpop.permute.xlu0 %1797
        %1799 = vrot.lane.b32.xlu0 %v1622, 127
        %v1800 = vpop.permute.xlu0 %1799
        %1801 = vrot.lane.b32.xlu0 %v1623, 127
        %v1802 = vpop.permute.xlu0 %1801
        %1803 = vrot.lane.b32.xlu0 %v1624, 127
        %v1804 = vpop.permute.xlu0 %1803
        %1805 = vrot.lane.b32.xlu0 %v1625, 127
        %v1806 = vpop.permute.xlu0 %1805
        %1807 = vrot.lane.b32.xlu0 %v1626, 127
        %v1808 = vpop.permute.xlu0 %1807
        %1809 = vrot.lane.b32.xlu0 %v1627, 127
        %v1810 = vpop.permute.xlu0 %1809
        %1811 = vrot.lane.b32.xlu0 %v1628, 127
        %v1812 = vpop.permute.xlu0 %1811
        %v1813 = vsel %vm1240, %v1798, %v1800
        %v1814 = vsel %vm1240, %v1800, %v1802
        %v1815 = vsel %vm1240, %v1802, %v1804
        %v1816 = vsel %vm1240, %v1804, %v1806
        %v1817 = vsel %vm1240, %v1806, %v1808
        %v1818 = vsel %vm1240, %v1808, %v1810
        %v1819 = vsel %vm1240, %v1810, %v1812
        %v1828 = vsel %vm1240, %v1812, 0.0
        %v1829 = vsel %vm1265, %v1813, 0.0
        %v1830 = vsel %vm1266, %v1814, 0.0
        %v1831 = vsel %vm1267, %v1815, 0.0
        %v1832 = vsel %vm1268, %v1816, 0.0
        %v1833 = vsel %vm1269, %v1817, 0.0
        %v1834 = vsel %vm1270, %v1818, 0.0
        %v1835 = vsel %vm1271, %v1819, 0.0
        %v1836 = vsel %vm1272, %v1828, 0.0
        %1837 = vrot.lane.b32.xlu0 %v1621, 113
        %v1838 = vpop.permute.xlu0 %1837
        %1839 = vrot.lane.b32.xlu0 %v1622, 113
        %v1840 = vpop.permute.xlu0 %1839
        %1841 = vrot.lane.b32.xlu0 %v1623, 113
        %v1842 = vpop.permute.xlu0 %1841
        %1843 = vrot.lane.b32.xlu0 %v1624, 113
        %v1844 = vpop.permute.xlu0 %1843
        %1845 = vrot.lane.b32.xlu0 %v1625, 113
        %v1846 = vpop.permute.xlu0 %1845
        %1847 = vrot.lane.b32.xlu0 %v1626, 113
        %v1848 = vpop.permute.xlu0 %1847
        %1849 = vrot.lane.b32.xlu0 %v1627, 113
        %v1850 = vpop.permute.xlu0 %1849
        %1851 = vrot.lane.b32.xlu0 %v1628, 113
        %v1852 = vpop.permute.xlu0 %1851
        %v1853 = vsel %vm1297, %v1838, %v1840
        %v1854 = vsel %vm1297, %v1840, %v1842
        %v1855 = vsel %vm1297, %v1842, %v1844
        %v1856 = vsel %vm1297, %v1844, %v1846
        %v1857 = vsel %vm1297, %v1846, %v1848
        %v1858 = vsel %vm1297, %v1848, %v1850
        %v1859 = vsel %vm1297, %v1850, %v1852
        %v1868 = vsel %vm1297, %v1852, 0.0
        %v1869 = vsel %vm1322, %v1853, 0.0
        %v1870 = vsel %vm1323, %v1854, 0.0
        %v1871 = vsel %vm1324, %v1855, 0.0
        %v1872 = vsel %vm1325, %v1856, 0.0
        %v1873 = vsel %vm1326, %v1857, 0.0
        %v1874 = vsel %vm1327, %v1858, 0.0
        %v1875 = vsel %vm1328, %v1859, 0.0
        %v1876 = vsel %vm1329, %v1868, 0.0
        %1877 = vrot.lane.b32.xlu0 %v1621, 112
        %v1878 = vpop.permute.xlu0 %1877
        %1879 = vrot.lane.b32.xlu0 %v1622, 112
        %v1880 = vpop.permute.xlu0 %1879
        %1881 = vrot.lane.b32.xlu0 %v1623, 112
        %v1882 = vpop.permute.xlu0 %1881
        %1883 = vrot.lane.b32.xlu0 %v1624, 112
        %v1884 = vpop.permute.xlu0 %1883
        %1885 = vrot.lane.b32.xlu0 %v1625, 112
        %v1886 = vpop.permute.xlu0 %1885
        %1887 = vrot.lane.b32.xlu0 %v1626, 112
        %v1888 = vpop.permute.xlu0 %1887
        %1889 = vrot.lane.b32.xlu0 %v1627, 112
        %v1890 = vpop.permute.xlu0 %1889
        %1891 = vrot.lane.b32.xlu0 %v1628, 112
        %v1892 = vpop.permute.xlu0 %1891
        %v1893 = vsel %vm1354, %v1878, %v1880
        %v1894 = vsel %vm1354, %v1880, %v1882
        %v1895 = vsel %vm1354, %v1882, %v1884
        %v1896 = vsel %vm1354, %v1884, %v1886
        %v1897 = vsel %vm1354, %v1886, %v1888
        %v1898 = vsel %vm1354, %v1888, %v1890
        %v1899 = vsel %vm1354, %v1890, %v1892
        %v1908 = vsel %vm1354, %v1892, 0.0
        %v1909 = vsel %vm1379, %v1893, 0.0
        %v1910 = vsel %vm1380, %v1894, 0.0
        %v1911 = vsel %vm1381, %v1895, 0.0
        %v1912 = vsel %vm1382, %v1896, 0.0
        %v1913 = vsel %vm1383, %v1897, 0.0
        %v1914 = vsel %vm1384, %v1898, 0.0
        %v1915 = vsel %vm1385, %v1899, 0.0
        %v1916 = vsel %vm1386, %v1908, 0.0
        %1917 = vrot.lane.b32.xlu0 %v1621, 111
        %v1918 = vpop.permute.xlu0 %1917
        %1919 = vrot.lane.b32.xlu0 %v1622, 111
        %v1920 = vpop.permute.xlu0 %1919
        %1921 = vrot.lane.b32.xlu0 %v1623, 111
        %v1922 = vpop.permute.xlu0 %1921
        %1923 = vrot.lane.b32.xlu0 %v1624, 111
        %v1924 = vpop.permute.xlu0 %1923
        %1925 = vrot.lane.b32.xlu0 %v1625, 111
        %v1926 = vpop.permute.xlu0 %1925
        %1927 = vrot.lane.b32.xlu0 %v1626, 111
        %v1928 = vpop.permute.xlu0 %1927
        %1929 = vrot.lane.b32.xlu0 %v1627, 111
        %v1930 = vpop.permute.xlu0 %1929
        %1931 = vrot.lane.b32.xlu0 %v1628, 111
        %v1932 = vpop.permute.xlu0 %1931
        %v1933 = vsel %vm1411, %v1918, %v1920
        %v1934 = vsel %vm1411, %v1920, %v1922
        %v1935 = vsel %vm1411, %v1922, %v1924
        %v1936 = vsel %vm1411, %v1924, %v1926
        %v1937 = vsel %vm1411, %v1926, %v1928
        %v1938 = vsel %vm1411, %v1928, %v1930
        %v1939 = vsel %vm1411, %v1930, %v1932
        %v1948 = vsel %vm1411, %v1932, 0.0
        %v1949 = vsel %vm1436, %v1933, 0.0
        %v1950 = vsel %vm1437, %v1934, 0.0
        %v1951 = vsel %vm1438, %v1935, 0.0
        %v1952 = vsel %vm1439, %v1936, 0.0
        %v1953 = vsel %vm1440, %v1937, 0.0
        %v1954 = vsel %vm1441, %v1938, 0.0
        %v1955 = vsel %vm1442, %v1939, 0.0
        %v1956 = vsel %vm1443, %v1948, 0.0
        %1958 = vset.pattern.permute.xlu0 0
        %1959 = vperm.xlu0 %1958, %v538
        %v1960 = vpop.permute.xlu0 %1959
        %v1963 = vsel %vm1457, %v537, 0
        %1965 = vmatpush.msra.mxu0 0.0
        %1966 = vmatpush.msra.mxu0 0.0
        %1967 = vmatpush.msra.mxu0 0.0
        %1968 = vmatpush.msra.mxu0 0.0
        %1969 = vmatpush.msra.mxu0 0.0
        %1970 = vmatpush.msra.mxu0 0.0
        %1971 = vmatpush.msra.mxu0 0.0
        %1972 = vmatpush.msra.mxu0 %v1949
        %1973 = vmatpush.msra.mxu0 %v1909
        %1974 = vmatpush.msra.mxu0 %v1869
        %1975 = vmatpush.msra.mxu0 %v1829
        %1976 = vmatpush.msra.mxu0 %v1621
        %1977 = vmatpush.msra.mxu0 %v1789
        %1978 = vmatpush.msra.mxu0 %v1749
        %1979 = vmatpush.msra.mxu0 %v1709
        %1980 = vmatpush.msra.mxu0 %v1669
        %1981 = vmatmul.f32.gmra.mxu0 %v1963
        %v1982 = vpop.f32.mrf.mxu0
        %v1983 = vadd.f32 %v1960, %v1982
        %1984 = vdwg.mxu0
        %1985 = vmatpush.msra.mxu0 0.0
        %1986 = vmatpush.msra.mxu0 0.0
        %1987 = vmatpush.msra.mxu0 0.0
        %1988 = vmatpush.msra.mxu0 0.0
        %1989 = vmatpush.msra.mxu0 0.0
        %1990 = vmatpush.msra.mxu0 0.0
        %1991 = vmatpush.msra.mxu0 0.0
        %1992 = vmatpush.msra.mxu0 %v1950
        %1993 = vmatpush.msra.mxu0 %v1910
        %1994 = vmatpush.msra.mxu0 %v1870
        %1995 = vmatpush.msra.mxu0 %v1830
        %1996 = vmatpush.msra.mxu0 %v1622
        %1997 = vmatpush.msra.mxu0 %v1790
        %1998 = vmatpush.msra.mxu0 %v1750
        %1999 = vmatpush.msra.mxu0 %v1710
        %2000 = vmatpush.msra.mxu0 %v1670
        %2001 = vmatmul.f32.gmra.mxu0 %v1963
        %v2002 = vpop.f32.mrf.mxu0
        %v2003 = vadd.f32 %v1960, %v2002
        %2004 = vdwg.mxu0
        %2005 = vmatpush.msra.mxu0 0.0
        %2006 = vmatpush.msra.mxu0 0.0
        %2007 = vmatpush.msra.mxu0 0.0
        %2008 = vmatpush.msra.mxu0 0.0
        %2009 = vmatpush.msra.mxu0 0.0
        %2010 = vmatpush.msra.mxu0 0.0
        %2011 = vmatpush.msra.mxu0 0.0
        %2012 = vmatpush.msra.mxu0 %v1951
        %2013 = vmatpush.msra.mxu0 %v1911
        %2014 = vmatpush.msra.mxu0 %v1871
        %2015 = vmatpush.msra.mxu0 %v1831
        %2016 = vmatpush.msra.mxu0 %v1623
        %2017 = vmatpush.msra.mxu0 %v1791
        %2018 = vmatpush.msra.mxu0 %v1751
        %2019 = vmatpush.msra.mxu0 %v1711
        %2020 = vmatpush.msra.mxu0 %v1671
        %2021 = vmatmul.f32.gmra.mxu0 %v1963
        %v2022 = vpop.f32.mrf.mxu0
        %v2023 = vadd.f32 %v1960, %v2022
        %2024 = vdwg.mxu0
        %2025 = vmatpush.msra.mxu0 0.0
        %2026 = vmatpush.msra.mxu0 0.0
        %2027 = vmatpush.msra.mxu0 0.0
        %2028 = vmatpush.msra.mxu0 0.0
        %2029 = vmatpush.msra.mxu0 0.0
        %2030 = vmatpush.msra.mxu0 0.0
        %2031 = vmatpush.msra.mxu0 0.0
        %2032 = vmatpush.msra.mxu0 %v1952
        %2033 = vmatpush.msra.mxu0 %v1912
        %2034 = vmatpush.msra.mxu0 %v1872
        %2035 = vmatpush.msra.mxu0 %v1832
        %2036 = vmatpush.msra.mxu0 %v1624
        %2037 = vmatpush.msra.mxu0 %v1792
        %2038 = vmatpush.msra.mxu0 %v1752
        %2039 = vmatpush.msra.mxu0 %v1712
        %2040 = vmatpush.msra.mxu0 %v1672
        %2041 = vmatmul.f32.gmra.mxu0 %v1963
        %v2042 = vpop.f32.mrf.mxu0
        %v2043 = vadd.f32 %v1960, %v2042
        %2044 = vdwg.mxu0
        %2045 = vmatpush.msra.mxu0 0.0
        %2046 = vmatpush.msra.mxu0 0.0
        %2047 = vmatpush.msra.mxu0 0.0
        %2048 = vmatpush.msra.mxu0 0.0
        %2049 = vmatpush.msra.mxu0 0.0
        %2050 = vmatpush.msra.mxu0 0.0
        %2051 = vmatpush.msra.mxu0 0.0
        %2052 = vmatpush.msra.mxu0 %v1953
        %2053 = vmatpush.msra.mxu0 %v1913
        %2054 = vmatpush.msra.mxu0 %v1873
        %2055 = vmatpush.msra.mxu0 %v1833
        %2056 = vmatpush.msra.mxu0 %v1625
        %2057 = vmatpush.msra.mxu0 %v1793
        %2058 = vmatpush.msra.mxu0 %v1753
        %2059 = vmatpush.msra.mxu0 %v1713
        %2060 = vmatpush.msra.mxu0 %v1673
        %2061 = vmatmul.f32.gmra.mxu0 %v1963
        %v2062 = vpop.f32.mrf.mxu0
        %v2063 = vadd.f32 %v1960, %v2062
        %2064 = vdwg.mxu0
        %2065 = vmatpush.msra.mxu0 0.0
        %2066 = vmatpush.msra.mxu0 0.0
        %2067 = vmatpush.msra.mxu0 0.0
        %2068 = vmatpush.msra.mxu0 0.0
        %2069 = vmatpush.msra.mxu0 0.0
        %2070 = vmatpush.msra.mxu0 0.0
        %2071 = vmatpush.msra.mxu0 0.0
        %2072 = vmatpush.msra.mxu0 %v1954
        %2073 = vmatpush.msra.mxu0 %v1914
        %2074 = vmatpush.msra.mxu0 %v1874
        %2075 = vmatpush.msra.mxu0 %v1834
        %2076 = vmatpush.msra.mxu0 %v1626
        %2077 = vmatpush.msra.mxu0 %v1794
        %2078 = vmatpush.msra.mxu0 %v1754
        %2079 = vmatpush.msra.mxu0 %v1714
        %2080 = vmatpush.msra.mxu0 %v1674
        %2081 = vmatmul.f32.gmra.mxu0 %v1963
        %v2082 = vpop.f32.mrf.mxu0
        %v2083 = vadd.f32 %v1960, %v2082
        %2084 = vdwg.mxu0
        %2085 = vmatpush.msra.mxu0 0.0
        %2086 = vmatpush.msra.mxu0 0.0
        %2087 = vmatpush.msra.mxu0 0.0
        %2088 = vmatpush.msra.mxu0 0.0
        %2089 = vmatpush.msra.mxu0 0.0
        %2090 = vmatpush.msra.mxu0 0.0
        %2091 = vmatpush.msra.mxu0 0.0
        %2092 = vmatpush.msra.mxu0 %v1955
        %2093 = vmatpush.msra.mxu0 %v1915
        %2094 = vmatpush.msra.mxu0 %v1875
        %2095 = vmatpush.msra.mxu0 %v1835
        %2096 = vmatpush.msra.mxu0 %v1627
        %2097 = vmatpush.msra.mxu0 %v1795
        %2098 = vmatpush.msra.mxu0 %v1755
        %2099 = vmatpush.msra.mxu0 %v1715
        %2100 = vmatpush.msra.mxu0 %v1675
        %2101 = vmatmul.f32.gmra.mxu0 %v1963
        %v2102 = vpop.f32.mrf.mxu0
        %v2103 = vadd.f32 %v1960, %v2102
        %2104 = vdwg.mxu0
        %2105 = vmatpush.msra.mxu0 0.0
        %2106 = vmatpush.msra.mxu0 0.0
        %2107 = vmatpush.msra.mxu0 0.0
        %2108 = vmatpush.msra.mxu0 0.0
        %2109 = vmatpush.msra.mxu0 0.0
        %2110 = vmatpush.msra.mxu0 0.0
        %2111 = vmatpush.msra.mxu0 0.0
        %2112 = vmatpush.msra.mxu0 %v1956
        %2113 = vmatpush.msra.mxu0 %v1916
        %2114 = vmatpush.msra.mxu0 %v1876
        %2115 = vmatpush.msra.mxu0 %v1836
        %2116 = vmatpush.msra.mxu0 %v1628
        %2117 = vmatpush.msra.mxu0 %v1796
        %2118 = vmatpush.msra.mxu0 %v1756
        %2119 = vmatpush.msra.mxu0 %v1716
        %2120 = vmatpush.msra.mxu0 %v1676
        %2121 = vmatmul.f32.gmra.mxu0 %v1963
        %v2122 = vpop.f32.mrf.mxu0
        %v2123 = vadd.f32 %v1960, %v2122
        %2124 = vdwg.mxu0
        %v2125 = vmax.f32 %v1983, 0.0
        %v2126 = vmax.f32 %v2003, 0.0
        %v2127 = vmax.f32 %v2023, 0.0
        %v2128 = vmax.f32 %v2043, 0.0
        %v2129 = vmax.f32 %v2063, 0.0
        %v2130 = vmax.f32 %v2083, 0.0
        %v2131 = vmax.f32 %v2103, 0.0
        %v2132 = vmax.f32 %v2123, 0.0
        %2141 = vrot.lane.b32.xlu0 %v2125, 127
        %v2142 = vpop.permute.xlu0 %2141
        %2143 = vrot.lane.b32.xlu0 %v2126, 127
        %v2144 = vpop.permute.xlu0 %2143
        %2145 = vrot.lane.b32.xlu0 %v2127, 127
        %v2146 = vpop.permute.xlu0 %2145
        %2147 = vrot.lane.b32.xlu0 %v2128, 127
        %v2148 = vpop.permute.xlu0 %2147
        %2149 = vrot.lane.b32.xlu0 %v2129, 127
        %v2150 = vpop.permute.xlu0 %2149
        %2151 = vrot.lane.b32.xlu0 %v2130, 127
        %v2152 = vpop.permute.xlu0 %2151
        %2153 = vrot.lane.b32.xlu0 %v2131, 127
        %v2154 = vpop.permute.xlu0 %2153
        %2155 = vrot.lane.b32.xlu0 %v2132, 127
        %v2156 = vpop.permute.xlu0 %2155
        %v2157 = vsel %vm1240, %v2142, %v2144
        %v2158 = vsel %vm1240, %v2144, %v2146
        %v2159 = vsel %vm1240, %v2146, %v2148
        %v2160 = vsel %vm1240, %v2148, %v2150
        %v2161 = vsel %vm1240, %v2150, %v2152
        %v2162 = vsel %vm1240, %v2152, %v2154
        %v2163 = vsel %vm1240, %v2154, %v2156
        %v2172 = vsel %vm1240, %v2156, 0.0
        %v2173 = vmax.f32 %v2125, %v2157
        %v2174 = vmax.f32 %v2126, %v2158
        %v2175 = vmax.f32 %v2127, %v2159
        %v2176 = vmax.f32 %v2128, %v2160
        %v2177 = vmax.f32 %v2129, %v2161
        %v2178 = vmax.f32 %v2130, %v2162
        %v2179 = vmax.f32 %v2131, %v2163
        %v2180 = vmax.f32 %v2132, %v2172
        %2181 = vrot.lane.b32.xlu0 %v2125, 112
        %v2182 = vpop.permute.xlu0 %2181
        %2183 = vrot.lane.b32.xlu0 %v2126, 112
        %v2184 = vpop.permute.xlu0 %2183
        %2185 = vrot.lane.b32.xlu0 %v2127, 112
        %v2186 = vpop.permute.xlu0 %2185
        %2187 = vrot.lane.b32.xlu0 %v2128, 112
        %v2188 = vpop.permute.xlu0 %2187
        %2189 = vrot.lane.b32.xlu0 %v2129, 112
        %v2190 = vpop.permute.xlu0 %2189
        %2191 = vrot.lane.b32.xlu0 %v2130, 112
        %v2192 = vpop.permute.xlu0 %2191
        %2193 = vrot.lane.b32.xlu0 %v2131, 112
        %v2194 = vpop.permute.xlu0 %2193
        %2195 = vrot.lane.b32.xlu0 %v2132, 112
        %v2196 = vpop.permute.xlu0 %2195
        %v2197 = vsel %vm1354, %v2182, %v2184
        %v2198 = vsel %vm1354, %v2184, %v2186
        %v2199 = vsel %vm1354, %v2186, %v2188
        %v2200 = vsel %vm1354, %v2188, %v2190
        %v2201 = vsel %vm1354, %v2190, %v2192
        %v2202 = vsel %vm1354, %v2192, %v2194
        %v2203 = vsel %vm1354, %v2194, %v2196
        %v2212 = vsel %vm1354, %v2196, 0.0
        %2213 = vrot.lane.b32.xlu0 %v2125, 111
        %v2214 = vpop.permute.xlu0 %2213
        %2215 = vrot.lane.b32.xlu0 %v2126, 111
        %v2216 = vpop.permute.xlu0 %2215
        %2217 = vrot.lane.b32.xlu0 %v2127, 111
        %v2218 = vpop.permute.xlu0 %2217
        %2219 = vrot.lane.b32.xlu0 %v2128, 111
        %v2220 = vpop.permute.xlu0 %2219
        %2221 = vrot.lane.b32.xlu0 %v2129, 111
        %v2222 = vpop.permute.xlu0 %2221
        %2223 = vrot.lane.b32.xlu0 %v2130, 111
        %v2224 = vpop.permute.xlu0 %2223
        %2225 = vrot.lane.b32.xlu0 %v2131, 111
        %v2226 = vpop.permute.xlu0 %2225
        %2227 = vrot.lane.b32.xlu0 %v2132, 111
        %v2228 = vpop.permute.xlu0 %2227
        %v2229 = vsel %vm1411, %v2214, %v2216
        %v2230 = vsel %vm1411, %v2216, %v2218
        %v2231 = vsel %vm1411, %v2218, %v2220
        %v2232 = vsel %vm1411, %v2220, %v2222
        %v2233 = vsel %vm1411, %v2222, %v2224
        %v2234 = vsel %vm1411, %v2224, %v2226
        %v2235 = vsel %vm1411, %v2226, %v2228
        %v2244 = vsel %vm1411, %v2228, 0.0
        %v2245 = vmax.f32 %v2197, %v2229
        %v2246 = vmax.f32 %v2198, %v2230
        %v2247 = vmax.f32 %v2199, %v2231
        %v2248 = vmax.f32 %v2200, %v2232
        %v2249 = vmax.f32 %v2201, %v2233
        %v2250 = vmax.f32 %v2202, %v2234
        %v2251 = vmax.f32 %v2203, %v2235
        %v2252 = vmax.f32 %v2212, %v2244
        %v2253 = vmax.f32 %v2173, %v2245
        %v2254 = vmax.f32 %v2174, %v2246
        %v2255 = vmax.f32 %v2175, %v2247
        %v2256 = vmax.f32 %v2176, %v2248
        %v2257 = vmax.f32 %v2177, %v2249
        %v2258 = vmax.f32 %v2178, %v2250
        %v2259 = vmax.f32 %v2179, %v2251
        %v2260 = vmax.f32 %v2180, %v2252
        %2261 = vmatpush.msra.mxu0 %v569
        %2262 = vmatpush.msra.mxu0 %v567
        %2263 = vmatpush.msra.mxu0 %v565
        %2264 = vmatpush.msra.mxu0 %v563
        %2265 = vmatpush.msra.mxu0 %v561
        %2266 = vmatpush.msra.mxu0 %v559
        %2267 = vmatpush.msra.mxu0 %v557
        %2268 = vmatpush.msra.mxu0 %v555
        %2269 = vmatpush.msra.mxu0 %v553
        %2270 = vmatpush.msra.mxu0 %v551
        %2271 = vmatpush.msra.mxu0 %v549
        %2272 = vmatpush.msra.mxu0 %v547
        %2273 = vmatpush.msra.mxu0 %v545
        %2274 = vmatpush.msra.mxu0 %v543
        %2275 = vmatpush.msra.mxu0 %v541
        %2276 = vmatpush.msra.mxu0 %v539
        %2277 = vmatmul.f32.gmra.mxu0 %v2253
        %v2278 = vpop.f32.mrf.mxu0
        %v2279 = vadd.f32 0.0, %v2278
        %2280 = vdwg.mxu0
        %2281 = vmatpush.msra.mxu0 %v601
        %2282 = vmatpush.msra.mxu0 %v599
        %2283 = vmatpush.msra.mxu0 %v597
        %2284 = vmatpush.msra.mxu0 %v595
        %2285 = vmatpush.msra.mxu0 %v593
        %2286 = vmatpush.msra.mxu0 %v591
        %2287 = vmatpush.msra.mxu0 %v589
        %2288 = vmatpush.msra.mxu0 %v587
        %2289 = vmatpush.msra.mxu0 %v585
        %2290 = vmatpush.msra.mxu0 %v583
        %2291 = vmatpush.msra.mxu0 %v581
        %2292 = vmatpush.msra.mxu0 %v579
        %2293 = vmatpush.msra.mxu0 %v577
        %2294 = vmatpush.msra.mxu0 %v575
        %2295 = vmatpush.msra.mxu0 %v573
        %2296 = vmatpush.msra.mxu0 %v571
        %2297 = vmatmul.f32.gmra.mxu0 %v2254
        %v2298 = vpop.f32.mrf.mxu0
        %v2299 = vadd.f32 %v2279, %v2298
        %2300 = vdwg.mxu0
        %2301 = vmatpush.msra.mxu0 %v633
        %2302 = vmatpush.msra.mxu0 %v631
        %2303 = vmatpush.msra.mxu0 %v629
        %2304 = vmatpush.msra.mxu0 %v627
        %2305 = vmatpush.msra.mxu0 %v625
        %2306 = vmatpush.msra.mxu0 %v623
        %2307 = vmatpush.msra.mxu0 %v621
        %2308 = vmatpush.msra.mxu0 %v619
        %2309 = vmatpush.msra.mxu0 %v617
        %2310 = vmatpush.msra.mxu0 %v615
        %2311 = vmatpush.msra.mxu0 %v613
        %2312 = vmatpush.msra.mxu0 %v611
        %2313 = vmatpush.msra.mxu0 %v609
        %2314 = vmatpush.msra.mxu0 %v607
        %2315 = vmatpush.msra.mxu0 %v605
        %2316 = vmatpush.msra.mxu0 %v603
        %2317 = vmatmul.f32.gmra.mxu0 %v2255
        %v2318 = vpop.f32.mrf.mxu0
        %v2319 = vadd.f32 %v2299, %v2318
        %2320 = vdwg.mxu0
        %2321 = vmatpush.msra.mxu0 %v665
        %2322 = vmatpush.msra.mxu0 %v663
        %2323 = vmatpush.msra.mxu0 %v661
        %2324 = vmatpush.msra.mxu0 %v659
        %2325 = vmatpush.msra.mxu0 %v657
        %2326 = vmatpush.msra.mxu0 %v655
        %2327 = vmatpush.msra.mxu0 %v653
        %2328 = vmatpush.msra.mxu0 %v651
        %2329 = vmatpush.msra.mxu0 %v649
        %2330 = vmatpush.msra.mxu0 %v647
        %2331 = vmatpush.msra.mxu0 %v645
        %2332 = vmatpush.msra.mxu0 %v643
        %2333 = vmatpush.msra.mxu0 %v641
        %2334 = vmatpush.msra.mxu0 %v639
        %2335 = vmatpush.msra.mxu0 %v637
        %2336 = vmatpush.msra.mxu0 %v635
        %2337 = vmatmul.f32.gmra.mxu0 %v2256
        %v2338 = vpop.f32.mrf.mxu0
        %v2339 = vadd.f32 %v2319, %v2338
        %2340 = vdwg.mxu0
        %2341 = vmatpush.msra.mxu0 %v697
        %2342 = vmatpush.msra.mxu0 %v695
        %2343 = vmatpush.msra.mxu0 %v693
        %2344 = vmatpush.msra.mxu0 %v691
        %2345 = vmatpush.msra.mxu0 %v689
        %2346 = vmatpush.msra.mxu0 %v687
        %2347 = vmatpush.msra.mxu0 %v685
        %2348 = vmatpush.msra.mxu0 %v683
        %2349 = vmatpush.msra.mxu0 %v681
        %2350 = vmatpush.msra.mxu0 %v679
        %2351 = vmatpush.msra.mxu0 %v677
        %2352 = vmatpush.msra.mxu0 %v675
        %2353 = vmatpush.msra.mxu0 %v673
        %2354 = vmatpush.msra.mxu0 %v671
        %2355 = vmatpush.msra.mxu0 %v669
        %2356 = vmatpush.msra.mxu0 %v667
        %2357 = vmatmul.f32.gmra.mxu0 %v2257
        %v2358 = vpop.f32.mrf.mxu0
        %v2359 = vadd.f32 %v2339, %v2358
        %2360 = vdwg.mxu0
        %2361 = vmatpush.msra.mxu0 %v729
        %2362 = vmatpush.msra.mxu0 %v727
        %2363 = vmatpush.msra.mxu0 %v725
        %2364 = vmatpush.msra.mxu0 %v723
        %2365 = vmatpush.msra.mxu0 %v721
        %2366 = vmatpush.msra.mxu0 %v719
        %2367 = vmatpush.msra.mxu0 %v717
        %2368 = vmatpush.msra.mxu0 %v715
        %2369 = vmatpush.msra.mxu0 %v713
        %2370 = vmatpush.msra.mxu0 %v711
        %2371 = vmatpush.msra.mxu0 %v709
        %2372 = vmatpush.msra.mxu0 %v707
        %2373 = vmatpush.msra.mxu0 %v705
        %2374 = vmatpush.msra.mxu0 %v703
        %2375 = vmatpush.msra.mxu0 %v701
        %2376 = vmatpush.msra.mxu0 %v699
        %2377 = vmatmul.f32.gmra.mxu0 %v2258
        %v2378 = vpop.f32.mrf.mxu0
        %v2379 = vadd.f32 %v2359, %v2378
        %2380 = vdwg.mxu0
        %2381 = vmatpush.msra.mxu0 %v761
        %2382 = vmatpush.msra.mxu0 %v759
        %2383 = vmatpush.msra.mxu0 %v757
        %2384 = vmatpush.msra.mxu0 %v755
        %2385 = vmatpush.msra.mxu0 %v753
        %2386 = vmatpush.msra.mxu0 %v751
        %2387 = vmatpush.msra.mxu0 %v749
        %2388 = vmatpush.msra.mxu0 %v747
        %2389 = vmatpush.msra.mxu0 %v745
        %2390 = vmatpush.msra.mxu0 %v743
        %2391 = vmatpush.msra.mxu0 %v741
        %2392 = vmatpush.msra.mxu0 %v739
        %2393 = vmatpush.msra.mxu0 %v737
        %2394 = vmatpush.msra.mxu0 %v735
        %2395 = vmatpush.msra.mxu0 %v733
        %2396 = vmatpush.msra.mxu0 %v731
        %2397 = vmatmul.f32.gmra.mxu0 %v2259
        %v2398 = vpop.f32.mrf.mxu0
        %v2399 = vadd.f32 %v2379, %v2398
        %2400 = vdwg.mxu0
        %2401 = vmatpush.msra.mxu0 %v793
        %2402 = vmatpush.msra.mxu0 %v791
        %2403 = vmatpush.msra.mxu0 %v789
        %2404 = vmatpush.msra.mxu0 %v787
        %2405 = vmatpush.msra.mxu0 %v785
        %2406 = vmatpush.msra.mxu0 %v783
        %2407 = vmatpush.msra.mxu0 %v781
        %2408 = vmatpush.msra.mxu0 %v779
        %2409 = vmatpush.msra.mxu0 %v777
        %2410 = vmatpush.msra.mxu0 %v775
        %2411 = vmatpush.msra.mxu0 %v773
        %2412 = vmatpush.msra.mxu0 %v771
        %2413 = vmatpush.msra.mxu0 %v769
        %2414 = vmatpush.msra.mxu0 %v767
        %2415 = vmatpush.msra.mxu0 %v765
        %2416 = vmatpush.msra.mxu0 %v763
        %2417 = vmatmul.f32.gmra.mxu0 %v2260
        %v2418 = vpop.f32.mrf.mxu0
        %v2419 = vadd.f32 %v2399, %v2418
        %2420 = vdwg.mxu0
        %2421 = vmatpush.msra.mxu0 %v570
        %2422 = vmatpush.msra.mxu0 %v568
        %2423 = vmatpush.msra.mxu0 %v566
        %2424 = vmatpush.msra.mxu0 %v564
        %2425 = vmatpush.msra.mxu0 %v562
        %2426 = vmatpush.msra.mxu0 %v560
        %2427 = vmatpush.msra.mxu0 %v558
        %2428 = vmatpush.msra.mxu0 %v556
        %2429 = vmatpush.msra.mxu0 %v554
        %2430 = vmatpush.msra.mxu0 %v552
        %2431 = vmatpush.msra.mxu0 %v550
        %2432 = vmatpush.msra.mxu0 %v548
        %2433 = vmatpush.msra.mxu0 %v546
        %2434 = vmatpush.msra.mxu0 %v544
        %2435 = vmatpush.msra.mxu0 %v542
        %2436 = vmatpush.msra.mxu0 %v540
        %2437 = vmatmul.f32.gmra.mxu0 %v2253
        %v2438 = vpop.f32.mrf.mxu0
        %v2439 = vadd.f32 0.0, %v2438
        %2440 = vdwg.mxu0
        %2441 = vmatpush.msra.mxu0 %v602
        %2442 = vmatpush.msra.mxu0 %v600
        %2443 = vmatpush.msra.mxu0 %v598
        %2444 = vmatpush.msra.mxu0 %v596
        %2445 = vmatpush.msra.mxu0 %v594
        %2446 = vmatpush.msra.mxu0 %v592
        %2447 = vmatpush.msra.mxu0 %v590
        %2448 = vmatpush.msra.mxu0 %v588
        %2449 = vmatpush.msra.mxu0 %v586
        %2450 = vmatpush.msra.mxu0 %v584
        %2451 = vmatpush.msra.mxu0 %v582
        %2452 = vmatpush.msra.mxu0 %v580
        %2453 = vmatpush.msra.mxu0 %v578
        %2454 = vmatpush.msra.mxu0 %v576
        %2455 = vmatpush.msra.mxu0 %v574
        %2456 = vmatpush.msra.mxu0 %v572
        %2457 = vmatmul.f32.gmra.mxu0 %v2254
        %v2458 = vpop.f32.mrf.mxu0
        %v2459 = vadd.f32 %v2439, %v2458
        %2460 = vdwg.mxu0
        %2461 = vmatpush.msra.mxu0 %v634
        %2462 = vmatpush.msra.mxu0 %v632
        %2463 = vmatpush.msra.mxu0 %v630
        %2464 = vmatpush.msra.mxu0 %v628
        %2465 = vmatpush.msra.mxu0 %v626
        %2466 = vmatpush.msra.mxu0 %v624
        %2467 = vmatpush.msra.mxu0 %v622
        %2468 = vmatpush.msra.mxu0 %v620
        %2469 = vmatpush.msra.mxu0 %v618
        %2470 = vmatpush.msra.mxu0 %v616
        %2471 = vmatpush.msra.mxu0 %v614
        %2472 = vmatpush.msra.mxu0 %v612
        %2473 = vmatpush.msra.mxu0 %v610
        %2474 = vmatpush.msra.mxu0 %v608
        %2475 = vmatpush.msra.mxu0 %v606
        %2476 = vmatpush.msra.mxu0 %v604
        %2477 = vmatmul.f32.gmra.mxu0 %v2255
        %v2478 = vpop.f32.mrf.mxu0
        %v2479 = vadd.f32 %v2459, %v2478
        %2480 = vdwg.mxu0
        %2481 = vmatpush.msra.mxu0 %v666
        %2482 = vmatpush.msra.mxu0 %v664
        %2483 = vmatpush.msra.mxu0 %v662
        %2484 = vmatpush.msra.mxu0 %v660
        %2485 = vmatpush.msra.mxu0 %v658
        %2486 = vmatpush.msra.mxu0 %v656
        %2487 = vmatpush.msra.mxu0 %v654
        %2488 = vmatpush.msra.mxu0 %v652
        %2489 = vmatpush.msra.mxu0 %v650
        %2490 = vmatpush.msra.mxu0 %v648
        %2491 = vmatpush.msra.mxu0 %v646
        %2492 = vmatpush.msra.mxu0 %v644
        %2493 = vmatpush.msra.mxu0 %v642
        %2494 = vmatpush.msra.mxu0 %v640
        %2495 = vmatpush.msra.mxu0 %v638
        %2496 = vmatpush.msra.mxu0 %v636
        %2497 = vmatmul.f32.gmra.mxu0 %v2256
        %v2498 = vpop.f32.mrf.mxu0
        %v2499 = vadd.f32 %v2479, %v2498
        %2500 = vdwg.mxu0
        %2501 = vmatpush.msra.mxu0 %v698
        %2502 = vmatpush.msra.mxu0 %v696
        %2503 = vmatpush.msra.mxu0 %v694
        %2504 = vmatpush.msra.mxu0 %v692
        %2505 = vmatpush.msra.mxu0 %v690
        %2506 = vmatpush.msra.mxu0 %v688
        %2507 = vmatpush.msra.mxu0 %v686
        %2508 = vmatpush.msra.mxu0 %v684
        %2509 = vmatpush.msra.mxu0 %v682
        %2510 = vmatpush.msra.mxu0 %v680
        %2511 = vmatpush.msra.mxu0 %v678
        %2512 = vmatpush.msra.mxu0 %v676
        %2513 = vmatpush.msra.mxu0 %v674
        %2514 = vmatpush.msra.mxu0 %v672
        %2515 = vmatpush.msra.mxu0 %v670
        %2516 = vmatpush.msra.mxu0 %v668
        %2517 = vmatmul.f32.gmra.mxu0 %v2257
        %v2518 = vpop.f32.mrf.mxu0
        %v2519 = vadd.f32 %v2499, %v2518
        %2520 = vdwg.mxu0
        %2521 = vmatpush.msra.mxu0 %v730
        %2522 = vmatpush.msra.mxu0 %v728
        %2523 = vmatpush.msra.mxu0 %v726
        %2524 = vmatpush.msra.mxu0 %v724
        %2525 = vmatpush.msra.mxu0 %v722
        %2526 = vmatpush.msra.mxu0 %v720
        %2527 = vmatpush.msra.mxu0 %v718
        %2528 = vmatpush.msra.mxu0 %v716
        %2529 = vmatpush.msra.mxu0 %v714
        %2530 = vmatpush.msra.mxu0 %v712
        %2531 = vmatpush.msra.mxu0 %v710
        %2532 = vmatpush.msra.mxu0 %v708
        %2533 = vmatpush.msra.mxu0 %v706
        %2534 = vmatpush.msra.mxu0 %v704
        %2535 = vmatpush.msra.mxu0 %v702
        %2536 = vmatpush.msra.mxu0 %v700
        %2537 = vmatmul.f32.gmra.mxu0 %v2258
        %v2538 = vpop.f32.mrf.mxu0
        %v2539 = vadd.f32 %v2519, %v2538
        %2540 = vdwg.mxu0
        %2541 = vmatpush.msra.mxu0 %v762
        %2542 = vmatpush.msra.mxu0 %v760
        %2543 = vmatpush.msra.mxu0 %v758
        %2544 = vmatpush.msra.mxu0 %v756
        %2545 = vmatpush.msra.mxu0 %v754
        %2546 = vmatpush.msra.mxu0 %v752
        %2547 = vmatpush.msra.mxu0 %v750
        %2548 = vmatpush.msra.mxu0 %v748
        %2549 = vmatpush.msra.mxu0 %v746
        %2550 = vmatpush.msra.mxu0 %v744
        %2551 = vmatpush.msra.mxu0 %v742
        %2552 = vmatpush.msra.mxu0 %v740
        %2553 = vmatpush.msra.mxu0 %v738
        %2554 = vmatpush.msra.mxu0 %v736
        %2555 = vmatpush.msra.mxu0 %v734
        %2556 = vmatpush.msra.mxu0 %v732
        %2557 = vmatmul.f32.gmra.mxu0 %v2259
        %v2558 = vpop.f32.mrf.mxu0
        %v2559 = vadd.f32 %v2539, %v2558
        %2560 = vdwg.mxu0
        %2561 = vmatpush.msra.mxu0 %v794
        %2562 = vmatpush.msra.mxu0 %v792
        %2563 = vmatpush.msra.mxu0 %v790
        %2564 = vmatpush.msra.mxu0 %v788
        %2565 = vmatpush.msra.mxu0 %v786
        %2566 = vmatpush.msra.mxu0 %v784
        %2567 = vmatpush.msra.mxu0 %v782
        %2568 = vmatpush.msra.mxu0 %v780
        %2569 = vmatpush.msra.mxu0 %v778
        %2570 = vmatpush.msra.mxu0 %v776
        %2571 = vmatpush.msra.mxu0 %v774
        %2572 = vmatpush.msra.mxu0 %v772
        %2573 = vmatpush.msra.mxu0 %v770
        %2574 = vmatpush.msra.mxu0 %v768
        %2575 = vmatpush.msra.mxu0 %v766
        %2576 = vmatpush.msra.mxu0 %v764
        %2577 = vmatmul.f32.gmra.mxu0 %v2260
        %v2578 = vpop.f32.mrf.mxu0
        %v2579 = vadd.f32 %v2559, %v2578
        %2580 = vdwg.mxu0
        %v2581 = vld [vmem:[%s6] sm:$0xff]
        %v2582 = vld [vmem:[%s6 + $0x8] sm:$0xff]
        %v2583 = vld [vmem:[%s7] sm:$0xff]
        %v2584 = vld [vmem:[%s7 + $0x8] sm:$0xff]
        %v2585 = vld [vmem:[%s8] sm:$0xff]
        %v2586 = vld [vmem:[%s8 + $0x8] sm:$0xff]
        %v2587 = vld [vmem:[%s8 + $0x10] sm:$0xff]
        %v2588 = vld [vmem:[%s8 + $0x18] sm:$0xff]
        %v2589 = vld [vmem:[%s9] sm:$0xff]
        %v2590 = vld [vmem:[%s9 + $0x8] sm:$0xff]
        %v2591 = vld [vmem:[%s10] sm:$0xff]
        %v2592 = vld [vmem:[%s10 + $0x8] sm:$0xff]
        %v2593 = vld [vmem:[%s10 + $0x10] sm:$0xff]
        %v2594 = vld [vmem:[%s10 + $0x18] sm:$0xff]
        %v2595 = vld [vmem:[%s10 + $0x20] sm:$0xff]
        %v2596 = vld [vmem:[%s10 + $0x28] sm:$0xff]
        %v2597 = vld [vmem:[%s10 + $0x30] sm:$0xff]
        %v2598 = vld [vmem:[%s10 + $0x38] sm:$0xff]
        %v2599 = vld [vmem:[%s10 + $0x40] sm:$0xff]
        %v2600 = vld [vmem:[%s10 + $0x48] sm:$0xff]
        %v2601 = vld [vmem:[%s10 + $0x50] sm:$0xff]
        %v2602 = vld [vmem:[%s10 + $0x58] sm:$0xff]
        %v2603 = vld [vmem:[%s10 + $0x60] sm:$0xff]
        %v2604 = vld [vmem:[%s10 + $0x68] sm:$0xff]
        %v2605 = vld [vmem:[%s10 + $0x70] sm:$0xff]
        %v2606 = vld [vmem:[%s10 + $0x78] sm:$0xff]
        %v2607 = vld [vmem:[%s10 + $0x80] sm:$0xff]
        %v2608 = vld [vmem:[%s10 + $0x88] sm:$0xff]
        %v2609 = vld [vmem:[%s10 + $0x90] sm:$0xff]
        %v2610 = vld [vmem:[%s10 + $0x98] sm:$0xff]
        %v2611 = vld [vmem:[%s10 + $0xa0] sm:$0xff]
        %v2612 = vld [vmem:[%s10 + $0xa8] sm:$0xff]
        %v2613 = vld [vmem:[%s10 + $0xb0] sm:$0xff]
        %v2614 = vld [vmem:[%s10 + $0xb8] sm:$0xff]
        %v2615 = vld [vmem:[%s10 + $0xc0] sm:$0xff]
        %v2616 = vld [vmem:[%s10 + $0xc8] sm:$0xff]
        %v2617 = vld [vmem:[%s10 + $0xd0] sm:$0xff]
        %v2618 = vld [vmem:[%s10 + $0xd8] sm:$0xff]
        %v2619 = vld [vmem:[%s10 + $0xe0] sm:$0xff]
        %v2620 = vld [vmem:[%s10 + $0xe8] sm:$0xff]
        %v2621 = vld [vmem:[%s10 + $0xf0] sm:$0xff]
        %v2622 = vld [vmem:[%s10 + $0xf8] sm:$0xff]
        %v2623 = vand.u32 %v796, 63
        %v2624 = vand.u32 %v797, 63
        %v2625 = vshra.s32 %v2623, 3
        %v2626 = vshra.s32 %v2624, 3
        %v2627 = vand.u32 %v2623, 7
        %v2628 = vand.u32 %v2624, 7
        %v2629 = vadd.s32 %v2625, 4294967295
        %v2630 = vadd.s32 %v2626, 4294967295
        %vm2631 = vcmp.ge.s32.totalorder %v2629, 0
        %vm2632 = vcmp.ge.s32.totalorder %v2630, 0
        %vm2633 = vcmp.lt.s32.totalorder %v2629, 8
        %vm2634 = vcmp.lt.s32.totalorder %v2630, 8
        %vm2635 = vmand %vm2631, %vm2633
        %vm2636 = vmand %vm2632, %vm2634
        %v2637 = vadd.s32 %v2627, 4294967295
        %v2638 = vadd.s32 %v2628, 4294967295
        %vm2639 = vcmp.ge.s32.totalorder %v2637, 0
        %vm2640 = vcmp.ge.s32.totalorder %v2638, 0
        %vm2641 = vcmp.lt.s32.totalorder %v2637, 8
        %vm2642 = vcmp.lt.s32.totalorder %v2638, 8
        %vm2643 = vmand %vm2639, %vm2641
        %vm2644 = vmand %vm2640, %vm2642
        %vm2645 = vmand %vm2635, %vm2643
        %vm2646 = vmand %vm2636, %vm2644
        %v2647 = vadd.s32 %v2627, 1
        %v2648 = vadd.s32 %v2628, 1
        %vm2649 = vcmp.ge.s32.totalorder %v2647, 0
        %vm2650 = vcmp.ge.s32.totalorder %v2648, 0
        %vm2651 = vcmp.lt.s32.totalorder %v2647, 8
        %vm2652 = vcmp.lt.s32.totalorder %v2648, 8
        %vm2653 = vmand %vm2649, %vm2651
        %vm2654 = vmand %vm2650, %vm2652
        %vm2655 = vmand %vm2635, %vm2653
        %vm2656 = vmand %vm2636, %vm2654
        %v2657 = vadd.s32 %v2625, 1
        %v2658 = vadd.s32 %v2626, 1
        %vm2659 = vcmp.ge.s32.totalorder %v2657, 0
        %vm2660 = vcmp.ge.s32.totalorder %v2658, 0
        %vm2661 = vcmp.lt.s32.totalorder %v2657, 8
        %vm2662 = vcmp.lt.s32.totalorder %v2658, 8
        %vm2663 = vmand %vm2659, %vm2661
        %vm2664 = vmand %vm2660, %vm2662
        %vm2665 = vmand %vm2663, %vm2643
        %vm2666 = vmand %vm2664, %vm2644
        %vm2667 = vmand %vm2663, %vm2653
        %vm2668 = vmand %vm2664, %vm2654
        %2671 = vrot.lane.b32.xlu0 %v2419, 9
        %v2672 = vpop.permute.xlu0 %2671
        %2673 = vrot.lane.b32.xlu0 %v2579, 9
        %v2674 = vpop.permute.xlu0 %2673
        %vm2675 = vcmask 72704
        %v2676 = vsel %vm2675, %v2672, %v2674
        %v2679 = vsel %vm2675, 0.0, %v2672
        %v2680 = vsel %vm2645, 1, 0
        %v2681 = vsel %vm2646, 1, 0
        %vm2682 = vcmp.eq.s32.totalorder %v2680, 1
        %vm2683 = vcmp.eq.s32.totalorder %v2681, 1
        %v2684 = vsel %vm2682, %v2679, 0.0
        %v2685 = vsel %vm2683, %v2676, 0.0
        %2686 = vrot.lane.b32.xlu0 %v2419, 8
        %v2687 = vpop.permute.xlu0 %2686
        %2688 = vrot.lane.b32.xlu0 %v2579, 8
        %v2689 = vpop.permute.xlu0 %2688
        %vm2690 = vcmask 64512
        %v2691 = vsel %vm2690, %v2687, %v2689
        %v2694 = vsel %vm2690, 0.0, %v2687
        %v2695 = vsel %vm2635, 1, 0
        %v2696 = vsel %vm2636, 1, 0
        %vm2697 = vcmp.eq.s32.totalorder %v2695, 1
        %vm2698 = vcmp.eq.s32.totalorder %v2696, 1
        %v2699 = vsel %vm2697, %v2694, 0.0
        %v2700 = vsel %vm2698, %v2691, 0.0
        %2701 = vrot.lane.b32.xlu0 %v2419, 7
        %v2702 = vpop.permute.xlu0 %2701
        %2703 = vrot.lane.b32.xlu0 %v2579, 7
        %v2704 = vpop.permute.xlu0 %2703
        %vm2705 = vcmask 56320
        %v2706 = vsel %vm2705, %v2702, %v2704
        %v2709 = vsel %vm2705, 0.0, %v2702
        %v2710 = vsel %vm2655, 1, 0
        %v2711 = vsel %vm2656, 1, 0
        %vm2712 = vcmp.eq.s32.totalorder %v2710, 1
        %vm2713 = vcmp.eq.s32.totalorder %v2711, 1
        %v2714 = vsel %vm2712, %v2709, 0.0
        %v2715 = vsel %vm2713, %v2706, 0.0
        %2716 = vrot.lane.b32.xlu0 %v2419, 1
        %v2717 = vpop.permute.xlu0 %2716
        %2718 = vrot.lane.b32.xlu0 %v2579, 1
        %v2719 = vpop.permute.xlu0 %2718
        %v2720 = vsel %vm1183, %v2717, %v2719
        %v2723 = vsel %vm1183, 0.0, %v2717
        %v2724 = vsel %vm2643, 1, 0
        %v2725 = vsel %vm2644, 1, 0
        %vm2726 = vcmp.eq.s32.totalorder %v2724, 1
        %vm2727 = vcmp.eq.s32.totalorder %v2725, 1
        %v2728 = vsel %vm2726, %v2723, 0.0
        %v2729 = vsel %vm2727, %v2720, 0.0
        %2730 = vrot.lane.b32.xlu0 %v2419, 127
        %v2731 = vpop.permute.xlu0 %2730
        %2732 = vrot.lane.b32.xlu0 %v2579, 127
        %v2733 = vpop.permute.xlu0 %2732
        %v2734 = vsel %vm1240, %v2731, %v2733
        %v2737 = vsel %vm1240, %v2733, 0.0
        %v2738 = vsel %vm2653, 1, 0
        %v2739 = vsel %vm2654, 1, 0
        %vm2740 = vcmp.eq.s32.totalorder %v2738, 1
        %vm2741 = vcmp.eq.s32.totalorder %v2739, 1
        %v2742 = vsel %vm2740, %v2734, 0.0
        %v2743 = vsel %vm2741, %v2737, 0.0
        %2744 = vrot.lane.b32.xlu0 %v2419, 121
        %v2745 = vpop.permute.xlu0 %2744
        %2746 = vrot.lane.b32.xlu0 %v2579, 121
        %v2747 = vpop.permute.xlu0 %2746
        %vm2748 = vcmask 990208
        %v2749 = vsel %vm2748, %v2745, %v2747
        %v2752 = vsel %vm2748, %v2747, 0.0
        %v2753 = vsel %vm2665, 1, 0
        %v2754 = vsel %vm2666, 1, 0
        %vm2755 = vcmp.eq.s32.totalorder %v2753, 1
        %vm2756 = vcmp.eq.s32.totalorder %v2754, 1
        %v2757 = vsel %vm2755, %v2749, 0.0
        %v2758 = vsel %vm2756, %v2752, 0.0
        %2759 = vrot.lane.b32.xlu0 %v2419, 120
        %v2760 = vpop.permute.xlu0 %2759
        %2761 = vrot.lane.b32.xlu0 %v2579, 120
        %v2762 = vpop.permute.xlu0 %2761
        %vm2763 = vcmask 982016
        %v2764 = vsel %vm2763, %v2760, %v2762
        %v2767 = vsel %vm2763, %v2762, 0.0
        %v2768 = vsel %vm2663, 1, 0
        %v2769 = vsel %vm2664, 1, 0
        %vm2770 = vcmp.eq.s32.totalorder %v2768, 1
        %vm2771 = vcmp.eq.s32.totalorder %v2769, 1
        %v2772 = vsel %vm2770, %v2764, 0.0
        %v2773 = vsel %vm2771, %v2767, 0.0
        %2774 = vrot.lane.b32.xlu0 %v2419, 119
        %v2775 = vpop.permute.xlu0 %2774
        %2776 = vrot.lane.b32.xlu0 %v2579, 119
        %v2777 = vpop.permute.xlu0 %2776
        %vm2778 = vcmask 973824
        %v2779 = vsel %vm2778, %v2775, %v2777
        %v2782 = vsel %vm2778, %v2777, 0.0
        %v2783 = vsel %vm2667, 1, 0
        %v2784 = vsel %vm2668, 1, 0
        %vm2785 = vcmp.eq.s32.totalorder %v2783, 1
        %vm2786 = vcmp.eq.s32.totalorder %v2784, 1
        %v2787 = vsel %vm2785, %v2779, 0.0
        %v2788 = vsel %vm2786, %v2782, 0.0
        %2790 = vset.pattern.permute.xlu0 0
        %2791 = vperm.xlu0 %2790, %v2583
        %v2792 = vpop.permute.xlu0 %2791
        %2795 = vset.pattern.permute.xlu0 0
        %2796 = vperm.xlu0 %2795, %v2584
        %v2797 = vpop.permute.xlu0 %2796
        %v2800 = vsel %vm1457, %v2581, 0
        %v2803 = vsel %vm1457, %v2582, 0
        %2805 = vmatpush.msra.mxu0 0.0
        %2806 = vmatpush.msra.mxu0 0.0
        %2807 = vmatpush.msra.mxu0 0.0
        %2808 = vmatpush.msra.mxu0 0.0
        %2809 = vmatpush.msra.mxu0 0.0
        %2810 = vmatpush.msra.mxu0 0.0
        %2811 = vmatpush.msra.mxu0 0.0
        %2812 = vmatpush.msra.mxu0 %v2787
        %2813 = vmatpush.msra.mxu0 %v2772
        %2814 = vmatpush.msra.mxu0 %v2757
        %2815 = vmatpush.msra.mxu0 %v2742
        %2816 = vmatpush.msra.mxu0 %v2419
        %2817 = vmatpush.msra.mxu0 %v2728
        %2818 = vmatpush.msra.mxu0 %v2714
        %2819 = vmatpush.msra.mxu0 %v2699
        %2820 = vmatpush.msra.mxu0 %v2684
        %2821 = vmatmul.f32.gmra.mxu0 %v2800
        %v2822 = vpop.f32.mrf.mxu0
        %v2823 = vadd.f32 %v2792, %v2822
        %2824 = vmatmul.f32.gmra.mxu0 %v2803
        %v2825 = vpop.f32.mrf.mxu0
        %v2826 = vadd.f32 %v2797, %v2825
        %2827 = vdwg.mxu0
        %2828 = vmatpush.msra.mxu0 0.0
        %2829 = vmatpush.msra.mxu0 0.0
        %2830 = vmatpush.msra.mxu0 0.0
        %2831 = vmatpush.msra.mxu0 0.0
        %2832 = vmatpush.msra.mxu0 0.0
        %2833 = vmatpush.msra.mxu0 0.0
        %2834 = vmatpush.msra.mxu0 0.0
        %2835 = vmatpush.msra.mxu0 %v2788
        %2836 = vmatpush.msra.mxu0 %v2773
        %2837 = vmatpush.msra.mxu0 %v2758
        %2838 = vmatpush.msra.mxu0 %v2743
        %2839 = vmatpush.msra.mxu0 %v2579
        %2840 = vmatpush.msra.mxu0 %v2729
        %2841 = vmatpush.msra.mxu0 %v2715
        %2842 = vmatpush.msra.mxu0 %v2700
        %2843 = vmatpush.msra.mxu0 %v2685
        %2844 = vmatmul.f32.gmra.mxu0 %v2800
        %v2845 = vpop.f32.mrf.mxu0
        %v2846 = vadd.f32 %v2792, %v2845
        %2847 = vmatmul.f32.gmra.mxu0 %v2803
        %v2848 = vpop.f32.mrf.mxu0
        %v2849 = vadd.f32 %v2797, %v2848
        %2850 = vdwg.mxu0
        %v2851 = vmax.f32 %v2823, 0.0
        %v2852 = vmax.f32 %v2846, 0.0
        %v2853 = vmax.f32 %v2826, 0.0
        %v2854 = vmax.f32 %v2849, 0.0
        %2859 = vrot.lane.b32.xlu0 %v2851, 9
        %v2860 = vpop.permute.xlu0 %2859
        %2861 = vrot.lane.b32.xlu0 %v2852, 9
        %v2862 = vpop.permute.xlu0 %2861
        %2863 = vrot.lane.b32.xlu0 %v2853, 9
        %v2864 = vpop.permute.xlu0 %2863
        %2865 = vrot.lane.b32.xlu0 %v2854, 9
        %v2866 = vpop.permute.xlu0 %2865
        %v2867 = vsel %vm2675, %v2860, %v2862
        %v2868 = vsel %vm2675, %v2864, %v2866
        %v2873 = vsel %vm2675, 0.0, %v2860
        %v2874 = vsel %vm2675, 0.0, %v2864
        %v2875 = vsel %vm2682, %v2873, 0.0
        %v2876 = vsel %vm2683, %v2867, 0.0
        %v2877 = vsel %vm2682, %v2874, 0.0
        %v2878 = vsel %vm2683, %v2868, 0.0
        %2879 = vrot.lane.b32.xlu0 %v2851, 8
        %v2880 = vpop.permute.xlu0 %2879
        %2881 = vrot.lane.b32.xlu0 %v2852, 8
        %v2882 = vpop.permute.xlu0 %2881
        %2883 = vrot.lane.b32.xlu0 %v2853, 8
        %v2884 = vpop.permute.xlu0 %2883
        %2885 = vrot.lane.b32.xlu0 %v2854, 8
        %v2886 = vpop.permute.xlu0 %2885
        %v2887 = vsel %vm2690, %v2880, %v2882
        %v2888 = vsel %vm2690, %v2884, %v2886
        %v2893 = vsel %vm2690, 0.0, %v2880
        %v2894 = vsel %vm2690, 0.0, %v2884
        %v2895 = vsel %vm2697, %v2893, 0.0
        %v2896 = vsel %vm2698, %v2887, 0.0
        %v2897 = vsel %vm2697, %v2894, 0.0
        %v2898 = vsel %vm2698, %v2888, 0.0
        %2899 = vrot.lane.b32.xlu0 %v2851, 7
        %v2900 = vpop.permute.xlu0 %2899
        %2901 = vrot.lane.b32.xlu0 %v2852, 7
        %v2902 = vpop.permute.xlu0 %2901
        %2903 = vrot.lane.b32.xlu0 %v2853, 7
        %v2904 = vpop.permute.xlu0 %2903
        %2905 = vrot.lane.b32.xlu0 %v2854, 7
        %v2906 = vpop.permute.xlu0 %2905
        %v2907 = vsel %vm2705, %v2900, %v2902
        %v2908 = vsel %vm2705, %v2904, %v2906
        %v2913 = vsel %vm2705, 0.0, %v2900
        %v2914 = vsel %vm2705, 0.0, %v2904
        %v2915 = vsel %vm2712, %v2913, 0.0
        %v2916 = vsel %vm2713, %v2907, 0.0
        %v2917 = vsel %vm2712, %v2914, 0.0
        %v2918 = vsel %vm2713, %v2908, 0.0
        %2919 = vrot.lane.b32.xlu0 %v2851, 1
        %v2920 = vpop.permute.xlu0 %2919
        %2921 = vrot.lane.b32.xlu0 %v2852, 1
        %v2922 = vpop.permute.xlu0 %2921
        %2923 = vrot.lane.b32.xlu0 %v2853, 1
        %v2924 = vpop.permute.xlu0 %2923
        %2925 = vrot.lane.b32.xlu0 %v2854, 1
        %v2926 = vpop.permute.xlu0 %2925
        %v2927 = vsel %vm1183, %v2920, %v2922
        %v2928 = vsel %vm1183, %v2924, %v2926
        %v2933 = vsel %vm1183, 0.0, %v2920
        %v2934 = vsel %vm1183, 0.0, %v2924
        %v2935 = vsel %vm2726, %v2933, 0.0
        %v2936 = vsel %vm2727, %v2927, 0.0
        %v2937 = vsel %vm2726, %v2934, 0.0
        %v2938 = vsel %vm2727, %v2928, 0.0
        %2939 = vrot.lane.b32.xlu0 %v2851, 127
        %v2940 = vpop.permute.xlu0 %2939
        %2941 = vrot.lane.b32.xlu0 %v2852, 127
        %v2942 = vpop.permute.xlu0 %2941
        %2943 = vrot.lane.b32.xlu0 %v2853, 127
        %v2944 = vpop.permute.xlu0 %2943
        %2945 = vrot.lane.b32.xlu0 %v2854, 127
        %v2946 = vpop.permute.xlu0 %2945
        %v2947 = vsel %vm1240, %v2940, %v2942
        %v2948 = vsel %vm1240, %v2944, %v2946
        %v2953 = vsel %vm1240, %v2942, 0.0
        %v2954 = vsel %vm1240, %v2946, 0.0
        %v2955 = vsel %vm2740, %v2947, 0.0
        %v2956 = vsel %vm2741, %v2953, 0.0
        %v2957 = vsel %vm2740, %v2948, 0.0
        %v2958 = vsel %vm2741, %v2954, 0.0
        %2959 = vrot.lane.b32.xlu0 %v2851, 121
        %v2960 = vpop.permute.xlu0 %2959
        %2961 = vrot.lane.b32.xlu0 %v2852, 121
        %v2962 = vpop.permute.xlu0 %2961
        %2963 = vrot.lane.b32.xlu0 %v2853, 121
        %v2964 = vpop.permute.xlu0 %2963
        %2965 = vrot.lane.b32.xlu0 %v2854, 121
        %v2966 = vpop.permute.xlu0 %2965
        %v2967 = vsel %vm2748, %v2960, %v2962
        %v2968 = vsel %vm2748, %v2964, %v2966
        %v2973 = vsel %vm2748, %v2962, 0.0
        %v2974 = vsel %vm2748, %v2966, 0.0
        %v2975 = vsel %vm2755, %v2967, 0.0
        %v2976 = vsel %vm2756, %v2973, 0.0
        %v2977 = vsel %vm2755, %v2968, 0.0
        %v2978 = vsel %vm2756, %v2974, 0.0
        %2979 = vrot.lane.b32.xlu0 %v2851, 120
        %v2980 = vpop.permute.xlu0 %2979
        %2981 = vrot.lane.b32.xlu0 %v2852, 120
        %v2982 = vpop.permute.xlu0 %2981
        %2983 = vrot.lane.b32.xlu0 %v2853, 120
        %v2984 = vpop.permute.xlu0 %2983
        %2985 = vrot.lane.b32.xlu0 %v2854, 120
        %v2986 = vpop.permute.xlu0 %2985
        %v2987 = vsel %vm2763, %v2980, %v2982
        %v2988 = vsel %vm2763, %v2984, %v2986
        %v2993 = vsel %vm2763, %v2982, 0.0
        %v2994 = vsel %vm2763, %v2986, 0.0
        %v2995 = vsel %vm2770, %v2987, 0.0
        %v2996 = vsel %vm2771, %v2993, 0.0
        %v2997 = vsel %vm2770, %v2988, 0.0
        %v2998 = vsel %vm2771, %v2994, 0.0
        %2999 = vrot.lane.b32.xlu0 %v2851, 119
        %v3000 = vpop.permute.xlu0 %2999
        %3001 = vrot.lane.b32.xlu0 %v2852, 119
        %v3002 = vpop.permute.xlu0 %3001
        %3003 = vrot.lane.b32.xlu0 %v2853, 119
        %v3004 = vpop.permute.xlu0 %3003
        %3005 = vrot.lane.b32.xlu0 %v2854, 119
        %v3006 = vpop.permute.xlu0 %3005
        %v3007 = vsel %vm2778, %v3000, %v3002
        %v3008 = vsel %vm2778, %v3004, %v3006
        %v3013 = vsel %vm2778, %v3002, 0.0
        %v3014 = vsel %vm2778, %v3006, 0.0
        %v3015 = vsel %vm2785, %v3007, 0.0
        %v3016 = vsel %vm2786, %v3013, 0.0
        %v3017 = vsel %vm2785, %v3008, 0.0
        %v3018 = vsel %vm2786, %v3014, 0.0
        %3020 = vset.pattern.permute.xlu0 0
        %3021 = vperm.xlu0 %3020, %v2589
        %v3022 = vpop.permute.xlu0 %3021
        %3025 = vset.pattern.permute.xlu0 0
        %3026 = vperm.xlu0 %3025, %v2590
        %v3027 = vpop.permute.xlu0 %3026
        %v3030 = vsel %vm1069, %v2586, 0
        %v3033 = vsel %vm1069, %v2588, 0
        %3035 = vmatpush.msra.mxu0 %v2997
        %3036 = vmatpush.msra.mxu0 %v2995
        %3037 = vmatpush.msra.mxu0 %v2977
        %3038 = vmatpush.msra.mxu0 %v2975
        %3039 = vmatpush.msra.mxu0 %v2957
        %3040 = vmatpush.msra.mxu0 %v2955
        %3041 = vmatpush.msra.mxu0 %v2853
        %3042 = vmatpush.msra.mxu0 %v2851
        %3043 = vmatpush.msra.mxu0 %v2937
        %3044 = vmatpush.msra.mxu0 %v2935
        %3045 = vmatpush.msra.mxu0 %v2917
        %3046 = vmatpush.msra.mxu0 %v2915
        %3047 = vmatpush.msra.mxu0 %v2897
        %3048 = vmatpush.msra.mxu0 %v2895
        %3049 = vmatpush.msra.mxu0 %v2877
        %3050 = vmatpush.msra.mxu0 %v2875
        %3051 = vmatmul.f32.gmra.mxu0 %v2585
        %v3052 = vpop.f32.mrf.mxu0
        %v3053 = vadd.f32 %v3022, %v3052
        %3054 = vmatmul.f32.gmra.mxu0 %v2587
        %v3055 = vpop.f32.mrf.mxu0
        %v3056 = vadd.f32 %v3027, %v3055
        %3057 = vdwg.mxu0
        %3058 = vmatpush.msra.mxu0 0.0
        %3059 = vmatpush.msra.mxu0 0.0
        %3060 = vmatpush.msra.mxu0 0.0
        %3061 = vmatpush.msra.mxu0 0.0
        %3062 = vmatpush.msra.mxu0 0.0
        %3063 = vmatpush.msra.mxu0 0.0
        %3064 = vmatpush.msra.mxu0 0.0
        %3065 = vmatpush.msra.mxu0 0.0
        %3066 = vmatpush.msra.mxu0 0.0
        %3067 = vmatpush.msra.mxu0 0.0
        %3068 = vmatpush.msra.mxu0 0.0
        %3069 = vmatpush.msra.mxu0 0.0
        %3070 = vmatpush.msra.mxu0 0.0
        %3071 = vmatpush.msra.mxu0 0.0
        %3072 = vmatpush.msra.mxu0 %v3017
        %3073 = vmatpush.msra.mxu0 %v3015
        %3074 = vmatmul.f32.gmra.mxu0 %v3030
        %v3075 = vpop.f32.mrf.mxu0
        %v3076 = vadd.f32 %v3053, %v3075
        %3077 = vmatmul.f32.gmra.mxu0 %v3033
        %v3078 = vpop.f32.mrf.mxu0
        %v3079 = vadd.f32 %v3056, %v3078
        %3080 = vdwg.mxu0
        %3081 = vmatpush.msra.mxu0 %v2998
        %3082 = vmatpush.msra.mxu0 %v2996
        %3083 = vmatpush.msra.mxu0 %v2978
        %3084 = vmatpush.msra.mxu0 %v2976
        %3085 = vmatpush.msra.mxu0 %v2958
        %3086 = vmatpush.msra.mxu0 %v2956
        %3087 = vmatpush.msra.mxu0 %v2854
        %3088 = vmatpush.msra.mxu0 %v2852
        %3089 = vmatpush.msra.mxu0 %v2938
        %3090 = vmatpush.msra.mxu0 %v2936
        %3091 = vmatpush.msra.mxu0 %v2918
        %3092 = vmatpush.msra.mxu0 %v2916
        %3093 = vmatpush.msra.mxu0 %v2898
        %3094 = vmatpush.msra.mxu0 %v2896
        %3095 = vmatpush.msra.mxu0 %v2878
        %3096 = vmatpush.msra.mxu0 %v2876
        %3097 = vmatmul.f32.gmra.mxu0 %v2585
        %v3098 = vpop.f32.mrf.mxu0
        %v3099 = vadd.f32 %v3022, %v3098
        %3100 = vmatmul.f32.gmra.mxu0 %v2587
        %v3101 = vpop.f32.mrf.mxu0
        %v3102 = vadd.f32 %v3027, %v3101
        %3103 = vdwg.mxu0
        %3104 = vmatpush.msra.mxu0 0.0
        %3105 = vmatpush.msra.mxu0 0.0
        %3106 = vmatpush.msra.mxu0 0.0
        %3107 = vmatpush.msra.mxu0 0.0
        %3108 = vmatpush.msra.mxu0 0.0
        %3109 = vmatpush.msra.mxu0 0.0
        %3110 = vmatpush.msra.mxu0 0.0
        %3111 = vmatpush.msra.mxu0 0.0
        %3112 = vmatpush.msra.mxu0 0.0
        %3113 = vmatpush.msra.mxu0 0.0
        %3114 = vmatpush.msra.mxu0 0.0
        %3115 = vmatpush.msra.mxu0 0.0
        %3116 = vmatpush.msra.mxu0 0.0
        %3117 = vmatpush.msra.mxu0 0.0
        %3118 = vmatpush.msra.mxu0 %v3018
        %3119 = vmatpush.msra.mxu0 %v3016
        %3120 = vmatmul.f32.gmra.mxu0 %v3030
        %v3121 = vpop.f32.mrf.mxu0
        %v3122 = vadd.f32 %v3099, %v3121
        %3123 = vmatmul.f32.gmra.mxu0 %v3033
        %v3124 = vpop.f32.mrf.mxu0
        %v3125 = vadd.f32 %v3102, %v3124
        %3126 = vdwg.mxu0
        %v3127 = vmax.f32 %v3076, 0.0
        %v3128 = vmax.f32 %v3122, 0.0
        %v3129 = vmax.f32 %v3079, 0.0
        %v3130 = vmax.f32 %v3125, 0.0
        %3135 = vrot.lane.b32.xlu0 %v3127, 127
        %v3136 = vpop.permute.xlu0 %3135
        %3137 = vrot.lane.b32.xlu0 %v3128, 127
        %v3138 = vpop.permute.xlu0 %3137
        %3139 = vrot.lane.b32.xlu0 %v3129, 127
        %v3140 = vpop.permute.xlu0 %3139
        %3141 = vrot.lane.b32.xlu0 %v3130, 127
        %v3142 = vpop.permute.xlu0 %3141
        %v3143 = vsel %vm1240, %v3136, %v3138
        %v3144 = vsel %vm1240, %v3140, %v3142
        %v3149 = vsel %vm1240, %v3138, 0.0
        %v3150 = vsel %vm1240, %v3142, 0.0
        %v3151 = vmax.f32 %v3127, %v3143
        %v3152 = vmax.f32 %v3128, %v3149
        %v3153 = vmax.f32 %v3129, %v3144
        %v3154 = vmax.f32 %v3130, %v3150
        %3155 = vrot.lane.b32.xlu0 %v3127, 120
        %v3156 = vpop.permute.xlu0 %3155
        %3157 = vrot.lane.b32.xlu0 %v3128, 120
        %v3158 = vpop.permute.xlu0 %3157
        %3159 = vrot.lane.b32.xlu0 %v3129, 120
        %v3160 = vpop.permute.xlu0 %3159
        %3161 = vrot.lane.b32.xlu0 %v3130, 120
        %v3162 = vpop.permute.xlu0 %3161
        %v3163 = vsel %vm2763, %v3156, %v3158
        %v3164 = vsel %vm2763, %v3160, %v3162
        %v3169 = vsel %vm2763, %v3158, 0.0
        %v3170 = vsel %vm2763, %v3162, 0.0
        %3171 = vrot.lane.b32.xlu0 %v3127, 119
        %v3172 = vpop.permute.xlu0 %3171
        %3173 = vrot.lane.b32.xlu0 %v3128, 119
        %v3174 = vpop.permute.xlu0 %3173
        %3175 = vrot.lane.b32.xlu0 %v3129, 119
        %v3176 = vpop.permute.xlu0 %3175
        %3177 = vrot.lane.b32.xlu0 %v3130, 119
        %v3178 = vpop.permute.xlu0 %3177
        %v3179 = vsel %vm2778, %v3172, %v3174
        %v3180 = vsel %vm2778, %v3176, %v3178
        %v3185 = vsel %vm2778, %v3174, 0.0
        %v3186 = vsel %vm2778, %v3178, 0.0
        %v3187 = vmax.f32 %v3163, %v3179
        %v3188 = vmax.f32 %v3169, %v3185
        %v3189 = vmax.f32 %v3164, %v3180
        %v3190 = vmax.f32 %v3170, %v3186
        %v3191 = vmax.f32 %v3151, %v3187
        %v3192 = vmax.f32 %v3152, %v3188
        %v3193 = vmax.f32 %v3153, %v3189
        %v3194 = vmax.f32 %v3154, %v3190
        %3195 = vmatpush.msra.mxu0 %v2606
        %3196 = vmatpush.msra.mxu0 %v2605
        %3197 = vmatpush.msra.mxu0 %v2604
        %3198 = vmatpush.msra.mxu0 %v2603
        %3199 = vmatpush.msra.mxu0 %v2602
        %3200 = vmatpush.msra.mxu0 %v2601
        %3201 = vmatpush.msra.mxu0 %v2600
        %3202 = vmatpush.msra.mxu0 %v2599
        %3203 = vmatpush.msra.mxu0 %v2598
        %3204 = vmatpush.msra.mxu0 %v2597
        %3205 = vmatpush.msra.mxu0 %v2596
        %3206 = vmatpush.msra.mxu0 %v2595
        %3207 = vmatpush.msra.mxu0 %v2594
        %3208 = vmatpush.msra.mxu0 %v2593
        %3209 = vmatpush.msra.mxu0 %v2592
        %3210 = vmatpush.msra.mxu0 %v2591
        %3211 = vmatmul.f32.gmra.mxu0 %v3191
        %v3212 = vpop.f32.mrf.mxu0
        %v3213 = vadd.f32 0.0, %v3212
        %3214 = vmatmul.f32.gmra.mxu0 %v3193
        %v3215 = vpop.f32.mrf.mxu0
        %v3216 = vadd.f32 0.0, %v3215
        %3217 = vdwg.mxu0
        %3218 = vmatpush.msra.mxu0 %v2622
        %3219 = vmatpush.msra.mxu0 %v2621
        %3220 = vmatpush.msra.mxu0 %v2620
        %3221 = vmatpush.msra.mxu0 %v2619
        %3222 = vmatpush.msra.mxu0 %v2618
        %3223 = vmatpush.msra.mxu0 %v2617
        %3224 = vmatpush.msra.mxu0 %v2616
        %3225 = vmatpush.msra.mxu0 %v2615
        %3226 = vmatpush.msra.mxu0 %v2614
        %3227 = vmatpush.msra.mxu0 %v2613
        %3228 = vmatpush.msra.mxu0 %v2612
        %3229 = vmatpush.msra.mxu0 %v2611
        %3230 = vmatpush.msra.mxu0 %v2610
        %3231 = vmatpush.msra.mxu0 %v2609
        %3232 = vmatpush.msra.mxu0 %v2608
        %3233 = vmatpush.msra.mxu0 %v2607
        %3234 = vmatmul.f32.gmra.mxu0 %v3192
        %v3235 = vpop.f32.mrf.mxu0
        %v3236 = vadd.f32 %v3213, %v3235
        %3237 = vmatmul.f32.gmra.mxu0 %v3194
        %v3238 = vpop.f32.mrf.mxu0
        %v3239 = vadd.f32 %v3216, %v3238
        %3240 = vdwg.mxu0
        %v3242 = vrot.slane %v3236, 1
        %3243 = vrot.lane.b32.xlu0 %v3242, 64
        %v3244 = vpop.permute.xlu0 %3243
        %v3246 = vrot.slane %v3236, 2
        %v3248 = vrot.slane %v3236, 3
        %3249 = vrot.lane.b32.xlu0 %v3248, 64
        %v3250 = vpop.permute.xlu0 %3249
        %v3252 = vrot.slane %v3236, 4
        %v3254 = vrot.slane %v3236, 5
        %3255 = vrot.lane.b32.xlu0 %v3254, 64
        %v3256 = vpop.permute.xlu0 %3255
        %v3258 = vrot.slane %v3236, 6
        %v3260 = vrot.slane %v3236, 7
        %3261 = vrot.lane.b32.xlu0 %v3260, 64
        %v3262 = vpop.permute.xlu0 %3261
        %v3265 = vrot.slane %v3239, 1
        %3266 = vrot.lane.b32.xlu0 %v3265, 64
        %v3267 = vpop.permute.xlu0 %3266
        %v3269 = vrot.slane %v3239, 2
        %v3271 = vrot.slane %v3239, 3
        %3272 = vrot.lane.b32.xlu0 %v3271, 64
        %v3273 = vpop.permute.xlu0 %3272
        %v3275 = vrot.slane %v3239, 4
        %v3277 = vrot.slane %v3239, 5
        %3278 = vrot.lane.b32.xlu0 %v3277, 64
        %v3279 = vpop.permute.xlu0 %3278
        %v3281 = vrot.slane %v3239, 6
        %v3283 = vrot.slane %v3239, 7
        %3284 = vrot.lane.b32.xlu0 %v3283, 64
        %v3285 = vpop.permute.xlu0 %3284
        %vm3287 = vcmask 523264
        %v3288 = vsel %vm3287, %v3236, %v3244
        %v3289 = vsel %vm3287, %v3246, %v3250
        %v3290 = vsel %vm3287, %v3252, %v3256
        %v3291 = vsel %vm3287, %v3258, %v3262
        %v3292 = vsel %vm3287, %v3239, %v3267
        %v3293 = vsel %vm3287, %v3269, %v3273
        %v3294 = vsel %vm3287, %v3275, %v3279
        %v3295 = vsel %vm3287, %v3281, %v3285
        %v3296 = vld [vmem:[#allocation5] sm:$0xff]
        %v3297 = vld [vmem:[#allocation5 + $0x8] sm:$0xff]
        %v3298 = vld [vmem:[#allocation5 + $0x10] sm:$0xff]
        %v3299 = vld [vmem:[#allocation5 + $0x18] sm:$0xff]
        %v3300 = vld [vmem:[#allocation5 + $0x20] sm:$0xff]
        %v3301 = vld [vmem:[#allocation5 + $0x28] sm:$0xff]
        %v3302 = vld [vmem:[#allocation5 + $0x30] sm:$0xff]
        %v3303 = vld [vmem:[#allocation5 + $0x38] sm:$0xff]
        %v3304 = vld [vmem:[#allocation5 + $0x40] sm:$0xff]
        %v3305 = vld [vmem:[#allocation5 + $0x48] sm:$0xff]
        %v3306 = vld [vmem:[#allocation5 + $0x50] sm:$0xff]
        %v3307 = vld [vmem:[#allocation5 + $0x58] sm:$0xff]
        %v3308 = vld [vmem:[#allocation5 + $0x60] sm:$0xff]
        %v3309 = vld [vmem:[#allocation5 + $0x68] sm:$0xff]
        %v3310 = vld [vmem:[#allocation5 + $0x70] sm:$0xff]
        %v3311 = vld [vmem:[#allocation5 + $0x78] sm:$0xff]
        %v3312 = vld [vmem:[#allocation5 + $0x80] sm:$0xff]
        %v3313 = vld [vmem:[#allocation5 + $0x88] sm:$0xff]
        %v3314 = vld [vmem:[#allocation5 + $0x90] sm:$0xff]
        %v3315 = vld [vmem:[#allocation5 + $0x98] sm:$0xff]
        %v3316 = vld [vmem:[#allocation5 + $0xa0] sm:$0xff]
        %v3317 = vld [vmem:[#allocation5 + $0xa8] sm:$0xff]
        %v3318 = vld [vmem:[#allocation5 + $0xb0] sm:$0xff]
        %v3319 = vld [vmem:[#allocation5 + $0xb8] sm:$0xff]
        %v3320 = vld [vmem:[#allocation5 + $0xc0] sm:$0xff]
        %v3321 = vld [vmem:[#allocation5 + $0xc8] sm:$0xff]
        %v3322 = vld [vmem:[#allocation5 + $0xd0] sm:$0xff]
        %v3323 = vld [vmem:[#allocation5 + $0xd8] sm:$0xff]
        %v3324 = vld [vmem:[#allocation5 + $0xe0] sm:$0xff]
        %v3325 = vld [vmem:[#allocation5 + $0xe8] sm:$0xff]
        %v3326 = vld [vmem:[#allocation5 + $0xf0] sm:$0xff]
        %v3327 = vld [vmem:[#allocation5 + $0xf8] sm:$0xff]
        %v3328 = vld [vmem:[#allocation5 + $0x100] sm:$0xff]
        %v3329 = vld [vmem:[#allocation5 + $0x108] sm:$0xff]
        %v3330 = vld [vmem:[#allocation5 + $0x110] sm:$0xff]
        %v3331 = vld [vmem:[#allocation5 + $0x118] sm:$0xff]
        %v3332 = vld [vmem:[#allocation5 + $0x120] sm:$0xff]
        %v3333 = vld [vmem:[#allocation5 + $0x128] sm:$0xff]
        %v3334 = vld [vmem:[#allocation5 + $0x130] sm:$0xff]
        %v3335 = vld [vmem:[#allocation5 + $0x138] sm:$0xff]
        %v3336 = vld [vmem:[#allocation5 + $0x140] sm:$0xff]
        %v3337 = vld [vmem:[#allocation5 + $0x148] sm:$0xff]
        %v3338 = vld [vmem:[#allocation5 + $0x150] sm:$0xff]
        %v3339 = vld [vmem:[#allocation5 + $0x158] sm:$0xff]
        %v3340 = vld [vmem:[#allocation5 + $0x160] sm:$0xff]
        %v3341 = vld [vmem:[#allocation5 + $0x168] sm:$0xff]
        %v3342 = vld [vmem:[#allocation5 + $0x170] sm:$0xff]
        %v3343 = vld [vmem:[#allocation5 + $0x178] sm:$0xff]
        %v3344 = vld [vmem:[#allocation5 + $0x180] sm:$0xff]
        %v3345 = vld [vmem:[#allocation5 + $0x188] sm:$0xff]
        %v3346 = vld [vmem:[#allocation5 + $0x190] sm:$0xff]
        %v3347 = vld [vmem:[#allocation5 + $0x198] sm:$0xff]
        %v3348 = vld [vmem:[#allocation5 + $0x1a0] sm:$0xff]
        %v3349 = vld [vmem:[#allocation5 + $0x1a8] sm:$0xff]
        %v3350 = vld [vmem:[#allocation5 + $0x1b0] sm:$0xff]
        %v3351 = vld [vmem:[#allocation5 + $0x1b8] sm:$0xff]
        %v3352 = vld [vmem:[#allocation5 + $0x1c0] sm:$0xff]
        %v3353 = vld [vmem:[#allocation5 + $0x1c8] sm:$0xff]
        %v3354 = vld [vmem:[#allocation5 + $0x1d0] sm:$0xff]
        %v3355 = vld [vmem:[#allocation5 + $0x1d8] sm:$0xff]
        %v3356 = vld [vmem:[#allocation5 + $0x1e0] sm:$0xff]
        %v3357 = vld [vmem:[#allocation5 + $0x1e8] sm:$0xff]
        %v3358 = vld [vmem:[#allocation5 + $0x1f0] sm:$0xff]
        %v3359 = vld [vmem:[#allocation5 + $0x1f8] sm:$0xff]
        %v3360 = vld [vmem:[#allocation5 + $0x200] sm:$0xff]
        %v3361 = vld [vmem:[#allocation5 + $0x208] sm:$0xff]
        %v3362 = vld [vmem:[#allocation5 + $0x210] sm:$0xff]
        %v3363 = vld [vmem:[#allocation5 + $0x218] sm:$0xff]
        %v3364 = vld [vmem:[#allocation5 + $0x220] sm:$0xff]
        %v3365 = vld [vmem:[#allocation5 + $0x228] sm:$0xff]
        %v3366 = vld [vmem:[#allocation5 + $0x230] sm:$0xff]
        %v3367 = vld [vmem:[#allocation5 + $0x238] sm:$0xff]
        %v3368 = vld [vmem:[#allocation5 + $0x240] sm:$0xff]
        %v3369 = vld [vmem:[#allocation5 + $0x248] sm:$0xff]
        %v3370 = vld [vmem:[#allocation5 + $0x250] sm:$0xff]
        %v3371 = vld [vmem:[#allocation5 + $0x258] sm:$0xff]
        %v3372 = vld [vmem:[#allocation5 + $0x260] sm:$0xff]
        %v3373 = vld [vmem:[#allocation5 + $0x268] sm:$0xff]
        %v3374 = vld [vmem:[#allocation5 + $0x270] sm:$0xff]
        %v3375 = vld [vmem:[#allocation5 + $0x278] sm:$0xff]
        %v3376 = vld [vmem:[#allocation5 + $0x280] sm:$0xff]
        %v3377 = vld [vmem:[#allocation5 + $0x288] sm:$0xff]
        %v3378 = vld [vmem:[#allocation5 + $0x290] sm:$0xff]
        %v3379 = vld [vmem:[#allocation5 + $0x298] sm:$0xff]
        %v3380 = vld [vmem:[#allocation5 + $0x2a0] sm:$0xff]
        %v3381 = vld [vmem:[#allocation5 + $0x2a8] sm:$0xff]
        %v3382 = vld [vmem:[#allocation5 + $0x2b0] sm:$0xff]
        %v3383 = vld [vmem:[#allocation5 + $0x2b8] sm:$0xff]
        %v3384 = vld [vmem:[#allocation5 + $0x2c0] sm:$0xff]
        %v3385 = vld [vmem:[#allocation5 + $0x2c8] sm:$0xff]
        %v3386 = vld [vmem:[#allocation5 + $0x2d0] sm:$0xff]
        %v3387 = vld [vmem:[#allocation5 + $0x2d8] sm:$0xff]
        %v3388 = vld [vmem:[#allocation5 + $0x2e0] sm:$0xff]
        %v3389 = vld [vmem:[#allocation5 + $0x2e8] sm:$0xff]
        %v3390 = vld [vmem:[#allocation5 + $0x2f0] sm:$0xff]
        %v3391 = vld [vmem:[#allocation5 + $0x2f8] sm:$0xff]
        %v3392 = vld [vmem:[#allocation5 + $0x300] sm:$0xff]
        %v3393 = vld [vmem:[#allocation5 + $0x308] sm:$0xff]
        %v3394 = vld [vmem:[#allocation5 + $0x310] sm:$0xff]
        %v3395 = vld [vmem:[#allocation5 + $0x318] sm:$0xff]
        %v3396 = vld [vmem:[#allocation5 + $0x320] sm:$0xff]
        %v3397 = vld [vmem:[#allocation5 + $0x328] sm:$0xff]
        %v3398 = vld [vmem:[#allocation5 + $0x330] sm:$0xff]
        %v3399 = vld [vmem:[#allocation5 + $0x338] sm:$0xff]
        %v3400 = vld [vmem:[#allocation5 + $0x340] sm:$0xff]
        %v3401 = vld [vmem:[#allocation5 + $0x348] sm:$0xff]
        %v3402 = vld [vmem:[#allocation5 + $0x350] sm:$0xff]
        %v3403 = vld [vmem:[#allocation5 + $0x358] sm:$0xff]
        %v3404 = vld [vmem:[#allocation5 + $0x360] sm:$0xff]
        %v3405 = vld [vmem:[#allocation5 + $0x368] sm:$0xff]
        %v3406 = vld [vmem:[#allocation5 + $0x370] sm:$0xff]
        %v3407 = vld [vmem:[#allocation5 + $0x378] sm:$0xff]
        %v3408 = vld [vmem:[#allocation5 + $0x380] sm:$0xff]
        %v3409 = vld [vmem:[#allocation5 + $0x388] sm:$0xff]
        %v3410 = vld [vmem:[#allocation5 + $0x390] sm:$0xff]
        %v3411 = vld [vmem:[#allocation5 + $0x398] sm:$0xff]
        %v3412 = vld [vmem:[#allocation5 + $0x3a0] sm:$0xff]
        %v3413 = vld [vmem:[#allocation5 + $0x3a8] sm:$0xff]
        %v3414 = vld [vmem:[#allocation5 + $0x3b0] sm:$0xff]
        %v3415 = vld [vmem:[#allocation5 + $0x3b8] sm:$0xff]
        %v3416 = vld [vmem:[#allocation5 + $0x3c0] sm:$0xff]
        %v3417 = vld [vmem:[#allocation5 + $0x3c8] sm:$0xff]
        %v3418 = vld [vmem:[#allocation5 + $0x3d0] sm:$0xff]
        %v3419 = vld [vmem:[#allocation5 + $0x3d8] sm:$0xff]
        %v3420 = vld [vmem:[#allocation5 + $0x3e0] sm:$0xff]
        %v3421 = vld [vmem:[#allocation5 + $0x3e8] sm:$0xff]
        %v3422 = vld [vmem:[#allocation5 + $0x3f0] sm:$0xff]
        %v3423 = vld [vmem:[#allocation5 + $0x3f8] sm:$0xff]
        %v3424 = vld [vmem:[%s12] sm:$0x1]
        %3425 = vmatpush.msra.mxu0 %v3311
        %3426 = vmatpush.msra.mxu0 %v3310
        %3427 = vmatpush.msra.mxu0 %v3309
        %3428 = vmatpush.msra.mxu0 %v3308
        %3429 = vmatpush.msra.mxu0 %v3307
        %3430 = vmatpush.msra.mxu0 %v3306
        %3431 = vmatpush.msra.mxu0 %v3305
        %3432 = vmatpush.msra.mxu0 %v3304
        %3433 = vmatpush.msra.mxu0 %v3303
        %3434 = vmatpush.msra.mxu0 %v3302
        %3435 = vmatpush.msra.mxu0 %v3301
        %3436 = vmatpush.msra.mxu0 %v3300
        %3437 = vmatpush.msra.mxu0 %v3299
        %3438 = vmatpush.msra.mxu0 %v3298
        %3439 = vmatpush.msra.mxu0 %v3297
        %3440 = vmatpush.msra.mxu0 %v3296
        %3441 = vmatmul.f32.gmra.mxu0 %v3288
        %v3442 = vpop.f32.mrf.mxu0
        %v3443 = vadd.f32 %v3424, %v3442
        %3444 = vdwg.mxu0
        %3445 = vmatpush.msra.mxu0 %v3327
        %3446 = vmatpush.msra.mxu0 %v3326
        %3447 = vmatpush.msra.mxu0 %v3325
        %3448 = vmatpush.msra.mxu0 %v3324
        %3449 = vmatpush.msra.mxu0 %v3323
        %3450 = vmatpush.msra.mxu0 %v3322
        %3451 = vmatpush.msra.mxu0 %v3321
        %3452 = vmatpush.msra.mxu0 %v3320
        %3453 = vmatpush.msra.mxu0 %v3319
        %3454 = vmatpush.msra.mxu0 %v3318
        %3455 = vmatpush.msra.mxu0 %v3317
        %3456 = vmatpush.msra.mxu0 %v3316
        %3457 = vmatpush.msra.mxu0 %v3315
        %3458 = vmatpush.msra.mxu0 %v3314
        %3459 = vmatpush.msra.mxu0 %v3313
        %3460 = vmatpush.msra.mxu0 %v3312
        %3461 = vmatmul.f32.gmra.mxu0 %v3289
        %v3462 = vpop.f32.mrf.mxu0
        %v3463 = vadd.f32 %v3443, %v3462
        %3464 = vdwg.mxu0
        %3465 = vmatpush.msra.mxu0 %v3343
        %3466 = vmatpush.msra.mxu0 %v3342
        %3467 = vmatpush.msra.mxu0 %v3341
        %3468 = vmatpush.msra.mxu0 %v3340
        %3469 = vmatpush.msra.mxu0 %v3339
        %3470 = vmatpush.msra.mxu0 %v3338
        %3471 = vmatpush.msra.mxu0 %v3337
        %3472 = vmatpush.msra.mxu0 %v3336
        %3473 = vmatpush.msra.mxu0 %v3335
        %3474 = vmatpush.msra.mxu0 %v3334
        %3475 = vmatpush.msra.mxu0 %v3333
        %3476 = vmatpush.msra.mxu0 %v3332
        %3477 = vmatpush.msra.mxu0 %v3331
        %3478 = vmatpush.msra.mxu0 %v3330
        %3479 = vmatpush.msra.mxu0 %v3329
        %3480 = vmatpush.msra.mxu0 %v3328
        %3481 = vmatmul.f32.gmra.mxu0 %v3290
        %v3482 = vpop.f32.mrf.mxu0
        %v3483 = vadd.f32 %v3463, %v3482
        %3484 = vdwg.mxu0
        %3485 = vmatpush.msra.mxu0 %v3359
        %3486 = vmatpush.msra.mxu0 %v3358
        %3487 = vmatpush.msra.mxu0 %v3357
        %3488 = vmatpush.msra.mxu0 %v3356
        %3489 = vmatpush.msra.mxu0 %v3355
        %3490 = vmatpush.msra.mxu0 %v3354
        %3491 = vmatpush.msra.mxu0 %v3353
        %3492 = vmatpush.msra.mxu0 %v3352
        %3493 = vmatpush.msra.mxu0 %v3351
        %3494 = vmatpush.msra.mxu0 %v3350
        %3495 = vmatpush.msra.mxu0 %v3349
        %3496 = vmatpush.msra.mxu0 %v3348
        %3497 = vmatpush.msra.mxu0 %v3347
        %3498 = vmatpush.msra.mxu0 %v3346
        %3499 = vmatpush.msra.mxu0 %v3345
        %3500 = vmatpush.msra.mxu0 %v3344
        %3501 = vmatmul.f32.gmra.mxu0 %v3291
        %v3502 = vpop.f32.mrf.mxu0
        %v3503 = vadd.f32 %v3483, %v3502
        %3504 = vdwg.mxu0
        %3505 = vmatpush.msra.mxu0 %v3375
        %3506 = vmatpush.msra.mxu0 %v3374
        %3507 = vmatpush.msra.mxu0 %v3373
        %3508 = vmatpush.msra.mxu0 %v3372
        %3509 = vmatpush.msra.mxu0 %v3371
        %3510 = vmatpush.msra.mxu0 %v3370
        %3511 = vmatpush.msra.mxu0 %v3369
        %3512 = vmatpush.msra.mxu0 %v3368
        %3513 = vmatpush.msra.mxu0 %v3367
        %3514 = vmatpush.msra.mxu0 %v3366
        %3515 = vmatpush.msra.mxu0 %v3365
        %3516 = vmatpush.msra.mxu0 %v3364
        %3517 = vmatpush.msra.mxu0 %v3363
        %3518 = vmatpush.msra.mxu0 %v3362
        %3519 = vmatpush.msra.mxu0 %v3361
        %3520 = vmatpush.msra.mxu0 %v3360
        %3521 = vmatmul.f32.gmra.mxu0 %v3292
        %v3522 = vpop.f32.mrf.mxu0
        %v3523 = vadd.f32 %v3503, %v3522
        %3524 = vdwg.mxu0
        %3525 = vmatpush.msra.mxu0 %v3391
        %3526 = vmatpush.msra.mxu0 %v3390
        %3527 = vmatpush.msra.mxu0 %v3389
        %3528 = vmatpush.msra.mxu0 %v3388
        %3529 = vmatpush.msra.mxu0 %v3387
        %3530 = vmatpush.msra.mxu0 %v3386
        %3531 = vmatpush.msra.mxu0 %v3385
        %3532 = vmatpush.msra.mxu0 %v3384
        %3533 = vmatpush.msra.mxu0 %v3383
        %3534 = vmatpush.msra.mxu0 %v3382
        %3535 = vmatpush.msra.mxu0 %v3381
        %3536 = vmatpush.msra.mxu0 %v3380
        %3537 = vmatpush.msra.mxu0 %v3379
        %3538 = vmatpush.msra.mxu0 %v3378
        %3539 = vmatpush.msra.mxu0 %v3377
        %3540 = vmatpush.msra.mxu0 %v3376
        %3541 = vmatmul.f32.gmra.mxu0 %v3293
        %v3542 = vpop.f32.mrf.mxu0
        %v3543 = vadd.f32 %v3523, %v3542
        %3544 = vdwg.mxu0
        %3545 = vmatpush.msra.mxu0 %v3407
        %3546 = vmatpush.msra.mxu0 %v3406
        %3547 = vmatpush.msra.mxu0 %v3405
        %3548 = vmatpush.msra.mxu0 %v3404
        %3549 = vmatpush.msra.mxu0 %v3403
        %3550 = vmatpush.msra.mxu0 %v3402
        %3551 = vmatpush.msra.mxu0 %v3401
        %3552 = vmatpush.msra.mxu0 %v3400
        %3553 = vmatpush.msra.mxu0 %v3399
        %3554 = vmatpush.msra.mxu0 %v3398
        %3555 = vmatpush.msra.mxu0 %v3397
        %3556 = vmatpush.msra.mxu0 %v3396
        %3557 = vmatpush.msra.mxu0 %v3395
        %3558 = vmatpush.msra.mxu0 %v3394
        %3559 = vmatpush.msra.mxu0 %v3393
        %3560 = vmatpush.msra.mxu0 %v3392
        %3561 = vmatmul.f32.gmra.mxu0 %v3294
        %v3562 = vpop.f32.mrf.mxu0
        %v3563 = vadd.f32 %v3543, %v3562
        %3564 = vdwg.mxu0
        %3565 = vmatpush.msra.mxu0 %v3423
        %3566 = vmatpush.msra.mxu0 %v3422
        %3567 = vmatpush.msra.mxu0 %v3421
        %3568 = vmatpush.msra.mxu0 %v3420
        %3569 = vmatpush.msra.mxu0 %v3419
        %3570 = vmatpush.msra.mxu0 %v3418
        %3571 = vmatpush.msra.mxu0 %v3417
        %3572 = vmatpush.msra.mxu0 %v3416
        %3573 = vmatpush.msra.mxu0 %v3415
        %3574 = vmatpush.msra.mxu0 %v3414
        %3575 = vmatpush.msra.mxu0 %v3413
        %3576 = vmatpush.msra.mxu0 %v3412
        %3577 = vmatpush.msra.mxu0 %v3411
        %3578 = vmatpush.msra.mxu0 %v3410
        %3579 = vmatpush.msra.mxu0 %v3409
        %3580 = vmatpush.msra.mxu0 %v3408
        %3581 = vmatmul.f32.gmra.mxu0 %v3295
        %v3582 = vpop.f32.mrf.mxu0
        %v3583 = vadd.f32 %v3563, %v3582
        %3584 = vdwg.mxu0
        %v3585 = vmax.f32 %v3583, 0.0
        %v3586 = vld [vmem:[%s13] sm:$0xff]
        %v3587 = vld [vmem:[%s13 + $0x8] sm:$0xff]
        %v3588 = vld [vmem:[%s13 + $0x10] sm:$0xff]
        %v3589 = vld [vmem:[%s13 + $0x18] sm:$0xff]
        %v3590 = vld [vmem:[%s13 + $0x20] sm:$0xff]
        %v3591 = vld [vmem:[%s13 + $0x28] sm:$0xff]
        %v3592 = vld [vmem:[%s13 + $0x30] sm:$0xff]
        %v3593 = vld [vmem:[%s13 + $0x38] sm:$0xff]
        %v3594 = vld [vmem:[%s13 + $0x40] sm:$0xff]
        %v3595 = vld [vmem:[%s13 + $0x48] sm:$0xff]
        %v3596 = vld [vmem:[%s13 + $0x50] sm:$0xff]
        %v3597 = vld [vmem:[%s13 + $0x58] sm:$0xff]
        %v3598 = vld [vmem:[%s13 + $0x60] sm:$0xff]
        %v3599 = vld [vmem:[%s13 + $0x68] sm:$0xff]
        %v3600 = vld [vmem:[%s13 + $0x70] sm:$0xff]
        %v3601 = vld [vmem:[%s13 + $0x78] sm:$0xff]
        %v3602 = vld [vmem:[%s13 + $0x80] sm:$0xff]
        %v3603 = vld [vmem:[%s13 + $0x88] sm:$0xff]
        %v3604 = vld [vmem:[%s13 + $0x90] sm:$0xff]
        %v3605 = vld [vmem:[%s13 + $0x98] sm:$0xff]
        %v3606 = vld [vmem:[%s13 + $0xa0] sm:$0xff]
        %v3607 = vld [vmem:[%s13 + $0xa8] sm:$0xff]
        %v3608 = vld [vmem:[%s13 + $0xb0] sm:$0xff]
        %v3609 = vld [vmem:[%s13 + $0xb8] sm:$0xff]
        %v3610 = vld [vmem:[%s13 + $0xc0] sm:$0xff]
        %v3611 = vld [vmem:[%s13 + $0xc8] sm:$0xff]
        %v3612 = vld [vmem:[%s13 + $0xd0] sm:$0xff]
        %v3613 = vld [vmem:[%s13 + $0xd8] sm:$0xff]
        %v3614 = vld [vmem:[%s13 + $0xe0] sm:$0xff]
        %v3615 = vld [vmem:[%s13 + $0xe8] sm:$0xff]
        %v3616 = vld [vmem:[%s13 + $0xf0] sm:$0xff]
        %v3617 = vld [vmem:[%s13 + $0xf8] sm:$0xff]
        %v3618 = vld [vmem:[%s13 + $0x100] sm:$0xff]
        %v3619 = vld [vmem:[%s13 + $0x108] sm:$0xff]
        %v3620 = vld [vmem:[%s13 + $0x110] sm:$0xff]
        %v3621 = vld [vmem:[%s13 + $0x118] sm:$0xff]
        %v3622 = vld [vmem:[%s13 + $0x120] sm:$0xff]
        %v3623 = vld [vmem:[%s13 + $0x128] sm:$0xff]
        %v3624 = vld [vmem:[%s13 + $0x130] sm:$0xff]
        %v3625 = vld [vmem:[%s13 + $0x138] sm:$0xff]
        %v3626 = vld [vmem:[%s13 + $0x140] sm:$0xff]
        %v3627 = vld [vmem:[%s13 + $0x148] sm:$0xff]
        %v3628 = vld [vmem:[%s13 + $0x150] sm:$0xff]
        %v3629 = vld [vmem:[%s13 + $0x158] sm:$0xff]
        %v3630 = vld [vmem:[%s13 + $0x160] sm:$0xff]
        %v3631 = vld [vmem:[%s13 + $0x168] sm:$0xff]
        %v3632 = vld [vmem:[%s13 + $0x170] sm:$0xff]
        %v3633 = vld [vmem:[%s13 + $0x178] sm:$0xff]
        %v3634 = vld [vmem:[%s13 + $0x180] sm:$0xff]
        %v3635 = vld [vmem:[%s13 + $0x188] sm:$0xff]
        %v3636 = vld [vmem:[%s13 + $0x190] sm:$0xff]
        %v3637 = vld [vmem:[%s13 + $0x198] sm:$0xff]
        %v3638 = vld [vmem:[%s13 + $0x1a0] sm:$0xff]
        %v3639 = vld [vmem:[%s13 + $0x1a8] sm:$0xff]
        %v3640 = vld [vmem:[%s13 + $0x1b0] sm:$0xff]
        %v3641 = vld [vmem:[%s13 + $0x1b8] sm:$0xff]
        %v3642 = vld [vmem:[%s13 + $0x1c0] sm:$0xff]
        %v3643 = vld [vmem:[%s13 + $0x1c8] sm:$0xff]
        %v3644 = vld [vmem:[%s13 + $0x1d0] sm:$0xff]
        %v3645 = vld [vmem:[%s13 + $0x1d8] sm:$0xff]
        %v3646 = vld [vmem:[%s13 + $0x1e0] sm:$0xff]
        %v3647 = vld [vmem:[%s13 + $0x1e8] sm:$0xff]
        %v3648 = vld [vmem:[%s13 + $0x1f0] sm:$0xff]
        %v3649 = vld [vmem:[%s13 + $0x1f8] sm:$0xff]
        %v3650 = vld [vmem:[%s14] sm:$0xf]
        %v3652 = vperm.slane %v3650, 0
        %v3653 = vperm.slane %v3650, 1
        %v3654 = vperm.slane %v3650, 2
        %v3655 = vperm.slane %v3650, 3
        %3660 = vmatpush.msra.mxu0 %v3646
        %3661 = vmatpush.msra.mxu0 %v3642
        %3662 = vmatpush.msra.mxu0 %v3638
        %3663 = vmatpush.msra.mxu0 %v3634
        %3664 = vmatpush.msra.mxu0 %v3630
        %3665 = vmatpush.msra.mxu0 %v3626
        %3666 = vmatpush.msra.mxu0 %v3622
        %3667 = vmatpush.msra.mxu0 %v3618
        %3668 = vmatpush.msra.mxu0 %v3614
        %3669 = vmatpush.msra.mxu0 %v3610
        %3670 = vmatpush.msra.mxu0 %v3606
        %3671 = vmatpush.msra.mxu0 %v3602
        %3672 = vmatpush.msra.mxu0 %v3598
        %3673 = vmatpush.msra.mxu0 %v3594
        %3674 = vmatpush.msra.mxu0 %v3590
        %3675 = vmatpush.msra.mxu0 %v3586
        %3676 = vmatmul.f32.gmra.mxu0 %v3585
        %v3677 = vpop.f32.mrf.mxu0
        %v3678 = vadd.f32 %v3652, %v3677
        %3679 = vdwg.mxu0
        %3680 = vmatpush.msra.mxu0 %v3647
        %3681 = vmatpush.msra.mxu0 %v3643
        %3682 = vmatpush.msra.mxu0 %v3639
        %3683 = vmatpush.msra.mxu0 %v3635
        %3684 = vmatpush.msra.mxu0 %v3631
        %3685 = vmatpush.msra.mxu0 %v3627
        %3686 = vmatpush.msra.mxu0 %v3623
        %3687 = vmatpush.msra.mxu0 %v3619
        %3688 = vmatpush.msra.mxu0 %v3615
        %3689 = vmatpush.msra.mxu0 %v3611
        %3690 = vmatpush.msra.mxu0 %v3607
        %3691 = vmatpush.msra.mxu0 %v3603
        %3692 = vmatpush.msra.mxu0 %v3599
        %3693 = vmatpush.msra.mxu0 %v3595
        %3694 = vmatpush.msra.mxu0 %v3591
        %3695 = vmatpush.msra.mxu0 %v3587
        %3696 = vmatmul.f32.gmra.mxu0 %v3585
        %v3697 = vpop.f32.mrf.mxu0
        %v3698 = vadd.f32 %v3653, %v3697
        %3699 = vdwg.mxu0
        %3700 = vmatpush.msra.mxu0 %v3648
        %3701 = vmatpush.msra.mxu0 %v3644
        %3702 = vmatpush.msra.mxu0 %v3640
        %3703 = vmatpush.msra.mxu0 %v3636
        %3704 = vmatpush.msra.mxu0 %v3632
        %3705 = vmatpush.msra.mxu0 %v3628
        %3706 = vmatpush.msra.mxu0 %v3624
        %3707 = vmatpush.msra.mxu0 %v3620
        %3708 = vmatpush.msra.mxu0 %v3616
        %3709 = vmatpush.msra.mxu0 %v3612
        %3710 = vmatpush.msra.mxu0 %v3608
        %3711 = vmatpush.msra.mxu0 %v3604
        %3712 = vmatpush.msra.mxu0 %v3600
        %3713 = vmatpush.msra.mxu0 %v3596
        %3714 = vmatpush.msra.mxu0 %v3592
        %3715 = vmatpush.msra.mxu0 %v3588
        %3716 = vmatmul.f32.gmra.mxu0 %v3585
        %v3717 = vpop.f32.mrf.mxu0
        %v3718 = vadd.f32 %v3654, %v3717
        %3719 = vdwg.mxu0
        %3720 = vmatpush.msra.mxu0 %v3649
        %3721 = vmatpush.msra.mxu0 %v3645
        %3722 = vmatpush.msra.mxu0 %v3641
        %3723 = vmatpush.msra.mxu0 %v3637
        %3724 = vmatpush.msra.mxu0 %v3633
        %3725 = vmatpush.msra.mxu0 %v3629
        %3726 = vmatpush.msra.mxu0 %v3625
        %3727 = vmatpush.msra.mxu0 %v3621
        %3728 = vmatpush.msra.mxu0 %v3617
        %3729 = vmatpush.msra.mxu0 %v3613
        %3730 = vmatpush.msra.mxu0 %v3609
        %3731 = vmatpush.msra.mxu0 %v3605
        %3732 = vmatpush.msra.mxu0 %v3601
        %3733 = vmatpush.msra.mxu0 %v3597
        %3734 = vmatpush.msra.mxu0 %v3593
        %3735 = vmatpush.msra.mxu0 %v3589
        %3736 = vmatmul.f32.gmra.mxu0 %v3585
        %v3737 = vpop.f32.mrf.mxu0
        %v3738 = vadd.f32 %v3655, %v3737
        %3739 = vdwg.mxu0
        %v3744 = vrot.slane %v3698, 7
        %v3745 = vrot.slane %v3718, 6
        %v3746 = vrot.slane %v3738, 5
        %vm3747 = vcmask 1040384
        %v3748 = vsel %vm3747, %v3678, %v3744
        %vm3749 = vcmask 1042434
        %v3750 = vsel %vm3749, %v3745, %v3746
        %vm3751 = vcmask 1041408
        %v3752 = vsel %vm3751, %v3748, %v3750
        %v3754 = vlaneseq
        %vm3755 = vcmp.ge.s32.totalorder %v3754, 0
        %vm3756 = vcmp.lt.s32.totalorder %v3754, 512
        %vm3757 = vmand %vm3755, %vm3756
        %3758 = vst.msk [vmem:[%s521] sm:$0xf] %vm3757, %v3752
        %s3759 = sand.u32 %s359, 1
        %s3760 = scalar_lea.sflag [#allocation4], %s3759
        %s3761 = sand.u32 %s359, 1
        %s3762 = smul.addr %s3761, 4
        %s3763 = scalar_lea.vmem [#allocation7], %s3762
        // Predicated region
        $region89: #{_forward_padded.1} parent=79 // pred_check
          %p3764 = pneg %p369
        $region90: #{_forward_padded.1} parent=79 // pred_check_branch
          %3766 = sbr.rel (%p3764) target = $region92
        $region91: #{_forward_padded.1} parent=79 // pred_region
          %3768 = vsyncadd %s3760, 0
          %s3769 = smul.addr %s31, 4
          %s3770 = scalar_lea.hbm %s15, %s3769
          %s3772 = sshll.u32 %s3763, 4
          %s3773 = int_to_ptr.vmem [resolvable:$true] %s3772
          %s3774 = sshll.u32 %s3770, 4
          %s3775 = int_to_ptr.hbm [resolvable:$true] %s3774
          %3777 = dma.vmem_to_hbm [thread:$0]  %s3773, 64, %s3775, %s3760
        $region92: #{_forward_padded.1} parent=79 // pred_fallthru
          _
      $region80: #{_forward_padded.1} parent=5 // pred_fallthru
        _
      %p3778 = scmp.le.s32.totalorder 2, %s26
      // Predicated region
      $region93: #{_forward_padded.1} parent=5 // pred_check
        %p3779 = pneg %p3778
      $region94: #{_forward_padded.1} parent=5 // pred_check_branch
        %3781 = sbr.rel (%p3779) target = $region96
      $region95: #{_forward_padded.1} parent=5 // pred_region
        %s3782 = ssub.s32 %s26, 2
        // Predicated region
        $region97: #{_forward_padded.1} parent=95 // pred_check
          %p3783 = pneg %p375
        $region98: #{_forward_padded.1} parent=95 // pred_check_branch
          %3785 = sbr.rel (%p3783) target = $region100
        $region99: #{_forward_padded.1} parent=95 // pred_region
          %s3786 = sand.u32 %s360, 1
          %s3787 = scalar_lea.sflag [#allocation4], %s3786
          %s3788 = sand.u32 %s360, 1
          %s3789 = smul.addr %s3788, 4
          %s3790 = scalar_lea.vmem [#allocation7], %s3789
          %3792 = dma.done %s3787, 64
        $region100: #{_forward_padded.1} parent=95 // pred_fallthru
          _
      $region96: #{_forward_padded.1} parent=5 // pred_fallthru
        _
    $region6: #{_forward_padded.1} parent=1 // loop_footer
      %s30 = sadd.s32 1, %s26
    $region7: #{_forward_padded.1} parent=1 // loop_footer_branch
      %25 = sbr.rel target = $region3
    $region8: #{_forward_padded.1} parent=1 // loop_exit
      _
    %3793 = vsyncpa [#allocation3], 1
    %s3794 = scalar_lea.sflag [#allocation3], 1
    %3795 = vsyncpa %s3794, 1
    %3796 = vsyncpa [#allocation6], 1
    %3797 = vsyncpa [#allocation4], 1
    %s3798 = scalar_lea.sflag [#allocation4], 1
    %3799 = vsyncpa %s3798, 1

</llo_original>
